<compile_context>
chip_gen: v6e
topology: v6e:2x2x1
jax: 0.10.0
libtpu: 0.0.40
codegen_flags: <defaults>
</compile_context>

<pallas_src>
import functools

import jax
import jax.numpy as jnp
from jax.experimental import pallas as pl
from jax.experimental.pallas import tpu as pltpu


# ----------------------------------------------------------------------------
# helpers
# ----------------------------------------------------------------------------
def _round_up(v, m):
    return (v + m - 1) // m * m


_VMEM_LIMIT = 32 * 1024 * 1024          # safe on v5e / v6e / v7x
_RESIDENT_W_LIMIT = 4 * 1024 * 1024     # bf16 weight bytes kept fully VMEM-resident


# ----------------------------------------------------------------------------
# Pallas kernels
# ----------------------------------------------------------------------------
def _gemm_kernel(x_ref, w_ref, b_ref, o_ref, *, relu):
    """Resident-weight GEMM: whole (Kp, Np) weight in VMEM, one dot per M tile."""
    acc = jnp.dot(x_ref[...], w_ref[...], preferred_element_type=jnp.float32)
    acc = acc + b_ref[...]
    if relu:
        acc = jnp.maximum(acc, 0.0)
    o_ref[...] = acc.astype(o_ref.dtype)


def _gemm_fused_kernel(x_ref, w_ref, b_ref, w2_ref, b2_ref, o_ref, *, relu1, relu2):
    """Resident-weight GEMM with a fused second (1x1-conv) GEMM in the epilogue."""
    acc = jnp.dot(x_ref[...], w_ref[...], preferred_element_type=jnp.float32)
    acc = acc + b_ref[...]
    if relu1:
        acc = jnp.maximum(acc, 0.0)
    acc = jnp.dot(acc.astype(w2_ref.dtype), w2_ref[...],
                  preferred_element_type=jnp.float32)
    acc = acc + b2_ref[...]
    if relu2:
        acc = jnp.maximum(acc, 0.0)
    o_ref[...] = acc.astype(o_ref.dtype)


def _gemm_tiled_kernel(x_ref, w_ref, b_ref, o_ref, acc_ref, *, relu):
    """K-tiled GEMM with f32 VMEM accumulator (large-weight layers only)."""
    @pl.when(pl.program_id(2) == 0)
    def _():
        acc_ref[...] = jnp.zeros_like(acc_ref)

    acc_ref[...] += jnp.dot(x_ref[...], w_ref[...],
                            preferred_element_type=jnp.float32)

    @pl.when(pl.program_id(2) == pl.num_programs(2) - 1)
    def _():
        out = acc_ref[...] + b_ref[...]
        if relu:
            out = jnp.maximum(out, 0.0)
        o_ref[...] = out.astype(o_ref.dtype)


# ----------------------------------------------------------------------------
# GEMM wrappers (bf16 operands, f32 accumulation / epilogue)
# ----------------------------------------------------------------------------
def _matmul_resident(x, w, b, *, relu, w2=None, b2=None, relu2=True, tm=256):
    """y = act(x @ w + b) [optionally act2(y @ w2 + b2)], weight VMEM-resident."""
    M, K = x.shape
    N = w.shape[1]
    Kp, Np = _round_up(K, 128), _round_up(N, 128)
    tm = min(tm, _round_up(M, 8))
    Mp = _round_up(M, tm)

    # cast to bf16 first, then pad (cast+pad fuse into one XLA op).
    xb = jnp.pad(x.astype(jnp.bfloat16), ((0, Mp - M), (0, Kp - K)))
    wb = jnp.pad(w.astype(jnp.bfloat16), ((0, Kp - K), (0, Np - N)))
    bb = jnp.pad(b.astype(jnp.float32), (0, Np - N)).reshape(1, Np)

    in_specs = [
        pl.BlockSpec((tm, Kp), lambda i: (i, 0)),      # X streamed over M
        pl.BlockSpec((Kp, Np), lambda i: (0, 0)),      # W resident (fetched once)
        pl.BlockSpec((1, Np), lambda i: (0, 0)),
    ]
    args = [xb, wb, bb]
    if w2 is not None:
        N2 = w2.shape[1]
        N2p = _round_up(N2, 128)
        w2b = jnp.pad(w2.astype(jnp.bfloat16), ((0, Np - N), (0, N2p - N2)))
        b2b = jnp.pad(b2.astype(jnp.float32), (0, N2p - N2)).reshape(1, N2p)
        in_specs += [pl.BlockSpec((Np, N2p), lambda i: (0, 0)),
                     pl.BlockSpec((1, N2p), lambda i: (0, 0))]
        args += [w2b, b2b]
        kernel = functools.partial(_gemm_fused_kernel, relu1=relu, relu2=relu2)
        Nout, Noutp = N2, N2p
    else:
        kernel = functools.partial(_gemm_kernel, relu=relu)
        Nout, Noutp = N, Np

    out = pl.pallas_call(
        kernel,
        out_shape=jax.ShapeDtypeStruct((Mp, Noutp), jnp.float32),
        grid_spec=pltpu.PrefetchScalarGridSpec(
            num_scalar_prefetch=0,
            grid=(Mp // tm,),
            in_specs=in_specs,
            out_specs=pl.BlockSpec((tm, Noutp), lambda i: (i, 0)),
        ),
        compiler_params=pltpu.CompilerParams(
            dimension_semantics=("parallel",),
            vmem_limit_bytes=_VMEM_LIMIT),
    )(*args)
    return out[:M, :Nout]


def _matmul_tiled(x, w, b, *, relu, tm=512, tn=1024, tk=512):
    """K-tiled GEMM for weights too big to keep resident (upsample1)."""
    M, K = x.shape
    N = w.shape[1]
    tm = min(tm, _round_up(M, 8))
    tn = min(tn, _round_up(N, 128))
    tk = min(tk, _round_up(K, 128))
    Mp, Kp, Np = _round_up(M, tm), _round_up(K, tk), _round_up(N, tn)

    xb = jnp.pad(x.astype(jnp.bfloat16), ((0, Mp - M), (0, Kp - K)))
    wb = jnp.pad(w.astype(jnp.bfloat16), ((0, Kp - K), (0, Np - N)))
    bb = jnp.pad(b.astype(jnp.float32), (0, Np - N)).reshape(1, Np)

    out = pl.pallas_call(
        functools.partial(_gemm_tiled_kernel, relu=relu),
        out_shape=jax.ShapeDtypeStruct((Mp, Np), jnp.float32),
        grid_spec=pltpu.PrefetchScalarGridSpec(
            num_scalar_prefetch=0,
            grid=(Mp // tm, Np // tn, Kp // tk),
            in_specs=[
                pl.BlockSpec((tm, tk), lambda i, j, k: (i, k)),
                pl.BlockSpec((tk, tn), lambda i, j, k: (k, j)),
                pl.BlockSpec((1, tn), lambda i, j, k: (0, j)),
            ],
            out_specs=pl.BlockSpec((tm, tn), lambda i, j, k: (i, j)),
            scratch_shapes=[pltpu.VMEM((tm, tn), jnp.float32)],
        ),
        compiler_params=pltpu.CompilerParams(
            dimension_semantics=("parallel", "parallel", "arbitrary"),
            vmem_limit_bytes=_VMEM_LIMIT),
    )(xb, wb, bb)
    return out[:M, :N]


def matmul_bias(x, w, b, *, relu, w2=None, b2=None, relu2=True):
    """Dispatch: resident-weight kernel unless the bf16 weight exceeds the budget."""
    K = x.shape[1]
    N = w.shape[1]
    w_bytes = _round_up(K, 128) * _round_up(N, 128) * 2
    if w2 is None and w_bytes > _RESIDENT_W_LIMIT:
        return _matmul_tiled(x, w, b, relu=relu)
    return _matmul_resident(x, w, b, relu=relu, w2=w2, b2=b2, relu2=relu2)


# ----------------------------------------------------------------------------
# NHWC conv / deconv layers (im2col glue in JAX, GEMM in Pallas)
# ----------------------------------------------------------------------------
def conv1x1(x, w, b, *, relu):
    """x: [B, H, W, Cin] NHWC; w: [Cout, Cin, 1, 1] (torch layout)."""
    B, H, W, Cin = x.shape
    Cout = w.shape[0]
    Y = matmul_bias(x.reshape(B * H * W, Cin), w.reshape(Cout, Cin).T, b,
                    relu=relu)
    return Y.reshape(B, H, W, Cout)


def conv3x3_1x1_fused(x, w3, b3, w1, b1):
    """ReLU(1x1(ReLU(3x3(x)))) — both GEMMs fused into one Pallas kernel.

    x: [B, H, W, Cin]; w3: [Cout3, Cin, 3, 3]; w1: [Cout1, Cout3, 1, 1].
    """
    B, H, W, Cin = x.shape
    Cout3 = w3.shape[0]
    Cout1 = w1.shape[0]
    xp = jnp.pad(x, ((0, 0), (1, 1), (1, 1), (0, 0)))
    taps = [xp[:, dy:dy + H, dx:dx + W, :] for dy in range(3) for dx in range(3)]
    X = jnp.concatenate(taps, axis=-1).reshape(B * H * W, 9 * Cin)
    W3 = w3.transpose(2, 3, 1, 0).reshape(9 * Cin, Cout3)   # (ky,kx,ci) x co
    W1 = w1.reshape(Cout1, Cout3).T
    Y = matmul_bias(X, W3, b3, relu=True, w2=W1, b2=b1, relu2=True)
    return Y.reshape(B, H, W, Cout1)


def deconv2d_s2k4p1(x, w, b, *, relu=True):
    """ConvTranspose2d(kernel=4, stride=2, padding=1), NHWC, sub-pixel lowering.

    Output phase (py, px) at (2m+py, 2n+px) is a 2x2 conv of the (pad-1) input
    window starting at (m+py, n+px), using kernel taps ky = 3 - py - 2*dy,
    kx = 3 - px - 2*dx.  All 4 phases share one im2col (K = 4*Cin) and are
    stacked along N (N = 4*Cout) => a single GEMM with no zero-filled columns.

    x: [B, H, W, Cin]; w: [Cin, Cout, 4, 4] (torch ConvTranspose2d layout).
    """
    B, H, W, Cin = x.shape
    Cout = w.shape[1]
    xp = jnp.pad(x, ((0, 0), (1, 1), (1, 1), (0, 0)))
    Ho, Wo = H + 1, W + 1
    taps = [xp[:, dy:dy + Ho, dx:dx + Wo, :] for dy in range(2) for dx in range(2)]
    X = jnp.concatenate(taps, axis=-1).reshape(B * Ho * Wo, 4 * Cin)

    rows = []
    for dy in range(2):
        for dx in range(2):
            cols = [w[:, :, 3 - py - 2 * dy, 3 - px - 2 * dx]        # [Cin, Cout]
                    for py in range(2) for px in range(2)]
            rows.append(jnp.concatenate(cols, axis=1))               # [Cin, 4*Cout]
    Wg = jnp.concatenate(rows, axis=0)                               # [4*Cin, 4*Cout]
    bg = jnp.tile(b, 4)

    Y = matmul_bias(X, Wg, bg, relu=relu).reshape(B, Ho, Wo, 4, Cout)
    p00 = Y[:, 0:H, 0:W, 0]          # even rows, even cols
    p01 = Y[:, 0:H, 1:Wo, 1]         # even rows, odd  cols
    p10 = Y[:, 1:Ho, 0:W, 2]         # odd  rows, even cols
    p11 = Y[:, 1:Ho, 1:Wo, 3]        # odd  rows, odd  cols
    out = jnp.stack([jnp.stack([p00, p01], axis=3),
                     jnp.stack([p10, p11], axis=3)], axis=2)         # [B,H,2,W,2,C]
    return out.reshape(B, 2 * H, 2 * W, Cout)


# ----------------------------------------------------------------------------
# Parameter construction (deterministic, matches nn.Module __init__ shapes)
# ----------------------------------------------------------------------------
def _init_conv(key, cout, cin, k):
    kw, kb = jax.random.split(key)
    w = jax.random.normal(kw, (cout, cin, k, k), jnp.float32) / jnp.sqrt(
        float(cin * k * k))
    b = jax.random.normal(kb, (cout,), jnp.float32) * 0.01
    return w, b


def _init_deconv(key, cin, cout, k):
    kw, kb = jax.random.split(key)
    w = jax.random.normal(kw, (cin, cout, k, k), jnp.float32) / jnp.sqrt(
        float(cin * k * k))
    b = jax.random.normal(kb, (cout,), jnp.float32) * 0.01
    return w, b


def init_params(key, base_channels=8, channels_i=(192, 72, 64, 10, 8, 4, 1)):
    bc = base_channels
    ci = channels_i
    keys = jax.random.split(key, 10)
    p = {}
    # upsample1: Deconv2d(1536 -> 512, k4 s2 p1); upsample2: Deconv2d(512 -> 64)
    w, b = _init_deconv(keys[0], bc * ci[0], bc * ci[2], 4)
    p["upsample1"] = {"w": w, "b": b}
    w, b = _init_deconv(keys[1], bc * ci[2], bc * ci[4], 4)
    p["upsample2"] = {"w": w, "b": b}
    # conv0_0: 512 -> 32 (3x3) then 32 -> 32 (1x1)
    w0, b0 = _init_conv(keys[2], bc * ci[5], bc * ci[2], 3)
    w1, b1 = _init_conv(keys[3], bc * ci[5], bc * ci[5], 1)
    p["conv0_0"] = {"w0": w0, "b0": b0, "w1": w1, "b1": b1}
    # conv0_1: 64 -> 8 (3x3) then 8 -> 8 (1x1)
    w0, b0 = _init_conv(keys[4], bc * ci[6], bc * ci[4], 3)
    w1, b1 = _init_conv(keys[5], bc * ci[6], bc * ci[6], 1)
    p["conv0_1"] = {"w0": w0, "b0": b0, "w1": w1, "b1": b1}
    # output1: 576 -> 576 (1x1);  output2: 80 -> 80 (1x1)   [plain nn.Conv2d]
    w, b = _init_conv(keys[6], bc * ci[1], bc * ci[1], 1)
    p["output1"] = {"w": w, "b": b}
    w, b = _init_conv(keys[7], bc * ci[3], bc * ci[3], 1)
    p["output2"] = {"w": w, "b": b}
    return p


# ----------------------------------------------------------------------------
# DFGANet forward (NHWC internally; NCHW 5-D at the boundary, like torch)
# ----------------------------------------------------------------------------
def dfganet_forward(params, c, f, stage_idx):
    """c: [B, Gc, Dc, Hc, Wc] coarse volume; f: [B, Gf, Df, Hf, Wf] fine."""
    B, Gc, Dc, Hc, Wc = c.shape
    _, Gf, Df, Hf, Wf = f.shape

    # flatten(1,2) then NCHW -> NHWC once at the boundary.
    c_nhwc = c.reshape(B, Gc * Dc, Hc, Wc).transpose(0, 2, 3, 1)
    f_nhwc = f.reshape(B, Gf * Df, Hf, Wf).transpose(0, 2, 3, 1)

    if stage_idx == 1:
        up, c0, outp = params["upsample1"], params["conv0_0"], params["output1"]
    else:
        up, c0, outp = params["upsample2"], params["conv0_1"], params["output2"]

    c_up = deconv2d_s2k4p1(c_nhwc, up["w"], up["b"], relu=True)

    # conv0 block on both branches at once (batched along M -> one GEMM,
    # one weight DMA, 3x3 and 1x1 fused in a single kernel).
    both = jnp.concatenate([c_up, f_nhwc], axis=0)               # [2B, Hf, Wf, C]
    y = conv3x3_1x1_fused(both, c0["w0"], c0["b0"], c0["w1"], c0["b1"])
    c2f, f2f = y[:B], y[B:]                                      # [B, Hf, Wf, Df]

    # channels-last concat matches torch.concat((c2f.unsq(1), f2f.unsq(1), ori), 1)
    # followed by flatten(1,2): channel index = g*Df + d.
    cf = jnp.concatenate([c2f, f2f, f_nhwc], axis=-1)            # [B,Hf,Wf,(Gf+2)*Df]
    final = conv1x1(cf, outp["w"], outp["b"], relu=False)

    G = Gf + 2
    return final.transpose(0, 3, 1, 2).reshape(B, G, Df, Hf, Wf)


# ----------------------------------------------------------------------------
if __name__ == "__main__":
    key = jax.random.PRNGKey(0)
    pkey, k1, k2, k3, k4 = jax.random.split(key, 5)
    params = init_params(pkey)

    fwd = jax.jit(dfganet_forward, static_argnums=(3,))

    B, Hc, Wc = 2, 4, 4
    Hf, Wf = 2 * Hc, 2 * Wc

    # Stage 2: coarse [B,16,32,Hc,Wc] at half the fine resolution, fine [B,8,8,Hf,Wf].
    c2 = jax.random.normal(k1, (B, 16, 32, Hc, Wc), jnp.float32)
    f2 = jax.random.normal(k2, (B, 8, 8, Hf, Wf), jnp.float32)
    out2 = jax.block_until_ready(fwd(params, c2, f2, 2))
    assert out2.shape == (B, 10, 8, Hf, Wf), out2.shape

    # Stage 1: coarse [B,32,48,Hc,Wc], fine [B,16,32,Hf,Wf]
    # (exercises the K-tiled kernel for the 6144x2048 upsample1 GEMM).
    c1 = jax.random.normal(k3, (B, 32, 48, Hc, Wc), jnp.float32)
    f1 = jax.random.normal(k4, (B, 16, 32, Hf, Wf), jnp.float32)
    out1 = jax.block_until_ready(fwd(params, c1, f1, 1))
    assert out1.shape == (B, 18, 32, Hf, Wf), out1.shape

    print("KERNEL_OK")
</pallas_src>

<mosaic_0001>
module attributes {stable_mosaic.version = 11 : i64} {
  func.func @_gemm_kernel(%arg0: i32, %arg1: memref<56x2048xbf16, #tpu.memory_space<vmem>>, %arg2: memref<2048x256xbf16, #tpu.memory_space<vmem>>, %arg3: memref<1x256xf32, #tpu.memory_space<vmem>>, %arg4: memref<56x256xf32, #tpu.memory_space<vmem>>) attributes {dimension_semantics = [#tpu.dimension_semantics<parallel>], iteration_bounds = array<i64: 1>, scalar_prefetch = 0 : i64, scratch_operands = 0 : i64, tpu.core_type = #tpu.core_type<tc>, window_params = [{transform_indices = @transform_0, window_bounds = array<i64: 56, 2048>}, {pipeline_mode = #tpu.pipeline_mode<synchronous>, transform_indices = @transform_1, window_bounds = array<i64: 2048, 256>}, {pipeline_mode = #tpu.pipeline_mode<synchronous>, transform_indices = @transform_2, window_bounds = array<i64: 1, 256>}, {transform_indices = @transform_3, window_bounds = array<i64: 56, 256>}]} {
    %c0 = arith.constant 0 : index
    %c0_0 = arith.constant 0 : index
    %0 = vector.load %arg1[%c0, %c0_0] : memref<56x2048xbf16, #tpu.memory_space<vmem>>, vector<56x2048xbf16>
    %c0_1 = arith.constant 0 : index
    %c0_2 = arith.constant 0 : index
    %1 = vector.load %arg2[%c0_1, %c0_2] : memref<2048x256xbf16, #tpu.memory_space<vmem>>, vector<2048x256xbf16>
    %cst = arith.constant dense<0.000000e+00> : vector<56x256xf32>
    %2 = tpu.matmul %0, %1, %cst {dimension_numbers = #tpu.dot_dimension_numbers<[1], [0], [0], [1], [0, 0, 1, 1], [], []>} : vector<56x2048xbf16>, vector<2048x256xbf16>, vector<56x256xf32> -> vector<56x256xf32>
    %c0_3 = arith.constant 0 : index
    %c0_4 = arith.constant 0 : index
    %3 = vector.load %arg3[%c0_3, %c0_4] : memref<1x256xf32, #tpu.memory_space<vmem>>, vector<1x256xf32>
    %4 = vector.broadcast %3 : vector<1x256xf32> to vector<56x256xf32>
    %5 = arith.addf %2, %4 : vector<56x256xf32>
    %cst_5 = arith.constant 0.000000e+00 : f32
    %6 = vector.broadcast %cst_5 : f32 to vector<56x256xf32>
    %7 = arith.maximumf %5, %6 : vector<56x256xf32>
    %c0_6 = arith.constant 0 : index
    %c0_7 = arith.constant 0 : index
    %8 = vector.load %arg4[%c0_6, %c0_7] : memref<56x256xf32, #tpu.memory_space<vmem>>, vector<56x256xf32>
    tpu.vector_store %arg4[%c0_6, %c0_7], %7 {strides = array<i32>} : memref<56x256xf32, #tpu.memory_space<vmem>>, vector<56x256xf32>,
    return
  }
  func.func @transform_0(%arg0: i32) -> (i32, i32) {
    %c0_i32 = arith.constant 0 : i32
    %c0_i32_0 = arith.constant 0 : i32
    return %arg0, %c0_i32 : i32, i32
  }
  func.func @transform_1(%arg0: i32) -> (i32, i32) {
    %c0_i32 = arith.constant 0 : i32
    %c0_i32_0 = arith.constant 0 : i32
    %c0_i32_1 = arith.constant 0 : i32
    return %c0_i32, %c0_i32_0 : i32, i32
  }
  func.func @transform_2(%arg0: i32) -> (i32, i32) {
    %c0_i32 = arith.constant 0 : i32
    %c0_i32_0 = arith.constant 0 : i32
    %c0_i32_1 = arith.constant 0 : i32
    return %c0_i32, %c0_i32_0 : i32, i32
  }
  func.func @transform_3(%arg0: i32) -> (i32, i32) {
    %c0_i32 = arith.constant 0 : i32
    %c0_i32_0 = arith.constant 0 : i32
    return %arg0, %c0_i32 : i32, i32
  }
}

module attributes {stable_mosaic.version = 11 : i64} {
  func.func @_gemm_kernel(%arg0: i32, %arg1: memref<128x128xbf16, #tpu.memory_space<vmem>>, %arg2: memref<128x128xbf16, #tpu.memory_space<vmem>>, %arg3: memref<1x128xf32, #tpu.memory_space<vmem>>, %arg4: memref<128x128xf32, #tpu.memory_space<vmem>>) attributes {dimension_semantics = [#tpu.dimension_semantics<parallel>], iteration_bounds = array<i64: 1>, scalar_prefetch = 0 : i64, scratch_operands = 0 : i64, tpu.core_type = #tpu.core_type<tc>, window_params = [{transform_indices = @transform_0, window_bounds = array<i64: 128, 128>}, {pipeline_mode = #tpu.pipeline_mode<synchronous>, transform_indices = @transform_1, window_bounds = array<i64: 128, 128>}, {pipeline_mode = #tpu.pipeline_mode<synchronous>, transform_indices = @transform_2, window_bounds = array<i64: 1, 128>}, {transform_indices = @transform_3, window_bounds = array<i64: 128, 128>}]} {
    %c0 = arith.constant 0 : index
    %c0_0 = arith.constant 0 : index
    %0 = vector.load %arg1[%c0, %c0_0] : memref<128x128xbf16, #tpu.memory_space<vmem>>, vector<128x128xbf16>
    %c0_1 = arith.constant 0 : index
    %c0_2 = arith.constant 0 : index
    %1 = vector.load %arg2[%c0_1, %c0_2] : memref<128x128xbf16, #tpu.memory_space<vmem>>, vector<128x128xbf16>
    %cst = arith.constant dense<0.000000e+00> : vector<128x128xf32>
    %2 = tpu.matmul %0, %1, %cst {dimension_numbers = #tpu.dot_dimension_numbers<[1], [0], [0], [1], [0, 0, 1, 1], [], []>} : vector<128x128xbf16>, vector<128x128xbf16>, vector<128x128xf32> -> vector<128x128xf32>
    %c0_3 = arith.constant 0 : index
    %c0_4 = arith.constant 0 : index
    %3 = vector.load %arg3[%c0_3, %c0_4] : memref<1x128xf32, #tpu.memory_space<vmem>>, vector<1x128xf32>
    %4 = vector.broadcast %3 : vector<1x128xf32> to vector<128x128xf32>
    %5 = arith.addf %2, %4 : vector<128x128xf32>
    %c0_5 = arith.constant 0 : index
    %c0_6 = arith.constant 0 : index
    %6 = vector.load %arg4[%c0_5, %c0_6] : memref<128x128xf32, #tpu.memory_space<vmem>>, vector<128x128xf32>
    tpu.vector_store %arg4[%c0_5, %c0_6], %5 {strides = array<i32>} : memref<128x128xf32, #tpu.memory_space<vmem>>, vector<128x128xf32>,
    return
  }
  func.func @transform_0(%arg0: i32) -> (i32, i32) {
    %c0_i32 = arith.constant 0 : i32
    %c0_i32_0 = arith.constant 0 : i32
    return %arg0, %c0_i32 : i32, i32
  }
  func.func @transform_1(%arg0: i32) -> (i32, i32) {
    %c0_i32 = arith.constant 0 : i32
    %c0_i32_0 = arith.constant 0 : i32
    %c0_i32_1 = arith.constant 0 : i32
    return %c0_i32, %c0_i32_0 : i32, i32
  }
  func.func @transform_2(%arg0: i32) -> (i32, i32) {
    %c0_i32 = arith.constant 0 : i32
    %c0_i32_0 = arith.constant 0 : i32
    %c0_i32_1 = arith.constant 0 : i32
    return %c0_i32, %c0_i32_0 : i32, i32
  }
  func.func @transform_3(%arg0: i32) -> (i32, i32) {
    %c0_i32 = arith.constant 0 : i32
    %c0_i32_0 = arith.constant 0 : i32
    return %arg0, %c0_i32 : i32, i32
  }
}

module attributes {stable_mosaic.version = 11 : i64} {
  func.func @_gemm_fused_kernel(%arg0: i32, %arg1: memref<256x640xbf16, #tpu.memory_space<vmem>>, %arg2: memref<640x128xbf16, #tpu.memory_space<vmem>>, %arg3: memref<1x128xf32, #tpu.memory_space<vmem>>, %arg4: memref<128x128xbf16, #tpu.memory_space<vmem>>, %arg5: memref<1x128xf32, #tpu.memory_space<vmem>>, %arg6: memref<256x128xf32, #tpu.memory_space<vmem>>) attributes {dimension_semantics = [#tpu.dimension_semantics<parallel>], iteration_bounds = array<i64: 1>, scalar_prefetch = 0 : i64, scratch_operands = 0 : i64, tpu.core_type = #tpu.core_type<tc>, window_params = [{transform_indices = @transform_0, window_bounds = array<i64: 256, 640>}, {pipeline_mode = #tpu.pipeline_mode<synchronous>, transform_indices = @transform_1, window_bounds = array<i64: 640, 128>}, {pipeline_mode = #tpu.pipeline_mode<synchronous>, transform_indices = @transform_2, window_bounds = array<i64: 1, 128>}, {pipeline_mode = #tpu.pipeline_mode<synchronous>, transform_indices = @transform_3, window_bounds = array<i64: 128, 128>}, {pipeline_mode = #tpu.pipeline_mode<synchronous>, transform_indices = @transform_4, window_bounds = array<i64: 1, 128>}, {transform_indices = @transform_5, window_bounds = array<i64: 256, 128>}]} {
    %c0 = arith.constant 0 : index
    %c0_0 = arith.constant 0 : index
    %0 = vector.load %arg1[%c0, %c0_0] : memref<256x640xbf16, #tpu.memory_space<vmem>>, vector<256x640xbf16>
    %c0_1 = arith.constant 0 : index
    %c0_2 = arith.constant 0 : index
    %1 = vector.load %arg2[%c0_1, %c0_2] : memref<640x128xbf16, #tpu.memory_space<vmem>>, vector<640x128xbf16>
    %cst = arith.constant dense<0.000000e+00> : vector<256x128xf32>
    %2 = tpu.matmul %0, %1, %cst {dimension_numbers = #tpu.dot_dimension_numbers<[1], [0], [0], [1], [0, 0, 1, 1], [], []>} : vector<256x640xbf16>, vector<640x128xbf16>, vector<256x128xf32> -> vector<256x128xf32>
    %c0_3 = arith.constant 0 : index
    %c0_4 = arith.constant 0 : index
    %3 = vector.load %arg3[%c0_3, %c0_4] : memref<1x128xf32, #tpu.memory_space<vmem>>, vector<1x128xf32>
    %4 = vector.broadcast %3 : vector<1x128xf32> to vector<256x128xf32>
    %5 = arith.addf %2, %4 : vector<256x128xf32>
    %cst_5 = arith.constant 0.000000e+00 : f32
    %6 = vector.broadcast %cst_5 : f32 to vector<256x128xf32>
    %7 = arith.maximumf %5, %6 : vector<256x128xf32>
    %8 = arith.truncf %7 : vector<256x128xf32> to vector<256x128xbf16>
    %c0_6 = arith.constant 0 : index
    %c0_7 = arith.constant 0 : index
    %9 = vector.load %arg4[%c0_6, %c0_7] : memref<128x128xbf16, #tpu.memory_space<vmem>>, vector<128x128xbf16>
    %cst_8 = arith.constant dense<0.000000e+00> : vector<256x128xf32>
    %10 = tpu.matmul %8, %9, %cst_8 {dimension_numbers = #tpu.dot_dimension_numbers<[1], [0], [0], [1], [0, 0, 1, 1], [], []>} : vector<256x128xbf16>, vector<128x128xbf16>, vector<256x128xf32> -> vector<256x128xf32>
    %c0_9 = arith.constant 0 : index
    %c0_10 = arith.constant 0 : index
    %11 = vector.load %arg5[%c0_9, %c0_10] : memref<1x128xf32, #tpu.memory_space<vmem>>, vector<1x128xf32>
    %12 = vector.broadcast %11 : vector<1x128xf32> to vector<256x128xf32>
    %13 = arith.addf %10, %12 : vector<256x128xf32>
    %cst_11 = arith.constant 0.000000e+00 : f32
    %14 = vector.broadcast %cst_11 : f32 to vector<256x128xf32>
    %15 = arith.maximumf %13, %14 : vector<256x128xf32>
    %c0_12 = arith.constant 0 : index
    %c0_13 = arith.constant 0 : index
    %16 = vector.load %arg6[%c0_12, %c0_13] : memref<256x128xf32, #tpu.memory_space<vmem>>, vector<256x128xf32>
    tpu.vector_store %arg6[%c0_12, %c0_13], %15 {strides = array<i32>} : memref<256x128xf32, #tpu.memory_space<vmem>>, vector<256x128xf32>,
    return
  }
  func.func @transform_0(%arg0: i32) -> (i32, i32) {
    %c0_i32 = arith.constant 0 : i32
    %c0_i32_0 = arith.constant 0 : i32
    return %arg0, %c0_i32 : i32, i32
  }
  func.func @transform_1(%arg0: i32) -> (i32, i32) {
    %c0_i32 = arith.constant 0 : i32
    %c0_i32_0 = arith.constant 0 : i32
    %c0_i32_1 = arith.constant 0 : i32
    return %c0_i32, %c0_i32_0 : i32, i32
  }
  func.func @transform_2(%arg0: i32) -> (i32, i32) {
    %c0_i32 = arith.constant 0 : i32
    %c0_i32_0 = arith.constant 0 : i32
    %c0_i32_1 = arith.constant 0 : i32
    return %c0_i32, %c0_i32_0 : i32, i32
  }
  func.func @transform_3(%arg0: i32) -> (i32, i32) {
    %c0_i32 = arith.constant 0 : i32
    %c0_i32_0 = arith.constant 0 : i32
    %c0_i32_1 = arith.constant 0 : i32
    return %c0_i32, %c0_i32_0 : i32, i32
  }
  func.func @transform_4(%arg0: i32) -> (i32, i32) {
    %c0_i32 = arith.constant 0 : i32
    %c0_i32_0 = arith.constant 0 : i32
    %c0_i32_1 = arith.constant 0 : i32
    return %c0_i32, %c0_i32_0 : i32, i32
  }
  func.func @transform_5(%arg0: i32) -> (i32, i32) {
    %c0_i32 = arith.constant 0 : i32
    %c0_i32_0 = arith.constant 0 : i32
    return %arg0, %c0_i32 : i32, i32
  }
}

</mosaic_0001>

<llo_original>
// kernel: tile.8
$region0: #{tile.8}
  #allocation0 [shape = 's32[1]{0}', space=sflag, size = 0x4, scoped, tag = 'scoped memory for tile.8']
  %s0 = inlined_call_operand.vmem [shape: f32[64], index: 0, kind: input, shape index: {}]
  %s1 = inlined_call_operand.vmem [shape: f32[4,64], index: 1, kind: output, shape index: {}]
  // Predicated region
  $region2: #{tile.8} parent=0 // pred_check
    _
  $region3: #{tile.8} parent=0 // pred_check_branch
    %3 = sbr.rel (0) target = $region5
  $region4: #{tile.8} parent=0 // pred_region
    _
  $region5: #{tile.8} parent=0 // pred_fallthru
    _
  %v4 = vld [vmem:[%s0] ss:$0 sm:$0xff]
  %5 = vst [vmem:[%s1] sm:$0xf] %v4

// kernel: dfganet_forward.3
$region0: #{dfganet_forward.3}
  #allocation0 [shape = 'u32[]', space=smem, size = 0x4, offset = 0x4, fixed_abs, tag = 'smem constant byte address 0x4 - core index']
  #allocation1 [shape = 'u32[144,128]{1,0:T(1,128)}', space=vmem, size = 0x12000, scoped, tag = 'internal scratch']
  %s0 = inlined_call_operand.vmem [shape: bf16[56,2048], index: 0, kind: input, shape index: {}]
  %s1 = inlined_call_operand.vmem [shape: bf16[2048,256], index: 1, kind: input, shape index: {}]
  %s2 = inlined_call_operand.vmem [shape: f32[1,256], index: 2, kind: input, shape index: {}]
  %s3 = inlined_call_operand.vmem [shape: f32[56,256], index: 3, kind: output, shape index: {}]
  %s4 = sld [smem:[#allocation0]]
  $region22: #{dfganet_forward.3} parent=0
    _
  %s6 = ssub.s32 1, %s4
  %s7 = scalar_select 0, %s6, %s4
  // Predicated region
  $region2: #{dfganet_forward.3} parent=0 // pred_check
    _
  $region3: #{dfganet_forward.3} parent=0 // pred_check_branch
    %9 = sbr.rel (0) target = $region5
  $region4: #{dfganet_forward.3} parent=0 // pred_region
    _
  $region5: #{dfganet_forward.3} parent=0 // pred_fallthru
    _
  // Predicated region
  $region6: #{dfganet_forward.3} parent=0 // pred_check
    _
  $region7: #{dfganet_forward.3} parent=0 // pred_check_branch
    %11 = sbr.rel (0) target = $region9
  $region8: #{dfganet_forward.3} parent=0 // pred_region
    _
  $region9: #{dfganet_forward.3} parent=0 // pred_fallthru
    _
  // Predicated region
  $region10: #{dfganet_forward.3} parent=0 // pred_check
    _
  $region11: #{dfganet_forward.3} parent=0 // pred_check_branch
    %13 = sbr.rel (0) target = $region13
  $region12: #{dfganet_forward.3} parent=0 // pred_region
    _
  $region13: #{dfganet_forward.3} parent=0 // pred_fallthru
    _
  %v14 = vld [vmem:[%s0] sm:$0xff]
  %v15 = vld [vmem:[%s0 + $0x8] sm:$0xff]
  %v16 = vld [vmem:[%s0 + $0x10] sm:$0xff]
  %v17 = vld [vmem:[%s0 + $0x18] sm:$0xff]
  %v18 = vld [vmem:[%s0 + $0x20] sm:$0xff]
  %v19 = vld [vmem:[%s0 + $0x28] sm:$0xff]
  %v20 = vld [vmem:[%s0 + $0x30] sm:$0xff]
  %v21 = vld [vmem:[%s0 + $0x38] sm:$0xff]
  %v22 = vld [vmem:[%s0 + $0x40] sm:$0xff]
  %v23 = vld [vmem:[%s0 + $0x48] sm:$0xff]
  %v24 = vld [vmem:[%s0 + $0x50] sm:$0xff]
  %v25 = vld [vmem:[%s0 + $0x58] sm:$0xff]
  %v26 = vld [vmem:[%s0 + $0x60] sm:$0xff]
  %v27 = vld [vmem:[%s0 + $0x68] sm:$0xff]
  %v28 = vld [vmem:[%s0 + $0x70] sm:$0xff]
  %v29 = vld [vmem:[%s0 + $0x78] sm:$0xff]
  %v30 = vld [vmem:[%s0 + $0x80] sm:$0xff]
  %v31 = vld [vmem:[%s0 + $0x88] sm:$0xff]
  %v32 = vld [vmem:[%s0 + $0x90] sm:$0xff]
  %v33 = vld [vmem:[%s0 + $0x98] sm:$0xff]
  %v34 = vld [vmem:[%s0 + $0xa0] sm:$0xff]
  %v35 = vld [vmem:[%s0 + $0xa8] sm:$0xff]
  %v36 = vld [vmem:[%s0 + $0xb0] sm:$0xff]
  %v37 = vld [vmem:[%s0 + $0xb8] sm:$0xff]
  %v38 = vld [vmem:[%s0 + $0xc0] sm:$0xff]
  %v39 = vld [vmem:[%s0 + $0xc8] sm:$0xff]
  %v40 = vld [vmem:[%s0 + $0xd0] sm:$0xff]
  %v41 = vld [vmem:[%s0 + $0xd8] sm:$0xff]
  %v42 = vld [vmem:[%s0 + $0xe0] sm:$0xff]
  %v43 = vld [vmem:[%s0 + $0xe8] sm:$0xff]
  %v44 = vld [vmem:[%s0 + $0xf0] sm:$0xff]
  %v45 = vld [vmem:[%s0 + $0xf8] sm:$0xff]
  %v46 = vld [vmem:[%s0 + $0x100] sm:$0xff]
  %v47 = vld [vmem:[%s0 + $0x108] sm:$0xff]
  %v48 = vld [vmem:[%s0 + $0x110] sm:$0xff]
  %v49 = vld [vmem:[%s0 + $0x118] sm:$0xff]
  %v50 = vld [vmem:[%s0 + $0x120] sm:$0xff]
  %v51 = vld [vmem:[%s0 + $0x128] sm:$0xff]
  %v52 = vld [vmem:[%s0 + $0x130] sm:$0xff]
  %v53 = vld [vmem:[%s0 + $0x138] sm:$0xff]
  %v54 = vld [vmem:[%s0 + $0x140] sm:$0xff]
  %v55 = vld [vmem:[%s0 + $0x148] sm:$0xff]
  %v56 = vld [vmem:[%s0 + $0x150] sm:$0xff]
  %v57 = vld [vmem:[%s0 + $0x158] sm:$0xff]
  %v58 = vld [vmem:[%s0 + $0x160] sm:$0xff]
  %v59 = vld [vmem:[%s0 + $0x168] sm:$0xff]
  %v60 = vld [vmem:[%s0 + $0x170] sm:$0xff]
  %v61 = vld [vmem:[%s0 + $0x178] sm:$0xff]
  %v62 = vld [vmem:[%s0 + $0x180] sm:$0xff]
  %v63 = vld [vmem:[%s0 + $0x188] sm:$0xff]
  %v64 = vld [vmem:[%s0 + $0x190] sm:$0xff]
  %v65 = vld [vmem:[%s0 + $0x198] sm:$0xff]
  %v66 = vld [vmem:[%s0 + $0x1a0] sm:$0xff]
  %v67 = vld [vmem:[%s0 + $0x1a8] sm:$0xff]
  %v68 = vld [vmem:[%s0 + $0x1b0] sm:$0xff]
  %v69 = vld [vmem:[%s0 + $0x1b8] sm:$0xff]
  %v70 = vld [vmem:[%s1] sm:$0xff]
  %v71 = vld [vmem:[%s1 + $0x8] sm:$0xff]
  %v72 = vld [vmem:[%s1 + $0x10] sm:$0xff]
  %v73 = vld [vmem:[%s1 + $0x18] sm:$0xff]
  %v74 = vld [vmem:[%s1 + $0x20] sm:$0xff]
  %v75 = vld [vmem:[%s1 + $0x28] sm:$0xff]
  %v76 = vld [vmem:[%s1 + $0x30] sm:$0xff]
  %v77 = vld [vmem:[%s1 + $0x38] sm:$0xff]
  %v78 = vld [vmem:[%s1 + $0x40] sm:$0xff]
  %v79 = vld [vmem:[%s1 + $0x48] sm:$0xff]
  %v80 = vld [vmem:[%s1 + $0x50] sm:$0xff]
  %v81 = vld [vmem:[%s1 + $0x58] sm:$0xff]
  %v82 = vld [vmem:[%s1 + $0x60] sm:$0xff]
  %v83 = vld [vmem:[%s1 + $0x68] sm:$0xff]
  %v84 = vld [vmem:[%s1 + $0x70] sm:$0xff]
  %v85 = vld [vmem:[%s1 + $0x78] sm:$0xff]
  %v86 = vld [vmem:[%s1 + $0x80] sm:$0xff]
  %v87 = vld [vmem:[%s1 + $0x88] sm:$0xff]
  %v88 = vld [vmem:[%s1 + $0x90] sm:$0xff]
  %v89 = vld [vmem:[%s1 + $0x98] sm:$0xff]
  %v90 = vld [vmem:[%s1 + $0xa0] sm:$0xff]
  %v91 = vld [vmem:[%s1 + $0xa8] sm:$0xff]
  %v92 = vld [vmem:[%s1 + $0xb0] sm:$0xff]
  %v93 = vld [vmem:[%s1 + $0xb8] sm:$0xff]
  %v94 = vld [vmem:[%s1 + $0xc0] sm:$0xff]
  %v95 = vld [vmem:[%s1 + $0xc8] sm:$0xff]
  %v96 = vld [vmem:[%s1 + $0xd0] sm:$0xff]
  %v97 = vld [vmem:[%s1 + $0xd8] sm:$0xff]
  %v98 = vld [vmem:[%s1 + $0xe0] sm:$0xff]
  %v99 = vld [vmem:[%s1 + $0xe8] sm:$0xff]
  %v100 = vld [vmem:[%s1 + $0xf0] sm:$0xff]
  %v101 = vld [vmem:[%s1 + $0xf8] sm:$0xff]
  %v102 = vld [vmem:[%s1 + $0x100] sm:$0xff]
  %v103 = vld [vmem:[%s1 + $0x108] sm:$0xff]
  %v104 = vld [vmem:[%s1 + $0x110] sm:$0xff]
  %v105 = vld [vmem:[%s1 + $0x118] sm:$0xff]
  %v106 = vld [vmem:[%s1 + $0x120] sm:$0xff]
  %v107 = vld [vmem:[%s1 + $0x128] sm:$0xff]
  %v108 = vld [vmem:[%s1 + $0x130] sm:$0xff]
  %v109 = vld [vmem:[%s1 + $0x138] sm:$0xff]
  %v110 = vld [vmem:[%s1 + $0x140] sm:$0xff]
  %v111 = vld [vmem:[%s1 + $0x148] sm:$0xff]
  %v112 = vld [vmem:[%s1 + $0x150] sm:$0xff]
  %v113 = vld [vmem:[%s1 + $0x158] sm:$0xff]
  %v114 = vld [vmem:[%s1 + $0x160] sm:$0xff]
  %v115 = vld [vmem:[%s1 + $0x168] sm:$0xff]
  %v116 = vld [vmem:[%s1 + $0x170] sm:$0xff]
  %v117 = vld [vmem:[%s1 + $0x178] sm:$0xff]
  %v118 = vld [vmem:[%s1 + $0x180] sm:$0xff]
  %v119 = vld [vmem:[%s1 + $0x188] sm:$0xff]
  %v120 = vld [vmem:[%s1 + $0x190] sm:$0xff]
  %v121 = vld [vmem:[%s1 + $0x198] sm:$0xff]
  %v122 = vld [vmem:[%s1 + $0x1a0] sm:$0xff]
  %v123 = vld [vmem:[%s1 + $0x1a8] sm:$0xff]
  %v124 = vld [vmem:[%s1 + $0x1b0] sm:$0xff]
  %v125 = vld [vmem:[%s1 + $0x1b8] sm:$0xff]
  %v126 = vld [vmem:[%s1 + $0x1c0] sm:$0xff]
  %v127 = vld [vmem:[%s1 + $0x1c8] sm:$0xff]
  %v128 = vld [vmem:[%s1 + $0x1d0] sm:$0xff]
  %v129 = vld [vmem:[%s1 + $0x1d8] sm:$0xff]
  %v130 = vld [vmem:[%s1 + $0x1e0] sm:$0xff]
  %v131 = vld [vmem:[%s1 + $0x1e8] sm:$0xff]
  %v132 = vld [vmem:[%s1 + $0x1f0] sm:$0xff]
  %v133 = vld [vmem:[%s1 + $0x1f8] sm:$0xff]
  %v134 = vld [vmem:[%s1 + $0x200] sm:$0xff]
  %v135 = vld [vmem:[%s1 + $0x208] sm:$0xff]
  %v136 = vld [vmem:[%s1 + $0x210] sm:$0xff]
  %v137 = vld [vmem:[%s1 + $0x218] sm:$0xff]
  %v138 = vld [vmem:[%s1 + $0x220] sm:$0xff]
  %v139 = vld [vmem:[%s1 + $0x228] sm:$0xff]
  %v140 = vld [vmem:[%s1 + $0x230] sm:$0xff]
  %v141 = vld [vmem:[%s1 + $0x238] sm:$0xff]
  %v142 = vld [vmem:[%s1 + $0x240] sm:$0xff]
  %v143 = vld [vmem:[%s1 + $0x248] sm:$0xff]
  %v144 = vld [vmem:[%s1 + $0x250] sm:$0xff]
  %v145 = vld [vmem:[%s1 + $0x258] sm:$0xff]
  %v146 = vld [vmem:[%s1 + $0x260] sm:$0xff]
  %v147 = vld [vmem:[%s1 + $0x268] sm:$0xff]
  %v148 = vld [vmem:[%s1 + $0x270] sm:$0xff]
  %v149 = vld [vmem:[%s1 + $0x278] sm:$0xff]
  %v150 = vld [vmem:[%s1 + $0x280] sm:$0xff]
  %v151 = vld [vmem:[%s1 + $0x288] sm:$0xff]
  %v152 = vld [vmem:[%s1 + $0x290] sm:$0xff]
  %v153 = vld [vmem:[%s1 + $0x298] sm:$0xff]
  %v154 = vld [vmem:[%s1 + $0x2a0] sm:$0xff]
  %v155 = vld [vmem:[%s1 + $0x2a8] sm:$0xff]
  %v156 = vld [vmem:[%s1 + $0x2b0] sm:$0xff]
  %v157 = vld [vmem:[%s1 + $0x2b8] sm:$0xff]
  %v158 = vld [vmem:[%s1 + $0x2c0] sm:$0xff]
  %v159 = vld [vmem:[%s1 + $0x2c8] sm:$0xff]
  %v160 = vld [vmem:[%s1 + $0x2d0] sm:$0xff]
  %v161 = vld [vmem:[%s1 + $0x2d8] sm:$0xff]
  %v162 = vld [vmem:[%s1 + $0x2e0] sm:$0xff]
  %v163 = vld [vmem:[%s1 + $0x2e8] sm:$0xff]
  %v164 = vld [vmem:[%s1 + $0x2f0] sm:$0xff]
  %v165 = vld [vmem:[%s1 + $0x2f8] sm:$0xff]
  %v166 = vld [vmem:[%s1 + $0x300] sm:$0xff]
  %v167 = vld [vmem:[%s1 + $0x308] sm:$0xff]
  %v168 = vld [vmem:[%s1 + $0x310] sm:$0xff]
  %v169 = vld [vmem:[%s1 + $0x318] sm:$0xff]
  %v170 = vld [vmem:[%s1 + $0x320] sm:$0xff]
  %v171 = vld [vmem:[%s1 + $0x328] sm:$0xff]
  %v172 = vld [vmem:[%s1 + $0x330] sm:$0xff]
  %v173 = vld [vmem:[%s1 + $0x338] sm:$0xff]
  %v174 = vld [vmem:[%s1 + $0x340] sm:$0xff]
  %v175 = vld [vmem:[%s1 + $0x348] sm:$0xff]
  %v176 = vld [vmem:[%s1 + $0x350] sm:$0xff]
  %v177 = vld [vmem:[%s1 + $0x358] sm:$0xff]
  %v178 = vld [vmem:[%s1 + $0x360] sm:$0xff]
  %v179 = vld [vmem:[%s1 + $0x368] sm:$0xff]
  %v180 = vld [vmem:[%s1 + $0x370] sm:$0xff]
  %v181 = vld [vmem:[%s1 + $0x378] sm:$0xff]
  %v182 = vld [vmem:[%s1 + $0x380] sm:$0xff]
  %v183 = vld [vmem:[%s1 + $0x388] sm:$0xff]
  %v184 = vld [vmem:[%s1 + $0x390] sm:$0xff]
  %v185 = vld [vmem:[%s1 + $0x398] sm:$0xff]
  %v186 = vld [vmem:[%s1 + $0x3a0] sm:$0xff]
  %v187 = vld [vmem:[%s1 + $0x3a8] sm:$0xff]
  %v188 = vld [vmem:[%s1 + $0x3b0] sm:$0xff]
  %v189 = vld [vmem:[%s1 + $0x3b8] sm:$0xff]
  %v190 = vld [vmem:[%s1 + $0x3c0] sm:$0xff]
  %v191 = vld [vmem:[%s1 + $0x3c8] sm:$0xff]
  %v192 = vld [vmem:[%s1 + $0x3d0] sm:$0xff]
  %v193 = vld [vmem:[%s1 + $0x3d8] sm:$0xff]
  %v194 = vld [vmem:[%s1 + $0x3e0] sm:$0xff]
  %v195 = vld [vmem:[%s1 + $0x3e8] sm:$0xff]
  %v196 = vld [vmem:[%s1 + $0x3f0] sm:$0xff]
  %v197 = vld [vmem:[%s1 + $0x3f8] sm:$0xff]
  %v198 = vld [vmem:[%s1 + $0x400] sm:$0xff]
  %v199 = vld [vmem:[%s1 + $0x408] sm:$0xff]
  %v200 = vld [vmem:[%s1 + $0x410] sm:$0xff]
  %v201 = vld [vmem:[%s1 + $0x418] sm:$0xff]
  %v202 = vld [vmem:[%s1 + $0x420] sm:$0xff]
  %v203 = vld [vmem:[%s1 + $0x428] sm:$0xff]
  %v204 = vld [vmem:[%s1 + $0x430] sm:$0xff]
  %v205 = vld [vmem:[%s1 + $0x438] sm:$0xff]
  %v206 = vld [vmem:[%s1 + $0x440] sm:$0xff]
  %v207 = vld [vmem:[%s1 + $0x448] sm:$0xff]
  %v208 = vld [vmem:[%s1 + $0x450] sm:$0xff]
  %v209 = vld [vmem:[%s1 + $0x458] sm:$0xff]
  %v210 = vld [vmem:[%s1 + $0x460] sm:$0xff]
  %v211 = vld [vmem:[%s1 + $0x468] sm:$0xff]
  %v212 = vld [vmem:[%s1 + $0x470] sm:$0xff]
  %v213 = vld [vmem:[%s1 + $0x478] sm:$0xff]
  %v214 = vld [vmem:[%s1 + $0x480] sm:$0xff]
  %v215 = vld [vmem:[%s1 + $0x488] sm:$0xff]
  %v216 = vld [vmem:[%s1 + $0x490] sm:$0xff]
  %v217 = vld [vmem:[%s1 + $0x498] sm:$0xff]
  %v218 = vld [vmem:[%s1 + $0x4a0] sm:$0xff]
  %v219 = vld [vmem:[%s1 + $0x4a8] sm:$0xff]
  %v220 = vld [vmem:[%s1 + $0x4b0] sm:$0xff]
  %v221 = vld [vmem:[%s1 + $0x4b8] sm:$0xff]
  %v222 = vld [vmem:[%s1 + $0x4c0] sm:$0xff]
  %v223 = vld [vmem:[%s1 + $0x4c8] sm:$0xff]
  %v224 = vld [vmem:[%s1 + $0x4d0] sm:$0xff]
  %v225 = vld [vmem:[%s1 + $0x4d8] sm:$0xff]
  %v226 = vld [vmem:[%s1 + $0x4e0] sm:$0xff]
  %v227 = vld [vmem:[%s1 + $0x4e8] sm:$0xff]
  %v228 = vld [vmem:[%s1 + $0x4f0] sm:$0xff]
  %v229 = vld [vmem:[%s1 + $0x4f8] sm:$0xff]
  %v230 = vld [vmem:[%s1 + $0x500] sm:$0xff]
  %v231 = vld [vmem:[%s1 + $0x508] sm:$0xff]
  %v232 = vld [vmem:[%s1 + $0x510] sm:$0xff]
  %v233 = vld [vmem:[%s1 + $0x518] sm:$0xff]
  %v234 = vld [vmem:[%s1 + $0x520] sm:$0xff]
  %v235 = vld [vmem:[%s1 + $0x528] sm:$0xff]
  %v236 = vld [vmem:[%s1 + $0x530] sm:$0xff]
  %v237 = vld [vmem:[%s1 + $0x538] sm:$0xff]
  %v238 = vld [vmem:[%s1 + $0x540] sm:$0xff]
  %v239 = vld [vmem:[%s1 + $0x548] sm:$0xff]
  %v240 = vld [vmem:[%s1 + $0x550] sm:$0xff]
  %v241 = vld [vmem:[%s1 + $0x558] sm:$0xff]
  %v242 = vld [vmem:[%s1 + $0x560] sm:$0xff]
  %v243 = vld [vmem:[%s1 + $0x568] sm:$0xff]
  %v244 = vld [vmem:[%s1 + $0x570] sm:$0xff]
  %v245 = vld [vmem:[%s1 + $0x578] sm:$0xff]
  %v246 = vld [vmem:[%s1 + $0x580] sm:$0xff]
  %v247 = vld [vmem:[%s1 + $0x588] sm:$0xff]
  %v248 = vld [vmem:[%s1 + $0x590] sm:$0xff]
  %v249 = vld [vmem:[%s1 + $0x598] sm:$0xff]
  %v250 = vld [vmem:[%s1 + $0x5a0] sm:$0xff]
  %v251 = vld [vmem:[%s1 + $0x5a8] sm:$0xff]
  %v252 = vld [vmem:[%s1 + $0x5b0] sm:$0xff]
  %v253 = vld [vmem:[%s1 + $0x5b8] sm:$0xff]
  %v254 = vld [vmem:[%s1 + $0x5c0] sm:$0xff]
  %v255 = vld [vmem:[%s1 + $0x5c8] sm:$0xff]
  %v256 = vld [vmem:[%s1 + $0x5d0] sm:$0xff]
  %v257 = vld [vmem:[%s1 + $0x5d8] sm:$0xff]
  %v258 = vld [vmem:[%s1 + $0x5e0] sm:$0xff]
  %v259 = vld [vmem:[%s1 + $0x5e8] sm:$0xff]
  %v260 = vld [vmem:[%s1 + $0x5f0] sm:$0xff]
  %v261 = vld [vmem:[%s1 + $0x5f8] sm:$0xff]
  %v262 = vld [vmem:[%s1 + $0x600] sm:$0xff]
  %v263 = vld [vmem:[%s1 + $0x608] sm:$0xff]
  %v264 = vld [vmem:[%s1 + $0x610] sm:$0xff]
  %v265 = vld [vmem:[%s1 + $0x618] sm:$0xff]
  %v266 = vld [vmem:[%s1 + $0x620] sm:$0xff]
  %v267 = vld [vmem:[%s1 + $0x628] sm:$0xff]
  %v268 = vld [vmem:[%s1 + $0x630] sm:$0xff]
  %v269 = vld [vmem:[%s1 + $0x638] sm:$0xff]
  %v270 = vld [vmem:[%s1 + $0x640] sm:$0xff]
  %v271 = vld [vmem:[%s1 + $0x648] sm:$0xff]
  %v272 = vld [vmem:[%s1 + $0x650] sm:$0xff]
  %v273 = vld [vmem:[%s1 + $0x658] sm:$0xff]
  %v274 = vld [vmem:[%s1 + $0x660] sm:$0xff]
  %v275 = vld [vmem:[%s1 + $0x668] sm:$0xff]
  %v276 = vld [vmem:[%s1 + $0x670] sm:$0xff]
  %v277 = vld [vmem:[%s1 + $0x678] sm:$0xff]
  %v278 = vld [vmem:[%s1 + $0x680] sm:$0xff]
  %v279 = vld [vmem:[%s1 + $0x688] sm:$0xff]
  %v280 = vld [vmem:[%s1 + $0x690] sm:$0xff]
  %v281 = vld [vmem:[%s1 + $0x698] sm:$0xff]
  %v282 = vld [vmem:[%s1 + $0x6a0] sm:$0xff]
  %v283 = vld [vmem:[%s1 + $0x6a8] sm:$0xff]
  %v284 = vld [vmem:[%s1 + $0x6b0] sm:$0xff]
  %v285 = vld [vmem:[%s1 + $0x6b8] sm:$0xff]
  %v286 = vld [vmem:[%s1 + $0x6c0] sm:$0xff]
  %v287 = vld [vmem:[%s1 + $0x6c8] sm:$0xff]
  %v288 = vld [vmem:[%s1 + $0x6d0] sm:$0xff]
  %v289 = vld [vmem:[%s1 + $0x6d8] sm:$0xff]
  %v290 = vld [vmem:[%s1 + $0x6e0] sm:$0xff]
  %v291 = vld [vmem:[%s1 + $0x6e8] sm:$0xff]
  %v292 = vld [vmem:[%s1 + $0x6f0] sm:$0xff]
  %v293 = vld [vmem:[%s1 + $0x6f8] sm:$0xff]
  %v294 = vld [vmem:[%s1 + $0x700] sm:$0xff]
  %v295 = vld [vmem:[%s1 + $0x708] sm:$0xff]
  %v296 = vld [vmem:[%s1 + $0x710] sm:$0xff]
  %v297 = vld [vmem:[%s1 + $0x718] sm:$0xff]
  %v298 = vld [vmem:[%s1 + $0x720] sm:$0xff]
  %v299 = vld [vmem:[%s1 + $0x728] sm:$0xff]
  %v300 = vld [vmem:[%s1 + $0x730] sm:$0xff]
  %v301 = vld [vmem:[%s1 + $0x738] sm:$0xff]
  %v302 = vld [vmem:[%s1 + $0x740] sm:$0xff]
  %v303 = vld [vmem:[%s1 + $0x748] sm:$0xff]
  %v304 = vld [vmem:[%s1 + $0x750] sm:$0xff]
  %v305 = vld [vmem:[%s1 + $0x758] sm:$0xff]
  %v306 = vld [vmem:[%s1 + $0x760] sm:$0xff]
  %v307 = vld [vmem:[%s1 + $0x768] sm:$0xff]
  %v308 = vld [vmem:[%s1 + $0x770] sm:$0xff]
  %v309 = vld [vmem:[%s1 + $0x778] sm:$0xff]
  %v310 = vld [vmem:[%s1 + $0x780] sm:$0xff]
  %v311 = vld [vmem:[%s1 + $0x788] sm:$0xff]
  %v312 = vld [vmem:[%s1 + $0x790] sm:$0xff]
  %v313 = vld [vmem:[%s1 + $0x798] sm:$0xff]
  %v314 = vld [vmem:[%s1 + $0x7a0] sm:$0xff]
  %v315 = vld [vmem:[%s1 + $0x7a8] sm:$0xff]
  %v316 = vld [vmem:[%s1 + $0x7b0] sm:$0xff]
  %v317 = vld [vmem:[%s1 + $0x7b8] sm:$0xff]
  %v318 = vld [vmem:[%s1 + $0x7c0] sm:$0xff]
  %v319 = vld [vmem:[%s1 + $0x7c8] sm:$0xff]
  %v320 = vld [vmem:[%s1 + $0x7d0] sm:$0xff]
  %v321 = vld [vmem:[%s1 + $0x7d8] sm:$0xff]
  %v322 = vld [vmem:[%s1 + $0x7e0] sm:$0xff]
  %v323 = vld [vmem:[%s1 + $0x7e8] sm:$0xff]
  %v324 = vld [vmem:[%s1 + $0x7f0] sm:$0xff]
  %v325 = vld [vmem:[%s1 + $0x7f8] sm:$0xff]
  %v326 = vld [vmem:[%s2] sm:$0x3]
  %v328 = vlaneseq
  %v329 = vshrl.u32 %v328, 7
  %v330 = vsub.s32 0, %v329
  %v331 = vrot.slane %v326, %v330
  %v332 = vlaneseq
  %v333 = vshrl.u32 %v332, 7
  %v334 = vsub.s32 1, %v333
  %v335 = vrot.slane %v326, %v334
  %v394 = vunpack.c.l.b16 %v14
  %v395 = vunpack.c.h.b16 %v14
  %v396 = vunpack.c.l.b16 %v15
  %v397 = vunpack.c.h.b16 %v15
  %v398 = vunpack.c.l.b16 %v16
  %v399 = vunpack.c.h.b16 %v16
  %v400 = vunpack.c.l.b16 %v17
  %v401 = vunpack.c.h.b16 %v17
  %v402 = vunpack.c.l.b16 %v18
  %v403 = vunpack.c.h.b16 %v18
  %v404 = vunpack.c.l.b16 %v19
  %v405 = vunpack.c.h.b16 %v19
  %v406 = vunpack.c.l.b16 %v20
  %v407 = vunpack.c.h.b16 %v20
  %v408 = vunpack.c.l.b16 %v21
  %v409 = vunpack.c.h.b16 %v21
  %v410 = vunpack.c.l.b16 %v22
  %v411 = vunpack.c.h.b16 %v22
  %v412 = vunpack.c.l.b16 %v23
  %v413 = vunpack.c.h.b16 %v23
  %v414 = vunpack.c.l.b16 %v24
  %v415 = vunpack.c.h.b16 %v24
  %v416 = vunpack.c.l.b16 %v25
  %v417 = vunpack.c.h.b16 %v25
  %v418 = vunpack.c.l.b16 %v26
  %v419 = vunpack.c.h.b16 %v26
  %v420 = vunpack.c.l.b16 %v27
  %v421 = vunpack.c.h.b16 %v27
  %v422 = vunpack.c.l.b16 %v28
  %v423 = vunpack.c.h.b16 %v28
  %v424 = vunpack.c.l.b16 %v29
  %v425 = vunpack.c.h.b16 %v29
  %v426 = vunpack.c.l.b16 %v30
  %v427 = vunpack.c.h.b16 %v30
  %v428 = vunpack.c.l.b16 %v31
  %v429 = vunpack.c.h.b16 %v31
  %v430 = vunpack.c.l.b16 %v32
  %v431 = vunpack.c.h.b16 %v32
  %v432 = vunpack.c.l.b16 %v33
  %v433 = vunpack.c.h.b16 %v33
  %v434 = vunpack.c.l.b16 %v34
  %v435 = vunpack.c.h.b16 %v34
  %v436 = vunpack.c.l.b16 %v35
  %v437 = vunpack.c.h.b16 %v35
  %v438 = vunpack.c.l.b16 %v36
  %v439 = vunpack.c.h.b16 %v36
  %v440 = vunpack.c.l.b16 %v37
  %v441 = vunpack.c.h.b16 %v37
  %v442 = vunpack.c.l.b16 %v38
  %v443 = vunpack.c.h.b16 %v38
  %v444 = vunpack.c.l.b16 %v39
  %v445 = vunpack.c.h.b16 %v39
  %v446 = vunpack.c.l.b16 %v40
  %v447 = vunpack.c.h.b16 %v40
  %v448 = vunpack.c.l.b16 %v41
  %v449 = vunpack.c.h.b16 %v41
  %v450 = vunpack.c.l.b16 %v42
  %v451 = vunpack.c.h.b16 %v42
  %v452 = vunpack.c.l.b16 %v43
  %v453 = vunpack.c.h.b16 %v43
  %v454 = vunpack.c.l.b16 %v44
  %v455 = vunpack.c.h.b16 %v44
  %v456 = vunpack.c.l.b16 %v45
  %v457 = vunpack.c.h.b16 %v45
  %v458 = vunpack.c.l.b16 %v46
  %v459 = vunpack.c.h.b16 %v46
  %v460 = vunpack.c.l.b16 %v47
  %v461 = vunpack.c.h.b16 %v47
  %v462 = vunpack.c.l.b16 %v48
  %v463 = vunpack.c.h.b16 %v48
  %v464 = vunpack.c.l.b16 %v49
  %v465 = vunpack.c.h.b16 %v49
  %v466 = vunpack.c.l.b16 %v50
  %v467 = vunpack.c.h.b16 %v50
  %v468 = vunpack.c.l.b16 %v51
  %v469 = vunpack.c.h.b16 %v51
  %v470 = vunpack.c.l.b16 %v52
  %v471 = vunpack.c.h.b16 %v52
  %v472 = vunpack.c.l.b16 %v53
  %v473 = vunpack.c.h.b16 %v53
  %v474 = vunpack.c.l.b16 %v54
  %v475 = vunpack.c.h.b16 %v54
  %v476 = vunpack.c.l.b16 %v55
  %v477 = vunpack.c.h.b16 %v55
  %v478 = vunpack.c.l.b16 %v56
  %v479 = vunpack.c.h.b16 %v56
  %v480 = vunpack.c.l.b16 %v57
  %v481 = vunpack.c.h.b16 %v57
  %v482 = vunpack.c.l.b16 %v58
  %v483 = vunpack.c.h.b16 %v58
  %v484 = vunpack.c.l.b16 %v59
  %v485 = vunpack.c.h.b16 %v59
  %v486 = vunpack.c.l.b16 %v60
  %v487 = vunpack.c.h.b16 %v60
  %v488 = vunpack.c.l.b16 %v61
  %v489 = vunpack.c.h.b16 %v61
  %v490 = vunpack.c.l.b16 %v62
  %v491 = vunpack.c.h.b16 %v62
  %v492 = vunpack.c.l.b16 %v63
  %v493 = vunpack.c.h.b16 %v63
  %v494 = vunpack.c.l.b16 %v64
  %v495 = vunpack.c.h.b16 %v64
  %v496 = vunpack.c.l.b16 %v65
  %v497 = vunpack.c.h.b16 %v65
  %v498 = vunpack.c.l.b16 %v66
  %v499 = vunpack.c.h.b16 %v66
  %v500 = vunpack.c.l.b16 %v67
  %v501 = vunpack.c.h.b16 %v67
  %v502 = vunpack.c.l.b16 %v68
  %v503 = vunpack.c.h.b16 %v68
  %v504 = vunpack.c.l.b16 %v69
  %v505 = vunpack.c.h.b16 %v69
  %v506 = vpack.c.b16 %v410, %v394
  %v507 = vpack.c.b16 %v411, %v395
  %v508 = vpack.c.b16 %v412, %v396
  %v509 = vpack.c.b16 %v413, %v397
  %v510 = vpack.c.b16 %v414, %v398
  %v511 = vpack.c.b16 %v415, %v399
  %v512 = vpack.c.b16 %v416, %v400
  %v513 = vpack.c.b16 %v417, %v401
  %v514 = vpack.c.b16 %v418, %v402
  %v515 = vpack.c.b16 %v419, %v403
  %v516 = vpack.c.b16 %v420, %v404
  %v517 = vpack.c.b16 %v421, %v405
  %v518 = vpack.c.b16 %v422, %v406
  %v519 = vpack.c.b16 %v423, %v407
  %v520 = vpack.c.b16 %v424, %v408
  %v521 = vpack.c.b16 %v425, %v409
  %v522 = vpack.c.b16 %v442, %v426
  %v523 = vpack.c.b16 %v443, %v427
  %v524 = vpack.c.b16 %v444, %v428
  %v525 = vpack.c.b16 %v445, %v429
  %v526 = vpack.c.b16 %v446, %v430
  %v527 = vpack.c.b16 %v447, %v431
  %v528 = vpack.c.b16 %v448, %v432
  %v529 = vpack.c.b16 %v449, %v433
  %v530 = vpack.c.b16 %v450, %v434
  %v531 = vpack.c.b16 %v451, %v435
  %v532 = vpack.c.b16 %v452, %v436
  %v533 = vpack.c.b16 %v453, %v437
  %v534 = vpack.c.b16 %v454, %v438
  %v535 = vpack.c.b16 %v455, %v439
  %v536 = vpack.c.b16 %v456, %v440
  %v537 = vpack.c.b16 %v457, %v441
  %v538 = vpack.c.b16 %v474, %v458
  %v539 = vpack.c.b16 %v475, %v459
  %v540 = vpack.c.b16 %v476, %v460
  %v541 = vpack.c.b16 %v477, %v461
  %v542 = vpack.c.b16 %v478, %v462
  %v543 = vpack.c.b16 %v479, %v463
  %v544 = vpack.c.b16 %v480, %v464
  %v545 = vpack.c.b16 %v481, %v465
  %v546 = vpack.c.b16 %v482, %v466
  %v547 = vpack.c.b16 %v483, %v467
  %v548 = vpack.c.b16 %v484, %v468
  %v549 = vpack.c.b16 %v485, %v469
  %v550 = vpack.c.b16 %v486, %v470
  %v551 = vpack.c.b16 %v487, %v471
  %v552 = vpack.c.b16 %v488, %v472
  %v553 = vpack.c.b16 %v489, %v473
  %v554 = vpack.c.b16 %v490, %v490
  %v555 = vpack.c.b16 %v491, %v491
  %v556 = vpack.c.b16 %v492, %v492
  %v557 = vpack.c.b16 %v493, %v493
  %v558 = vpack.c.b16 %v494, %v494
  %v559 = vpack.c.b16 %v495, %v495
  %v560 = vpack.c.b16 %v496, %v496
  %v561 = vpack.c.b16 %v497, %v497
  %v562 = vpack.c.b16 %v498, %v498
  %v563 = vpack.c.b16 %v499, %v499
  %v564 = vpack.c.b16 %v500, %v500
  %v565 = vpack.c.b16 %v501, %v501
  %v566 = vpack.c.b16 %v502, %v502
  %v567 = vpack.c.b16 %v503, %v503
  %v568 = vpack.c.b16 %v504, %v504
  %v569 = vpack.c.b16 %v505, %v505
  %v890 = vunpack.c.l.b16 %v70
  %v891 = vunpack.c.h.b16 %v70
  %v892 = vunpack.c.l.b16 %v71
  %v893 = vunpack.c.h.b16 %v71
  %v894 = vunpack.c.l.b16 %v72
  %v895 = vunpack.c.h.b16 %v72
  %v896 = vunpack.c.l.b16 %v73
  %v897 = vunpack.c.h.b16 %v73
  %v898 = vunpack.c.l.b16 %v74
  %v899 = vunpack.c.h.b16 %v74
  %v900 = vunpack.c.l.b16 %v75
  %v901 = vunpack.c.h.b16 %v75
  %v902 = vunpack.c.l.b16 %v76
  %v903 = vunpack.c.h.b16 %v76
  %v904 = vunpack.c.l.b16 %v77
  %v905 = vunpack.c.h.b16 %v77
  %v906 = vunpack.c.l.b16 %v78
  %v907 = vunpack.c.h.b16 %v78
  %v908 = vunpack.c.l.b16 %v79
  %v909 = vunpack.c.h.b16 %v79
  %v910 = vunpack.c.l.b16 %v80
  %v911 = vunpack.c.h.b16 %v80
  %v912 = vunpack.c.l.b16 %v81
  %v913 = vunpack.c.h.b16 %v81
  %v914 = vunpack.c.l.b16 %v82
  %v915 = vunpack.c.h.b16 %v82
  %v916 = vunpack.c.l.b16 %v83
  %v917 = vunpack.c.h.b16 %v83
  %v918 = vunpack.c.l.b16 %v84
  %v919 = vunpack.c.h.b16 %v84
  %v920 = vunpack.c.l.b16 %v85
  %v921 = vunpack.c.h.b16 %v85
  %v922 = vunpack.c.l.b16 %v86
  %v923 = vunpack.c.h.b16 %v86
  %v924 = vunpack.c.l.b16 %v87
  %v925 = vunpack.c.h.b16 %v87
  %v926 = vunpack.c.l.b16 %v88
  %v927 = vunpack.c.h.b16 %v88
  %v928 = vunpack.c.l.b16 %v89
  %v929 = vunpack.c.h.b16 %v89
  %v930 = vunpack.c.l.b16 %v90
  %v931 = vunpack.c.h.b16 %v90
  %v932 = vunpack.c.l.b16 %v91
  %v933 = vunpack.c.h.b16 %v91
  %v934 = vunpack.c.l.b16 %v92
  %v935 = vunpack.c.h.b16 %v92
  %v936 = vunpack.c.l.b16 %v93
  %v937 = vunpack.c.h.b16 %v93
  %v938 = vunpack.c.l.b16 %v94
  %v939 = vunpack.c.h.b16 %v94
  %v940 = vunpack.c.l.b16 %v95
  %v941 = vunpack.c.h.b16 %v95
  %v942 = vunpack.c.l.b16 %v96
  %v943 = vunpack.c.h.b16 %v96
  %v944 = vunpack.c.l.b16 %v97
  %v945 = vunpack.c.h.b16 %v97
  %v946 = vunpack.c.l.b16 %v98
  %v947 = vunpack.c.h.b16 %v98
  %v948 = vunpack.c.l.b16 %v99
  %v949 = vunpack.c.h.b16 %v99
  %v950 = vunpack.c.l.b16 %v100
  %v951 = vunpack.c.h.b16 %v100
  %v952 = vunpack.c.l.b16 %v101
  %v953 = vunpack.c.h.b16 %v101
  %v954 = vunpack.c.l.b16 %v102
  %v955 = vunpack.c.h.b16 %v102
  %v956 = vunpack.c.l.b16 %v103
  %v957 = vunpack.c.h.b16 %v103
  %v958 = vunpack.c.l.b16 %v104
  %v959 = vunpack.c.h.b16 %v104
  %v960 = vunpack.c.l.b16 %v105
  %v961 = vunpack.c.h.b16 %v105
  %v962 = vunpack.c.l.b16 %v106
  %v963 = vunpack.c.h.b16 %v106
  %v964 = vunpack.c.l.b16 %v107
  %v965 = vunpack.c.h.b16 %v107
  %v966 = vunpack.c.l.b16 %v108
  %v967 = vunpack.c.h.b16 %v108
  %v968 = vunpack.c.l.b16 %v109
  %v969 = vunpack.c.h.b16 %v109
  %v970 = vunpack.c.l.b16 %v110
  %v971 = vunpack.c.h.b16 %v110
  %v972 = vunpack.c.l.b16 %v111
  %v973 = vunpack.c.h.b16 %v111
  %v974 = vunpack.c.l.b16 %v112
  %v975 = vunpack.c.h.b16 %v112
  %v976 = vunpack.c.l.b16 %v113
  %v977 = vunpack.c.h.b16 %v113
  %v978 = vunpack.c.l.b16 %v114
  %v979 = vunpack.c.h.b16 %v114
  %v980 = vunpack.c.l.b16 %v115
  %v981 = vunpack.c.h.b16 %v115
  %v982 = vunpack.c.l.b16 %v116
  %v983 = vunpack.c.h.b16 %v116
  %v984 = vunpack.c.l.b16 %v117
  %v985 = vunpack.c.h.b16 %v117
  %v986 = vunpack.c.l.b16 %v118
  %v987 = vunpack.c.h.b16 %v118
  %v988 = vunpack.c.l.b16 %v119
  %v989 = vunpack.c.h.b16 %v119
  %v990 = vunpack.c.l.b16 %v120
  %v991 = vunpack.c.h.b16 %v120
  %v992 = vunpack.c.l.b16 %v121
  %v993 = vunpack.c.h.b16 %v121
  %v994 = vunpack.c.l.b16 %v122
  %v995 = vunpack.c.h.b16 %v122
  %v996 = vunpack.c.l.b16 %v123
  %v997 = vunpack.c.h.b16 %v123
  %v998 = vunpack.c.l.b16 %v124
  %v999 = vunpack.c.h.b16 %v124
  %v1000 = vunpack.c.l.b16 %v125
  %v1001 = vunpack.c.h.b16 %v125
  %v1002 = vunpack.c.l.b16 %v126
  %v1003 = vunpack.c.h.b16 %v126
  %v1004 = vunpack.c.l.b16 %v127
  %v1005 = vunpack.c.h.b16 %v127
  %v1006 = vunpack.c.l.b16 %v128
  %v1007 = vunpack.c.h.b16 %v128
  %v1008 = vunpack.c.l.b16 %v129
  %v1009 = vunpack.c.h.b16 %v129
  %v1010 = vunpack.c.l.b16 %v130
  %v1011 = vunpack.c.h.b16 %v130
  %v1012 = vunpack.c.l.b16 %v131
  %v1013 = vunpack.c.h.b16 %v131
  %v1014 = vunpack.c.l.b16 %v132
  %v1015 = vunpack.c.h.b16 %v132
  %v1016 = vunpack.c.l.b16 %v133
  %v1017 = vunpack.c.h.b16 %v133
  %v1018 = vunpack.c.l.b16 %v134
  %v1019 = vunpack.c.h.b16 %v134
  %v1020 = vunpack.c.l.b16 %v135
  %v1021 = vunpack.c.h.b16 %v135
  %v1022 = vunpack.c.l.b16 %v136
  %v1023 = vunpack.c.h.b16 %v136
  %v1024 = vunpack.c.l.b16 %v137
  %v1025 = vunpack.c.h.b16 %v137
  %v1026 = vunpack.c.l.b16 %v138
  %v1027 = vunpack.c.h.b16 %v138
  %v1028 = vunpack.c.l.b16 %v139
  %v1029 = vunpack.c.h.b16 %v139
  %v1030 = vunpack.c.l.b16 %v140
  %v1031 = vunpack.c.h.b16 %v140
  %v1032 = vunpack.c.l.b16 %v141
  %v1033 = vunpack.c.h.b16 %v141
  %v1034 = vunpack.c.l.b16 %v142
  %v1035 = vunpack.c.h.b16 %v142
  %v1036 = vunpack.c.l.b16 %v143
  %v1037 = vunpack.c.h.b16 %v143
  %v1038 = vunpack.c.l.b16 %v144
  %v1039 = vunpack.c.h.b16 %v144
  %v1040 = vunpack.c.l.b16 %v145
  %v1041 = vunpack.c.h.b16 %v145
  %v1042 = vunpack.c.l.b16 %v146
  %v1043 = vunpack.c.h.b16 %v146
  %v1044 = vunpack.c.l.b16 %v147
  %v1045 = vunpack.c.h.b16 %v147
  %v1046 = vunpack.c.l.b16 %v148
  %v1047 = vunpack.c.h.b16 %v148
  %v1048 = vunpack.c.l.b16 %v149
  %v1049 = vunpack.c.h.b16 %v149
  %v1050 = vunpack.c.l.b16 %v150
  %v1051 = vunpack.c.h.b16 %v150
  %v1052 = vunpack.c.l.b16 %v151
  %v1053 = vunpack.c.h.b16 %v151
  %v1054 = vunpack.c.l.b16 %v152
  %v1055 = vunpack.c.h.b16 %v152
  %v1056 = vunpack.c.l.b16 %v153
  %v1057 = vunpack.c.h.b16 %v153
  %v1058 = vunpack.c.l.b16 %v154
  %v1059 = vunpack.c.h.b16 %v154
  %v1060 = vunpack.c.l.b16 %v155
  %v1061 = vunpack.c.h.b16 %v155
  %v1062 = vunpack.c.l.b16 %v156
  %v1063 = vunpack.c.h.b16 %v156
  %v1064 = vunpack.c.l.b16 %v157
  %v1065 = vunpack.c.h.b16 %v157
  %v1066 = vunpack.c.l.b16 %v158
  %v1067 = vunpack.c.h.b16 %v158
  %v1068 = vunpack.c.l.b16 %v159
  %v1069 = vunpack.c.h.b16 %v159
  %v1070 = vunpack.c.l.b16 %v160
  %v1071 = vunpack.c.h.b16 %v160
  %v1072 = vunpack.c.l.b16 %v161
  %v1073 = vunpack.c.h.b16 %v161
  %v1074 = vunpack.c.l.b16 %v162
  %v1075 = vunpack.c.h.b16 %v162
  %v1076 = vunpack.c.l.b16 %v163
  %v1077 = vunpack.c.h.b16 %v163
  %v1078 = vunpack.c.l.b16 %v164
  %v1079 = vunpack.c.h.b16 %v164
  %v1080 = vunpack.c.l.b16 %v165
  %v1081 = vunpack.c.h.b16 %v165
  %v1082 = vunpack.c.l.b16 %v166
  %v1083 = vunpack.c.h.b16 %v166
  %v1084 = vunpack.c.l.b16 %v167
  %v1085 = vunpack.c.h.b16 %v167
  %v1086 = vunpack.c.l.b16 %v168
  %v1087 = vunpack.c.h.b16 %v168
  %v1088 = vunpack.c.l.b16 %v169
  %v1089 = vunpack.c.h.b16 %v169
  %v1090 = vunpack.c.l.b16 %v170
  %v1091 = vunpack.c.h.b16 %v170
  %v1092 = vunpack.c.l.b16 %v171
  %v1093 = vunpack.c.h.b16 %v171
  %v1094 = vunpack.c.l.b16 %v172
  %v1095 = vunpack.c.h.b16 %v172
  %v1096 = vunpack.c.l.b16 %v173
  %v1097 = vunpack.c.h.b16 %v173
  %v1098 = vunpack.c.l.b16 %v174
  %v1099 = vunpack.c.h.b16 %v174
  %v1100 = vunpack.c.l.b16 %v175
  %v1101 = vunpack.c.h.b16 %v175
  %v1102 = vunpack.c.l.b16 %v176
  %v1103 = vunpack.c.h.b16 %v176
  %v1104 = vunpack.c.l.b16 %v177
  %v1105 = vunpack.c.h.b16 %v177
  %v1106 = vunpack.c.l.b16 %v178
  %v1107 = vunpack.c.h.b16 %v178
  %v1108 = vunpack.c.l.b16 %v179
  %v1109 = vunpack.c.h.b16 %v179
  %v1110 = vunpack.c.l.b16 %v180
  %v1111 = vunpack.c.h.b16 %v180
  %v1112 = vunpack.c.l.b16 %v181
  %v1113 = vunpack.c.h.b16 %v181
  %v1114 = vunpack.c.l.b16 %v182
  %v1115 = vunpack.c.h.b16 %v182
  %v1116 = vunpack.c.l.b16 %v183
  %v1117 = vunpack.c.h.b16 %v183
  %v1118 = vunpack.c.l.b16 %v184
  %v1119 = vunpack.c.h.b16 %v184
  %v1120 = vunpack.c.l.b16 %v185
  %v1121 = vunpack.c.h.b16 %v185
  %v1122 = vunpack.c.l.b16 %v186
  %v1123 = vunpack.c.h.b16 %v186
  %v1124 = vunpack.c.l.b16 %v187
  %v1125 = vunpack.c.h.b16 %v187
  %v1126 = vunpack.c.l.b16 %v188
  %v1127 = vunpack.c.h.b16 %v188
  %v1128 = vunpack.c.l.b16 %v189
  %v1129 = vunpack.c.h.b16 %v189
  %v1130 = vunpack.c.l.b16 %v190
  %v1131 = vunpack.c.h.b16 %v190
  %v1132 = vunpack.c.l.b16 %v191
  %v1133 = vunpack.c.h.b16 %v191
  %v1134 = vunpack.c.l.b16 %v192
  %v1135 = vunpack.c.h.b16 %v192
  %v1136 = vunpack.c.l.b16 %v193
  %v1137 = vunpack.c.h.b16 %v193
  %v1138 = vunpack.c.l.b16 %v194
  %v1139 = vunpack.c.h.b16 %v194
  %v1140 = vunpack.c.l.b16 %v195
  %v1141 = vunpack.c.h.b16 %v195
  %v1142 = vunpack.c.l.b16 %v196
  %v1143 = vunpack.c.h.b16 %v196
  %v1144 = vunpack.c.l.b16 %v197
  %v1145 = vunpack.c.h.b16 %v197
  %v1146 = vunpack.c.l.b16 %v198
  %v1147 = vunpack.c.h.b16 %v198
  %v1148 = vunpack.c.l.b16 %v199
  %v1149 = vunpack.c.h.b16 %v199
  %v1150 = vunpack.c.l.b16 %v200
  %v1151 = vunpack.c.h.b16 %v200
  %v1152 = vunpack.c.l.b16 %v201
  %v1153 = vunpack.c.h.b16 %v201
  %v1154 = vunpack.c.l.b16 %v202
  %v1155 = vunpack.c.h.b16 %v202
  %v1156 = vunpack.c.l.b16 %v203
  %v1157 = vunpack.c.h.b16 %v203
  %v1158 = vunpack.c.l.b16 %v204
  %v1159 = vunpack.c.h.b16 %v204
  %v1160 = vunpack.c.l.b16 %v205
  %v1161 = vunpack.c.h.b16 %v205
  %v1162 = vunpack.c.l.b16 %v206
  %v1163 = vunpack.c.h.b16 %v206
  %v1164 = vunpack.c.l.b16 %v207
  %v1165 = vunpack.c.h.b16 %v207
  %v1166 = vunpack.c.l.b16 %v208
  %v1167 = vunpack.c.h.b16 %v208
  %v1168 = vunpack.c.l.b16 %v209
  %v1169 = vunpack.c.h.b16 %v209
  %v1170 = vunpack.c.l.b16 %v210
  %v1171 = vunpack.c.h.b16 %v210
  %v1172 = vunpack.c.l.b16 %v211
  %v1173 = vunpack.c.h.b16 %v211
  %v1174 = vunpack.c.l.b16 %v212
  %v1175 = vunpack.c.h.b16 %v212
  %v1176 = vunpack.c.l.b16 %v213
  %v1177 = vunpack.c.h.b16 %v213
  %v1178 = vunpack.c.l.b16 %v214
  %v1179 = vunpack.c.h.b16 %v214
  %v1180 = vunpack.c.l.b16 %v215
  %v1181 = vunpack.c.h.b16 %v215
  %v1182 = vunpack.c.l.b16 %v216
  %v1183 = vunpack.c.h.b16 %v216
  %v1184 = vunpack.c.l.b16 %v217
  %v1185 = vunpack.c.h.b16 %v217
  %v1186 = vunpack.c.l.b16 %v218
  %v1187 = vunpack.c.h.b16 %v218
  %v1188 = vunpack.c.l.b16 %v219
  %v1189 = vunpack.c.h.b16 %v219
  %v1190 = vunpack.c.l.b16 %v220
  %v1191 = vunpack.c.h.b16 %v220
  %v1192 = vunpack.c.l.b16 %v221
  %v1193 = vunpack.c.h.b16 %v221
  %v1194 = vunpack.c.l.b16 %v222
  %v1195 = vunpack.c.h.b16 %v222
  %v1196 = vunpack.c.l.b16 %v223
  %v1197 = vunpack.c.h.b16 %v223
  %v1198 = vunpack.c.l.b16 %v224
  %v1199 = vunpack.c.h.b16 %v224
  %v1200 = vunpack.c.l.b16 %v225
  %v1201 = vunpack.c.h.b16 %v225
  %v1202 = vunpack.c.l.b16 %v226
  %v1203 = vunpack.c.h.b16 %v226
  %v1204 = vunpack.c.l.b16 %v227
  %v1205 = vunpack.c.h.b16 %v227
  %v1206 = vunpack.c.l.b16 %v228
  %v1207 = vunpack.c.h.b16 %v228
  %v1208 = vunpack.c.l.b16 %v229
  %v1209 = vunpack.c.h.b16 %v229
  %v1210 = vunpack.c.l.b16 %v230
  %v1211 = vunpack.c.h.b16 %v230
  %v1212 = vunpack.c.l.b16 %v231
  %v1213 = vunpack.c.h.b16 %v231
  %v1214 = vunpack.c.l.b16 %v232
  %v1215 = vunpack.c.h.b16 %v232
  %v1216 = vunpack.c.l.b16 %v233
  %v1217 = vunpack.c.h.b16 %v233
  %v1218 = vunpack.c.l.b16 %v234
  %v1219 = vunpack.c.h.b16 %v234
  %v1220 = vunpack.c.l.b16 %v235
  %v1221 = vunpack.c.h.b16 %v235
  %v1222 = vunpack.c.l.b16 %v236
  %v1223 = vunpack.c.h.b16 %v236
  %v1224 = vunpack.c.l.b16 %v237
  %v1225 = vunpack.c.h.b16 %v237
  %v1226 = vunpack.c.l.b16 %v238
  %v1227 = vunpack.c.h.b16 %v238
  %v1228 = vunpack.c.l.b16 %v239
  %v1229 = vunpack.c.h.b16 %v239
  %v1230 = vunpack.c.l.b16 %v240
  %v1231 = vunpack.c.h.b16 %v240
  %v1232 = vunpack.c.l.b16 %v241
  %v1233 = vunpack.c.h.b16 %v241
  %v1234 = vunpack.c.l.b16 %v242
  %v1235 = vunpack.c.h.b16 %v242
  %v1236 = vunpack.c.l.b16 %v243
  %v1237 = vunpack.c.h.b16 %v243
  %v1238 = vunpack.c.l.b16 %v244
  %v1239 = vunpack.c.h.b16 %v244
  %v1240 = vunpack.c.l.b16 %v245
  %v1241 = vunpack.c.h.b16 %v245
  %v1242 = vunpack.c.l.b16 %v246
  %v1243 = vunpack.c.h.b16 %v246
  %v1244 = vunpack.c.l.b16 %v247
  %v1245 = vunpack.c.h.b16 %v247
  %v1246 = vunpack.c.l.b16 %v248
  %v1247 = vunpack.c.h.b16 %v248
  %v1248 = vunpack.c.l.b16 %v249
  %v1249 = vunpack.c.h.b16 %v249
  %v1250 = vunpack.c.l.b16 %v250
  %v1251 = vunpack.c.h.b16 %v250
  %v1252 = vunpack.c.l.b16 %v251
  %v1253 = vunpack.c.h.b16 %v251
  %v1254 = vunpack.c.l.b16 %v252
  %v1255 = vunpack.c.h.b16 %v252
  %v1256 = vunpack.c.l.b16 %v253
  %v1257 = vunpack.c.h.b16 %v253
  %v1258 = vunpack.c.l.b16 %v254
  %v1259 = vunpack.c.h.b16 %v254
  %v1260 = vunpack.c.l.b16 %v255
  %v1261 = vunpack.c.h.b16 %v255
  %v1262 = vunpack.c.l.b16 %v256
  %v1263 = vunpack.c.h.b16 %v256
  %v1264 = vunpack.c.l.b16 %v257
  %v1265 = vunpack.c.h.b16 %v257
  %v1266 = vunpack.c.l.b16 %v258
  %v1267 = vunpack.c.h.b16 %v258
  %v1268 = vunpack.c.l.b16 %v259
  %v1269 = vunpack.c.h.b16 %v259
  %v1270 = vunpack.c.l.b16 %v260
  %v1271 = vunpack.c.h.b16 %v260
  %v1272 = vunpack.c.l.b16 %v261
  %v1273 = vunpack.c.h.b16 %v261
  %v1274 = vunpack.c.l.b16 %v262
  %v1275 = vunpack.c.h.b16 %v262
  %v1276 = vunpack.c.l.b16 %v263
  %v1277 = vunpack.c.h.b16 %v263
  %v1278 = vunpack.c.l.b16 %v264
  %v1279 = vunpack.c.h.b16 %v264
  %v1280 = vunpack.c.l.b16 %v265
  %v1281 = vunpack.c.h.b16 %v265
  %v1282 = vunpack.c.l.b16 %v266
  %v1283 = vunpack.c.h.b16 %v266
  %v1284 = vunpack.c.l.b16 %v267
  %v1285 = vunpack.c.h.b16 %v267
  %v1286 = vunpack.c.l.b16 %v268
  %v1287 = vunpack.c.h.b16 %v268
  %v1288 = vunpack.c.l.b16 %v269
  %v1289 = vunpack.c.h.b16 %v269
  %v1290 = vunpack.c.l.b16 %v270
  %v1291 = vunpack.c.h.b16 %v270
  %v1292 = vunpack.c.l.b16 %v271
  %v1293 = vunpack.c.h.b16 %v271
  %v1294 = vunpack.c.l.b16 %v272
  %v1295 = vunpack.c.h.b16 %v272
  %v1296 = vunpack.c.l.b16 %v273
  %v1297 = vunpack.c.h.b16 %v273
  %v1298 = vunpack.c.l.b16 %v274
  %v1299 = vunpack.c.h.b16 %v274
  %v1300 = vunpack.c.l.b16 %v275
  %v1301 = vunpack.c.h.b16 %v275
  %v1302 = vunpack.c.l.b16 %v276
  %v1303 = vunpack.c.h.b16 %v276
  %v1304 = vunpack.c.l.b16 %v277
  %v1305 = vunpack.c.h.b16 %v277
  %v1306 = vunpack.c.l.b16 %v278
  %v1307 = vunpack.c.h.b16 %v278
  %v1308 = vunpack.c.l.b16 %v279
  %v1309 = vunpack.c.h.b16 %v279
  %v1310 = vunpack.c.l.b16 %v280
  %v1311 = vunpack.c.h.b16 %v280
  %v1312 = vunpack.c.l.b16 %v281
  %v1313 = vunpack.c.h.b16 %v281
  %v1314 = vunpack.c.l.b16 %v282
  %v1315 = vunpack.c.h.b16 %v282
  %v1316 = vunpack.c.l.b16 %v283
  %v1317 = vunpack.c.h.b16 %v283
  %v1318 = vunpack.c.l.b16 %v284
  %v1319 = vunpack.c.h.b16 %v284
  %v1320 = vunpack.c.l.b16 %v285
  %v1321 = vunpack.c.h.b16 %v285
  %v1322 = vunpack.c.l.b16 %v286
  %v1323 = vunpack.c.h.b16 %v286
  %v1324 = vunpack.c.l.b16 %v287
  %v1325 = vunpack.c.h.b16 %v287
  %v1326 = vunpack.c.l.b16 %v288
  %v1327 = vunpack.c.h.b16 %v288
  %v1328 = vunpack.c.l.b16 %v289
  %v1329 = vunpack.c.h.b16 %v289
  %v1330 = vunpack.c.l.b16 %v290
  %v1331 = vunpack.c.h.b16 %v290
  %v1332 = vunpack.c.l.b16 %v291
  %v1333 = vunpack.c.h.b16 %v291
  %v1334 = vunpack.c.l.b16 %v292
  %v1335 = vunpack.c.h.b16 %v292
  %v1336 = vunpack.c.l.b16 %v293
  %v1337 = vunpack.c.h.b16 %v293
  %v1338 = vunpack.c.l.b16 %v294
  %v1339 = vunpack.c.h.b16 %v294
  %v1340 = vunpack.c.l.b16 %v295
  %v1341 = vunpack.c.h.b16 %v295
  %v1342 = vunpack.c.l.b16 %v296
  %v1343 = vunpack.c.h.b16 %v296
  %v1344 = vunpack.c.l.b16 %v297
  %v1345 = vunpack.c.h.b16 %v297
  %v1346 = vunpack.c.l.b16 %v298
  %v1347 = vunpack.c.h.b16 %v298
  %v1348 = vunpack.c.l.b16 %v299
  %v1349 = vunpack.c.h.b16 %v299
  %v1350 = vunpack.c.l.b16 %v300
  %v1351 = vunpack.c.h.b16 %v300
  %v1352 = vunpack.c.l.b16 %v301
  %v1353 = vunpack.c.h.b16 %v301
  %v1354 = vunpack.c.l.b16 %v302
  %v1355 = vunpack.c.h.b16 %v302
  %v1356 = vunpack.c.l.b16 %v303
  %v1357 = vunpack.c.h.b16 %v303
  %v1358 = vunpack.c.l.b16 %v304
  %v1359 = vunpack.c.h.b16 %v304
  %v1360 = vunpack.c.l.b16 %v305
  %v1361 = vunpack.c.h.b16 %v305
  %v1362 = vunpack.c.l.b16 %v306
  %v1363 = vunpack.c.h.b16 %v306
  %v1364 = vunpack.c.l.b16 %v307
  %v1365 = vunpack.c.h.b16 %v307
  %v1366 = vunpack.c.l.b16 %v308
  %v1367 = vunpack.c.h.b16 %v308
  %v1368 = vunpack.c.l.b16 %v309
  %v1369 = vunpack.c.h.b16 %v309
  %v1370 = vunpack.c.l.b16 %v310
  %v1371 = vunpack.c.h.b16 %v310
  %v1372 = vunpack.c.l.b16 %v311
  %v1373 = vunpack.c.h.b16 %v311
  %v1374 = vunpack.c.l.b16 %v312
  %v1375 = vunpack.c.h.b16 %v312
  %v1376 = vunpack.c.l.b16 %v313
  %v1377 = vunpack.c.h.b16 %v313
  %v1378 = vunpack.c.l.b16 %v314
  %v1379 = vunpack.c.h.b16 %v314
  %v1380 = vunpack.c.l.b16 %v315
  %v1381 = vunpack.c.h.b16 %v315
  %v1382 = vunpack.c.l.b16 %v316
  %v1383 = vunpack.c.h.b16 %v316
  %v1384 = vunpack.c.l.b16 %v317
  %v1385 = vunpack.c.h.b16 %v317
  %v1386 = vunpack.c.l.b16 %v318
  %v1387 = vunpack.c.h.b16 %v318
  %v1388 = vunpack.c.l.b16 %v319
  %v1389 = vunpack.c.h.b16 %v319
  %v1390 = vunpack.c.l.b16 %v320
  %v1391 = vunpack.c.h.b16 %v320
  %v1392 = vunpack.c.l.b16 %v321
  %v1393 = vunpack.c.h.b16 %v321
  %v1394 = vunpack.c.l.b16 %v322
  %v1395 = vunpack.c.h.b16 %v322
  %v1396 = vunpack.c.l.b16 %v323
  %v1397 = vunpack.c.h.b16 %v323
  %v1398 = vunpack.c.l.b16 %v324
  %v1399 = vunpack.c.h.b16 %v324
  %v1400 = vunpack.c.l.b16 %v325
  %v1401 = vunpack.c.h.b16 %v325
  %v1402 = vpack.c.b16 %v892, %v890
  %v1403 = vpack.c.b16 %v893, %v891
  %v1404 = vpack.c.b16 %v896, %v894
  %v1405 = vpack.c.b16 %v897, %v895
  %v1406 = vpack.c.b16 %v900, %v898
  %v1407 = vpack.c.b16 %v901, %v899
  %v1408 = vpack.c.b16 %v904, %v902
  %v1409 = vpack.c.b16 %v905, %v903
  %v1410 = vpack.c.b16 %v908, %v906
  %v1411 = vpack.c.b16 %v909, %v907
  %v1412 = vpack.c.b16 %v912, %v910
  %v1413 = vpack.c.b16 %v913, %v911
  %v1414 = vpack.c.b16 %v916, %v914
  %v1415 = vpack.c.b16 %v917, %v915
  %v1416 = vpack.c.b16 %v920, %v918
  %v1417 = vpack.c.b16 %v921, %v919
  %v1418 = vpack.c.b16 %v924, %v922
  %v1419 = vpack.c.b16 %v925, %v923
  %v1420 = vpack.c.b16 %v928, %v926
  %v1421 = vpack.c.b16 %v929, %v927
  %v1422 = vpack.c.b16 %v932, %v930
  %v1423 = vpack.c.b16 %v933, %v931
  %v1424 = vpack.c.b16 %v936, %v934
  %v1425 = vpack.c.b16 %v937, %v935
  %v1426 = vpack.c.b16 %v940, %v938
  %v1427 = vpack.c.b16 %v941, %v939
  %v1428 = vpack.c.b16 %v944, %v942
  %v1429 = vpack.c.b16 %v945, %v943
  %v1430 = vpack.c.b16 %v948, %v946
  %v1431 = vpack.c.b16 %v949, %v947
  %v1432 = vpack.c.b16 %v952, %v950
  %v1433 = vpack.c.b16 %v953, %v951
  %v1434 = vpack.c.b16 %v956, %v954
  %v1435 = vpack.c.b16 %v957, %v955
  %v1436 = vpack.c.b16 %v960, %v958
  %v1437 = vpack.c.b16 %v961, %v959
  %v1438 = vpack.c.b16 %v964, %v962
  %v1439 = vpack.c.b16 %v965, %v963
  %v1440 = vpack.c.b16 %v968, %v966
  %v1441 = vpack.c.b16 %v969, %v967
  %v1442 = vpack.c.b16 %v972, %v970
  %v1443 = vpack.c.b16 %v973, %v971
  %v1444 = vpack.c.b16 %v976, %v974
  %v1445 = vpack.c.b16 %v977, %v975
  %v1446 = vpack.c.b16 %v980, %v978
  %v1447 = vpack.c.b16 %v981, %v979
  %v1448 = vpack.c.b16 %v984, %v982
  %v1449 = vpack.c.b16 %v985, %v983
  %v1450 = vpack.c.b16 %v988, %v986
  %v1451 = vpack.c.b16 %v989, %v987
  %v1452 = vpack.c.b16 %v992, %v990
  %v1453 = vpack.c.b16 %v993, %v991
  %v1454 = vpack.c.b16 %v996, %v994
  %v1455 = vpack.c.b16 %v997, %v995
  %v1456 = vpack.c.b16 %v1000, %v998
  %v1457 = vpack.c.b16 %v1001, %v999
  %v1458 = vpack.c.b16 %v1004, %v1002
  %v1459 = vpack.c.b16 %v1005, %v1003
  %v1460 = vpack.c.b16 %v1008, %v1006
  %v1461 = vpack.c.b16 %v1009, %v1007
  %v1462 = vpack.c.b16 %v1012, %v1010
  %v1463 = vpack.c.b16 %v1013, %v1011
  %v1464 = vpack.c.b16 %v1016, %v1014
  %v1465 = vpack.c.b16 %v1017, %v1015
  %v1466 = vpack.c.b16 %v1020, %v1018
  %v1467 = vpack.c.b16 %v1021, %v1019
  %v1468 = vpack.c.b16 %v1024, %v1022
  %v1469 = vpack.c.b16 %v1025, %v1023
  %v1470 = vpack.c.b16 %v1028, %v1026
  %v1471 = vpack.c.b16 %v1029, %v1027
  %v1472 = vpack.c.b16 %v1032, %v1030
  %v1473 = vpack.c.b16 %v1033, %v1031
  %v1474 = vpack.c.b16 %v1036, %v1034
  %v1475 = vpack.c.b16 %v1037, %v1035
  %v1476 = vpack.c.b16 %v1040, %v1038
  %v1477 = vpack.c.b16 %v1041, %v1039
  %v1478 = vpack.c.b16 %v1044, %v1042
  %v1479 = vpack.c.b16 %v1045, %v1043
  %v1480 = vpack.c.b16 %v1048, %v1046
  %v1481 = vpack.c.b16 %v1049, %v1047
  %v1482 = vpack.c.b16 %v1052, %v1050
  %v1483 = vpack.c.b16 %v1053, %v1051
  %v1484 = vpack.c.b16 %v1056, %v1054
  %v1485 = vpack.c.b16 %v1057, %v1055
  %v1486 = vpack.c.b16 %v1060, %v1058
  %v1487 = vpack.c.b16 %v1061, %v1059
  %v1488 = vpack.c.b16 %v1064, %v1062
  %v1489 = vpack.c.b16 %v1065, %v1063
  %v1490 = vpack.c.b16 %v1068, %v1066
  %v1491 = vpack.c.b16 %v1069, %v1067
  %v1492 = vpack.c.b16 %v1072, %v1070
  %v1493 = vpack.c.b16 %v1073, %v1071
  %v1494 = vpack.c.b16 %v1076, %v1074
  %v1495 = vpack.c.b16 %v1077, %v1075
  %v1496 = vpack.c.b16 %v1080, %v1078
  %v1497 = vpack.c.b16 %v1081, %v1079
  %v1498 = vpack.c.b16 %v1084, %v1082
  %v1499 = vpack.c.b16 %v1085, %v1083
  %v1500 = vpack.c.b16 %v1088, %v1086
  %v1501 = vpack.c.b16 %v1089, %v1087
  %v1502 = vpack.c.b16 %v1092, %v1090
  %v1503 = vpack.c.b16 %v1093, %v1091
  %v1504 = vpack.c.b16 %v1096, %v1094
  %v1505 = vpack.c.b16 %v1097, %v1095
  %v1506 = vpack.c.b16 %v1100, %v1098
  %v1507 = vpack.c.b16 %v1101, %v1099
  %v1508 = vpack.c.b16 %v1104, %v1102
  %v1509 = vpack.c.b16 %v1105, %v1103
  %v1510 = vpack.c.b16 %v1108, %v1106
  %v1511 = vpack.c.b16 %v1109, %v1107
  %v1512 = vpack.c.b16 %v1112, %v1110
  %v1513 = vpack.c.b16 %v1113, %v1111
  %v1514 = vpack.c.b16 %v1116, %v1114
  %v1515 = vpack.c.b16 %v1117, %v1115
  %v1516 = vpack.c.b16 %v1120, %v1118
  %v1517 = vpack.c.b16 %v1121, %v1119
  %v1518 = vpack.c.b16 %v1124, %v1122
  %v1519 = vpack.c.b16 %v1125, %v1123
  %v1520 = vpack.c.b16 %v1128, %v1126
  %v1521 = vpack.c.b16 %v1129, %v1127
  %v1522 = vpack.c.b16 %v1132, %v1130
  %v1523 = vpack.c.b16 %v1133, %v1131
  %v1524 = vpack.c.b16 %v1136, %v1134
  %v1525 = vpack.c.b16 %v1137, %v1135
  %v1526 = vpack.c.b16 %v1140, %v1138
  %v1527 = vpack.c.b16 %v1141, %v1139
  %v1528 = vpack.c.b16 %v1144, %v1142
  %v1529 = vpack.c.b16 %v1145, %v1143
  %v1530 = vpack.c.b16 %v1148, %v1146
  %v1531 = vpack.c.b16 %v1149, %v1147
  %v1532 = vpack.c.b16 %v1152, %v1150
  %v1533 = vpack.c.b16 %v1153, %v1151
  %v1534 = vpack.c.b16 %v1156, %v1154
  %v1535 = vpack.c.b16 %v1157, %v1155
  %v1536 = vpack.c.b16 %v1160, %v1158
  %v1537 = vpack.c.b16 %v1161, %v1159
  %v1538 = vpack.c.b16 %v1164, %v1162
  %v1539 = vpack.c.b16 %v1165, %v1163
  %v1540 = vpack.c.b16 %v1168, %v1166
  %v1541 = vpack.c.b16 %v1169, %v1167
  %v1542 = vpack.c.b16 %v1172, %v1170
  %v1543 = vpack.c.b16 %v1173, %v1171
  %v1544 = vpack.c.b16 %v1176, %v1174
  %v1545 = vpack.c.b16 %v1177, %v1175
  %v1546 = vpack.c.b16 %v1180, %v1178
  %v1547 = vpack.c.b16 %v1181, %v1179
  %v1548 = vpack.c.b16 %v1184, %v1182
  %v1549 = vpack.c.b16 %v1185, %v1183
  %v1550 = vpack.c.b16 %v1188, %v1186
  %v1551 = vpack.c.b16 %v1189, %v1187
  %v1552 = vpack.c.b16 %v1192, %v1190
  %v1553 = vpack.c.b16 %v1193, %v1191
  %v1554 = vpack.c.b16 %v1196, %v1194
  %v1555 = vpack.c.b16 %v1197, %v1195
  %v1556 = vpack.c.b16 %v1200, %v1198
  %v1557 = vpack.c.b16 %v1201, %v1199
  %v1558 = vpack.c.b16 %v1204, %v1202
  %v1559 = vpack.c.b16 %v1205, %v1203
  %v1560 = vpack.c.b16 %v1208, %v1206
  %v1561 = vpack.c.b16 %v1209, %v1207
  %v1562 = vpack.c.b16 %v1212, %v1210
  %v1563 = vpack.c.b16 %v1213, %v1211
  %v1564 = vpack.c.b16 %v1216, %v1214
  %v1565 = vpack.c.b16 %v1217, %v1215
  %v1566 = vpack.c.b16 %v1220, %v1218
  %v1567 = vpack.c.b16 %v1221, %v1219
  %v1568 = vpack.c.b16 %v1224, %v1222
  %v1569 = vpack.c.b16 %v1225, %v1223
  %v1570 = vpack.c.b16 %v1228, %v1226
  %v1571 = vpack.c.b16 %v1229, %v1227
  %v1572 = vpack.c.b16 %v1232, %v1230
  %v1573 = vpack.c.b16 %v1233, %v1231
  %v1574 = vpack.c.b16 %v1236, %v1234
  %v1575 = vpack.c.b16 %v1237, %v1235
  %v1576 = vpack.c.b16 %v1240, %v1238
  %v1577 = vpack.c.b16 %v1241, %v1239
  %v1578 = vpack.c.b16 %v1244, %v1242
  %v1579 = vpack.c.b16 %v1245, %v1243
  %v1580 = vpack.c.b16 %v1248, %v1246
  %v1581 = vpack.c.b16 %v1249, %v1247
  %v1582 = vpack.c.b16 %v1252, %v1250
  %v1583 = vpack.c.b16 %v1253, %v1251
  %v1584 = vpack.c.b16 %v1256, %v1254
  %v1585 = vpack.c.b16 %v1257, %v1255
  %v1586 = vpack.c.b16 %v1260, %v1258
  %v1587 = vpack.c.b16 %v1261, %v1259
  %v1588 = vpack.c.b16 %v1264, %v1262
  %v1589 = vpack.c.b16 %v1265, %v1263
  %v1590 = vpack.c.b16 %v1268, %v1266
  %v1591 = vpack.c.b16 %v1269, %v1267
  %v1592 = vpack.c.b16 %v1272, %v1270
  %v1593 = vpack.c.b16 %v1273, %v1271
  %v1594 = vpack.c.b16 %v1276, %v1274
  %v1595 = vpack.c.b16 %v1277, %v1275
  %v1596 = vpack.c.b16 %v1280, %v1278
  %v1597 = vpack.c.b16 %v1281, %v1279
  %v1598 = vpack.c.b16 %v1284, %v1282
  %v1599 = vpack.c.b16 %v1285, %v1283
  %v1600 = vpack.c.b16 %v1288, %v1286
  %v1601 = vpack.c.b16 %v1289, %v1287
  %v1602 = vpack.c.b16 %v1292, %v1290
  %v1603 = vpack.c.b16 %v1293, %v1291
  %v1604 = vpack.c.b16 %v1296, %v1294
  %v1605 = vpack.c.b16 %v1297, %v1295
  %v1606 = vpack.c.b16 %v1300, %v1298
  %v1607 = vpack.c.b16 %v1301, %v1299
  %v1608 = vpack.c.b16 %v1304, %v1302
  %v1609 = vpack.c.b16 %v1305, %v1303
  %v1610 = vpack.c.b16 %v1308, %v1306
  %v1611 = vpack.c.b16 %v1309, %v1307
  %v1612 = vpack.c.b16 %v1312, %v1310
  %v1613 = vpack.c.b16 %v1313, %v1311
  %v1614 = vpack.c.b16 %v1316, %v1314
  %v1615 = vpack.c.b16 %v1317, %v1315
  %v1616 = vpack.c.b16 %v1320, %v1318
  %v1617 = vpack.c.b16 %v1321, %v1319
  %v1618 = vpack.c.b16 %v1324, %v1322
  %v1619 = vpack.c.b16 %v1325, %v1323
  %v1620 = vpack.c.b16 %v1328, %v1326
  %v1621 = vpack.c.b16 %v1329, %v1327
  %v1622 = vpack.c.b16 %v1332, %v1330
  %v1623 = vpack.c.b16 %v1333, %v1331
  %v1624 = vpack.c.b16 %v1336, %v1334
  %v1625 = vpack.c.b16 %v1337, %v1335
  %v1626 = vpack.c.b16 %v1340, %v1338
  %v1627 = vpack.c.b16 %v1341, %v1339
  %v1628 = vpack.c.b16 %v1344, %v1342
  %v1629 = vpack.c.b16 %v1345, %v1343
  %v1630 = vpack.c.b16 %v1348, %v1346
  %v1631 = vpack.c.b16 %v1349, %v1347
  %v1632 = vpack.c.b16 %v1352, %v1350
  %v1633 = vpack.c.b16 %v1353, %v1351
  %v1634 = vpack.c.b16 %v1356, %v1354
  %v1635 = vpack.c.b16 %v1357, %v1355
  %v1636 = vpack.c.b16 %v1360, %v1358
  %v1637 = vpack.c.b16 %v1361, %v1359
  %v1638 = vpack.c.b16 %v1364, %v1362
  %v1639 = vpack.c.b16 %v1365, %v1363
  %v1640 = vpack.c.b16 %v1368, %v1366
  %v1641 = vpack.c.b16 %v1369, %v1367
  %v1642 = vpack.c.b16 %v1372, %v1370
  %v1643 = vpack.c.b16 %v1373, %v1371
  %v1644 = vpack.c.b16 %v1376, %v1374
  %v1645 = vpack.c.b16 %v1377, %v1375
  %v1646 = vpack.c.b16 %v1380, %v1378
  %v1647 = vpack.c.b16 %v1381, %v1379
  %v1648 = vpack.c.b16 %v1384, %v1382
  %v1649 = vpack.c.b16 %v1385, %v1383
  %v1650 = vpack.c.b16 %v1388, %v1386
  %v1651 = vpack.c.b16 %v1389, %v1387
  %v1652 = vpack.c.b16 %v1392, %v1390
  %v1653 = vpack.c.b16 %v1393, %v1391
  %v1654 = vpack.c.b16 %v1396, %v1394
  %v1655 = vpack.c.b16 %v1397, %v1395
  %v1656 = vpack.c.b16 %v1400, %v1398
  %v1657 = vpack.c.b16 %v1401, %v1399
  %1914 = vmatprep.subr.bf16.mxu0 %v1417
  %1915 = vmatpush1.bf16.msra.mxu0 %v1416
  %1916 = vmatprep.subr.bf16.mxu0 %v1415
  %1917 = vmatpush1.bf16.msra.mxu0 %v1414
  %1918 = vmatprep.subr.bf16.mxu0 %v1413
  %1919 = vmatpush1.bf16.msra.mxu0 %v1412
  %1920 = vmatprep.subr.bf16.mxu0 %v1411
  %1921 = vmatpush1.bf16.msra.mxu0 %v1410
  %1922 = vmatprep.subr.bf16.mxu0 %v1409
  %1923 = vmatpush1.bf16.msra.mxu0 %v1408
  %1924 = vmatprep.subr.bf16.mxu0 %v1407
  %1925 = vmatpush1.bf16.msra.mxu0 %v1406
  %1926 = vmatprep.subr.bf16.mxu0 %v1405
  %1927 = vmatpush1.bf16.msra.mxu0 %v1404
  %1928 = vmatprep.subr.bf16.mxu0 %v1403
  %1929 = vmatpush1.bf16.msra.mxu0 %v1402
  %1930 = vmatprep.subr.bf16.mxu0 %v1433
  %1931 = vmatpush2.bf16.msra.mxu0 %v1432
  %1932 = vmatprep.subr.bf16.mxu0 %v1431
  %1933 = vmatpush2.bf16.msra.mxu0 %v1430
  %1934 = vmatprep.subr.bf16.mxu0 %v1429
  %1935 = vmatpush2.bf16.msra.mxu0 %v1428
  %1936 = vmatprep.subr.bf16.mxu0 %v1427
  %1937 = vmatpush2.bf16.msra.mxu0 %v1426
  %1938 = vmatprep.subr.bf16.mxu0 %v1425
  %1939 = vmatpush2.bf16.msra.mxu0 %v1424
  %1940 = vmatprep.subr.bf16.mxu0 %v1423
  %1941 = vmatpush2.bf16.msra.mxu0 %v1422
  %1942 = vmatprep.subr.bf16.mxu0 %v1421
  %1943 = vmatpush2.bf16.msra.mxu0 %v1420
  %1944 = vmatprep.subr.bf16.mxu0 %v1419
  %1945 = vmatpush2.bf16.msra.mxu0 %v1418
  %1946 = vmatprep.mubr.bf16.mxu0 %v507
  %1947 = vmatmul.mubr.bf16.gmra.mxu0 %v506
  %v1948 = vpop.f32.mrf.mxu0
  %v1949 = vadd.f32 %v331, %v1948
  %v1950 = vpop.f32.mrf.mxu0
  %v1951 = vadd.f32 %v335, %v1950
  %v1952 = vpop.f32.mrf.mxu0
  %v1953 = vadd.f32 %v331, %v1952
  %v1954 = vpop.f32.mrf.mxu0
  %v1955 = vadd.f32 %v335, %v1954
  %1956 = vmatprep.mubr.bf16.mxu0 %v523
  %1957 = vmatmul.mubr.bf16.gmra.mxu0 %v522
  %v1958 = vpop.f32.mrf.mxu0
  %v1959 = vadd.f32 %v331, %v1958
  %v1960 = vpop.f32.mrf.mxu0
  %v1961 = vadd.f32 %v335, %v1960
  %v1962 = vpop.f32.mrf.mxu0
  %v1963 = vadd.f32 %v331, %v1962
  %v1964 = vpop.f32.mrf.mxu0
  %v1965 = vadd.f32 %v335, %v1964
  %1966 = vmatprep.mubr.bf16.mxu0 %v539
  %1967 = vmatmul.mubr.bf16.gmra.mxu0 %v538
  %v1968 = vpop.f32.mrf.mxu0
  %v1969 = vadd.f32 %v331, %v1968
  %v1970 = vpop.f32.mrf.mxu0
  %v1971 = vadd.f32 %v335, %v1970
  %v1972 = vpop.f32.mrf.mxu0
  %v1973 = vadd.f32 %v331, %v1972
  %v1974 = vpop.f32.mrf.mxu0
  %v1975 = vadd.f32 %v335, %v1974
  %1976 = vmatprep.mubr.bf16.mxu0 %v555
  %1977 = vmatmul.mubr.bf16.gmra.mxu0 %v554
  %v1978 = vpop.f32.mrf.mxu0
  %v1979 = vadd.f32 %v331, %v1978
  %v1980 = vpop.f32.mrf.mxu0
  %v1981 = vadd.f32 %v335, %v1980
  %v1982 = vpop.f32.mrf.mxu0
  %v1983 = vpop.f32.mrf.mxu0
  %1984 = vdwg.mxu0
  %1985 = vmatprep.subr.bf16.mxu0 %v1449
  %1986 = vmatpush1.bf16.msra.mxu0 %v1448
  %1987 = vmatprep.subr.bf16.mxu0 %v1447
  %1988 = vmatpush1.bf16.msra.mxu0 %v1446
  %1989 = vmatprep.subr.bf16.mxu0 %v1445
  %1990 = vmatpush1.bf16.msra.mxu0 %v1444
  %1991 = vmatprep.subr.bf16.mxu0 %v1443
  %1992 = vmatpush1.bf16.msra.mxu0 %v1442
  %1993 = vmatprep.subr.bf16.mxu0 %v1441
  %1994 = vmatpush1.bf16.msra.mxu0 %v1440
  %1995 = vmatprep.subr.bf16.mxu0 %v1439
  %1996 = vmatpush1.bf16.msra.mxu0 %v1438
  %1997 = vmatprep.subr.bf16.mxu0 %v1437
  %1998 = vmatpush1.bf16.msra.mxu0 %v1436
  %1999 = vmatprep.subr.bf16.mxu0 %v1435
  %2000 = vmatpush1.bf16.msra.mxu0 %v1434
  %2001 = vmatprep.subr.bf16.mxu0 %v1465
  %2002 = vmatpush2.bf16.msra.mxu0 %v1464
  %2003 = vmatprep.subr.bf16.mxu0 %v1463
  %2004 = vmatpush2.bf16.msra.mxu0 %v1462
  %2005 = vmatprep.subr.bf16.mxu0 %v1461
  %2006 = vmatpush2.bf16.msra.mxu0 %v1460
  %2007 = vmatprep.subr.bf16.mxu0 %v1459
  %2008 = vmatpush2.bf16.msra.mxu0 %v1458
  %2009 = vmatprep.subr.bf16.mxu0 %v1457
  %2010 = vmatpush2.bf16.msra.mxu0 %v1456
  %2011 = vmatprep.subr.bf16.mxu0 %v1455
  %2012 = vmatpush2.bf16.msra.mxu0 %v1454
  %2013 = vmatprep.subr.bf16.mxu0 %v1453
  %2014 = vmatpush2.bf16.msra.mxu0 %v1452
  %2015 = vmatprep.subr.bf16.mxu0 %v1451
  %2016 = vmatpush2.bf16.msra.mxu0 %v1450
  %2017 = vmatprep.mubr.bf16.mxu0 %v509
  %2018 = vmatmul.mubr.bf16.gmra.mxu0 %v508
  %v2019 = vpop.f32.mrf.mxu0
  %v2020 = vadd.f32 %v1949, %v2019
  %v2021 = vpop.f32.mrf.mxu0
  %v2022 = vadd.f32 %v1951, %v2021
  %v2023 = vpop.f32.mrf.mxu0
  %v2024 = vadd.f32 %v1953, %v2023
  %v2025 = vpop.f32.mrf.mxu0
  %v2026 = vadd.f32 %v1955, %v2025
  %2027 = vmatprep.mubr.bf16.mxu0 %v525
  %2028 = vmatmul.mubr.bf16.gmra.mxu0 %v524
  %v2029 = vpop.f32.mrf.mxu0
  %v2030 = vadd.f32 %v1959, %v2029
  %v2031 = vpop.f32.mrf.mxu0
  %v2032 = vadd.f32 %v1961, %v2031
  %v2033 = vpop.f32.mrf.mxu0
  %v2034 = vadd.f32 %v1963, %v2033
  %v2035 = vpop.f32.mrf.mxu0
  %v2036 = vadd.f32 %v1965, %v2035
  %2037 = vmatprep.mubr.bf16.mxu0 %v541
  %2038 = vmatmul.mubr.bf16.gmra.mxu0 %v540
  %v2039 = vpop.f32.mrf.mxu0
  %v2040 = vadd.f32 %v1969, %v2039
  %v2041 = vpop.f32.mrf.mxu0
  %v2042 = vadd.f32 %v1971, %v2041
  %v2043 = vpop.f32.mrf.mxu0
  %v2044 = vadd.f32 %v1973, %v2043
  %v2045 = vpop.f32.mrf.mxu0
  %v2046 = vadd.f32 %v1975, %v2045
  %2047 = vmatprep.mubr.bf16.mxu0 %v557
  %2048 = vmatmul.mubr.bf16.gmra.mxu0 %v556
  %v2049 = vpop.f32.mrf.mxu0
  %v2050 = vadd.f32 %v1979, %v2049
  %v2051 = vpop.f32.mrf.mxu0
  %v2052 = vadd.f32 %v1981, %v2051
  %v2053 = vpop.f32.mrf.mxu0
  %v2054 = vpop.f32.mrf.mxu0
  %2055 = vdwg.mxu0
  %2056 = vmatprep.subr.bf16.mxu0 %v1481
  %2057 = vmatpush1.bf16.msra.mxu0 %v1480
  %2058 = vmatprep.subr.bf16.mxu0 %v1479
  %2059 = vmatpush1.bf16.msra.mxu0 %v1478
  %2060 = vmatprep.subr.bf16.mxu0 %v1477
  %2061 = vmatpush1.bf16.msra.mxu0 %v1476
  %2062 = vmatprep.subr.bf16.mxu0 %v1475
  %2063 = vmatpush1.bf16.msra.mxu0 %v1474
  %2064 = vmatprep.subr.bf16.mxu0 %v1473
  %2065 = vmatpush1.bf16.msra.mxu0 %v1472
  %2066 = vmatprep.subr.bf16.mxu0 %v1471
  %2067 = vmatpush1.bf16.msra.mxu0 %v1470
  %2068 = vmatprep.subr.bf16.mxu0 %v1469
  %2069 = vmatpush1.bf16.msra.mxu0 %v1468
  %2070 = vmatprep.subr.bf16.mxu0 %v1467
  %2071 = vmatpush1.bf16.msra.mxu0 %v1466
  %2072 = vmatprep.subr.bf16.mxu0 %v1497
  %2073 = vmatpush2.bf16.msra.mxu0 %v1496
  %2074 = vmatprep.subr.bf16.mxu0 %v1495
  %2075 = vmatpush2.bf16.msra.mxu0 %v1494
  %2076 = vmatprep.subr.bf16.mxu0 %v1493
  %2077 = vmatpush2.bf16.msra.mxu0 %v1492
  %2078 = vmatprep.subr.bf16.mxu0 %v1491
  %2079 = vmatpush2.bf16.msra.mxu0 %v1490
  %2080 = vmatprep.subr.bf16.mxu0 %v1489
  %2081 = vmatpush2.bf16.msra.mxu0 %v1488
  %2082 = vmatprep.subr.bf16.mxu0 %v1487
  %2083 = vmatpush2.bf16.msra.mxu0 %v1486
  %2084 = vmatprep.subr.bf16.mxu0 %v1485
  %2085 = vmatpush2.bf16.msra.mxu0 %v1484
  %2086 = vmatprep.subr.bf16.mxu0 %v1483
  %2087 = vmatpush2.bf16.msra.mxu0 %v1482
  %2088 = vmatprep.mubr.bf16.mxu0 %v511
  %2089 = vmatmul.mubr.bf16.gmra.mxu0 %v510
  %v2090 = vpop.f32.mrf.mxu0
  %v2091 = vadd.f32 %v2020, %v2090
  %v2092 = vpop.f32.mrf.mxu0
  %v2093 = vadd.f32 %v2022, %v2092
  %v2094 = vpop.f32.mrf.mxu0
  %v2095 = vadd.f32 %v2024, %v2094
  %v2096 = vpop.f32.mrf.mxu0
  %v2097 = vadd.f32 %v2026, %v2096
  %2098 = vmatprep.mubr.bf16.mxu0 %v527
  %2099 = vmatmul.mubr.bf16.gmra.mxu0 %v526
  %v2100 = vpop.f32.mrf.mxu0
  %v2101 = vadd.f32 %v2030, %v2100
  %v2102 = vpop.f32.mrf.mxu0
  %v2103 = vadd.f32 %v2032, %v2102
  %v2104 = vpop.f32.mrf.mxu0
  %v2105 = vadd.f32 %v2034, %v2104
  %v2106 = vpop.f32.mrf.mxu0
  %v2107 = vadd.f32 %v2036, %v2106
  %2108 = vmatprep.mubr.bf16.mxu0 %v543
  %2109 = vmatmul.mubr.bf16.gmra.mxu0 %v542
  %v2110 = vpop.f32.mrf.mxu0
  %v2111 = vadd.f32 %v2040, %v2110
  %v2112 = vpop.f32.mrf.mxu0
  %v2113 = vadd.f32 %v2042, %v2112
  %v2114 = vpop.f32.mrf.mxu0
  %v2115 = vadd.f32 %v2044, %v2114
  %v2116 = vpop.f32.mrf.mxu0
  %v2117 = vadd.f32 %v2046, %v2116
  %2118 = vmatprep.mubr.bf16.mxu0 %v559
  %2119 = vmatmul.mubr.bf16.gmra.mxu0 %v558
  %v2120 = vpop.f32.mrf.mxu0
  %v2121 = vadd.f32 %v2050, %v2120
  %v2122 = vpop.f32.mrf.mxu0
  %v2123 = vadd.f32 %v2052, %v2122
  %v2124 = vpop.f32.mrf.mxu0
  %v2125 = vpop.f32.mrf.mxu0
  %2126 = vdwg.mxu0
  %2127 = vmatprep.subr.bf16.mxu0 %v1513
  %2128 = vmatpush1.bf16.msra.mxu0 %v1512
  %2129 = vmatprep.subr.bf16.mxu0 %v1511
  %2130 = vmatpush1.bf16.msra.mxu0 %v1510
  %2131 = vmatprep.subr.bf16.mxu0 %v1509
  %2132 = vmatpush1.bf16.msra.mxu0 %v1508
  %2133 = vmatprep.subr.bf16.mxu0 %v1507
  %2134 = vmatpush1.bf16.msra.mxu0 %v1506
  %2135 = vmatprep.subr.bf16.mxu0 %v1505
  %2136 = vmatpush1.bf16.msra.mxu0 %v1504
  %2137 = vmatprep.subr.bf16.mxu0 %v1503
  %2138 = vmatpush1.bf16.msra.mxu0 %v1502
  %2139 = vmatprep.subr.bf16.mxu0 %v1501
  %2140 = vmatpush1.bf16.msra.mxu0 %v1500
  %2141 = vmatprep.subr.bf16.mxu0 %v1499
  %2142 = vmatpush1.bf16.msra.mxu0 %v1498
  %2143 = vmatprep.subr.bf16.mxu0 %v1529
  %2144 = vmatpush2.bf16.msra.mxu0 %v1528
  %2145 = vmatprep.subr.bf16.mxu0 %v1527
  %2146 = vmatpush2.bf16.msra.mxu0 %v1526
  %2147 = vmatprep.subr.bf16.mxu0 %v1525
  %2148 = vmatpush2.bf16.msra.mxu0 %v1524
  %2149 = vmatprep.subr.bf16.mxu0 %v1523
  %2150 = vmatpush2.bf16.msra.mxu0 %v1522
  %2151 = vmatprep.subr.bf16.mxu0 %v1521
  %2152 = vmatpush2.bf16.msra.mxu0 %v1520
  %2153 = vmatprep.subr.bf16.mxu0 %v1519
  %2154 = vmatpush2.bf16.msra.mxu0 %v1518
  %2155 = vmatprep.subr.bf16.mxu0 %v1517
  %2156 = vmatpush2.bf16.msra.mxu0 %v1516
  %2157 = vmatprep.subr.bf16.mxu0 %v1515
  %2158 = vmatpush2.bf16.msra.mxu0 %v1514
  %2159 = vmatprep.mubr.bf16.mxu0 %v513
  %2160 = vmatmul.mubr.bf16.gmra.mxu0 %v512
  %v2161 = vpop.f32.mrf.mxu0
  %v2162 = vadd.f32 %v2091, %v2161
  %v2163 = vpop.f32.mrf.mxu0
  %v2164 = vadd.f32 %v2093, %v2163
  %v2165 = vpop.f32.mrf.mxu0
  %v2166 = vadd.f32 %v2095, %v2165
  %v2167 = vpop.f32.mrf.mxu0
  %v2168 = vadd.f32 %v2097, %v2167
  %2169 = vmatprep.mubr.bf16.mxu0 %v529
  %2170 = vmatmul.mubr.bf16.gmra.mxu0 %v528
  %v2171 = vpop.f32.mrf.mxu0
  %v2172 = vadd.f32 %v2101, %v2171
  %v2173 = vpop.f32.mrf.mxu0
  %v2174 = vadd.f32 %v2103, %v2173
  %v2175 = vpop.f32.mrf.mxu0
  %v2176 = vadd.f32 %v2105, %v2175
  %v2177 = vpop.f32.mrf.mxu0
  %v2178 = vadd.f32 %v2107, %v2177
  %2179 = vmatprep.mubr.bf16.mxu0 %v545
  %2180 = vmatmul.mubr.bf16.gmra.mxu0 %v544
  %v2181 = vpop.f32.mrf.mxu0
  %v2182 = vadd.f32 %v2111, %v2181
  %v2183 = vpop.f32.mrf.mxu0
  %v2184 = vadd.f32 %v2113, %v2183
  %v2185 = vpop.f32.mrf.mxu0
  %v2186 = vadd.f32 %v2115, %v2185
  %v2187 = vpop.f32.mrf.mxu0
  %v2188 = vadd.f32 %v2117, %v2187
  %2189 = vmatprep.mubr.bf16.mxu0 %v561
  %2190 = vmatmul.mubr.bf16.gmra.mxu0 %v560
  %v2191 = vpop.f32.mrf.mxu0
  %v2192 = vadd.f32 %v2121, %v2191
  %v2193 = vpop.f32.mrf.mxu0
  %v2194 = vadd.f32 %v2123, %v2193
  %v2195 = vpop.f32.mrf.mxu0
  %v2196 = vpop.f32.mrf.mxu0
  %2197 = vdwg.mxu0
  %2198 = vmatprep.subr.bf16.mxu0 %v1545
  %2199 = vmatpush1.bf16.msra.mxu0 %v1544
  %2200 = vmatprep.subr.bf16.mxu0 %v1543
  %2201 = vmatpush1.bf16.msra.mxu0 %v1542
  %2202 = vmatprep.subr.bf16.mxu0 %v1541
  %2203 = vmatpush1.bf16.msra.mxu0 %v1540
  %2204 = vmatprep.subr.bf16.mxu0 %v1539
  %2205 = vmatpush1.bf16.msra.mxu0 %v1538
  %2206 = vmatprep.subr.bf16.mxu0 %v1537
  %2207 = vmatpush1.bf16.msra.mxu0 %v1536
  %2208 = vmatprep.subr.bf16.mxu0 %v1535
  %2209 = vmatpush1.bf16.msra.mxu0 %v1534
  %2210 = vmatprep.subr.bf16.mxu0 %v1533
  %2211 = vmatpush1.bf16.msra.mxu0 %v1532
  %2212 = vmatprep.subr.bf16.mxu0 %v1531
  %2213 = vmatpush1.bf16.msra.mxu0 %v1530
  %2214 = vmatprep.subr.bf16.mxu0 %v1561
  %2215 = vmatpush2.bf16.msra.mxu0 %v1560
  %2216 = vmatprep.subr.bf16.mxu0 %v1559
  %2217 = vmatpush2.bf16.msra.mxu0 %v1558
  %2218 = vmatprep.subr.bf16.mxu0 %v1557
  %2219 = vmatpush2.bf16.msra.mxu0 %v1556
  %2220 = vmatprep.subr.bf16.mxu0 %v1555
  %2221 = vmatpush2.bf16.msra.mxu0 %v1554
  %2222 = vmatprep.subr.bf16.mxu0 %v1553
  %2223 = vmatpush2.bf16.msra.mxu0 %v1552
  %2224 = vmatprep.subr.bf16.mxu0 %v1551
  %2225 = vmatpush2.bf16.msra.mxu0 %v1550
  %2226 = vmatprep.subr.bf16.mxu0 %v1549
  %2227 = vmatpush2.bf16.msra.mxu0 %v1548
  %2228 = vmatprep.subr.bf16.mxu0 %v1547
  %2229 = vmatpush2.bf16.msra.mxu0 %v1546
  %2230 = vmatprep.mubr.bf16.mxu0 %v515
  %2231 = vmatmul.mubr.bf16.gmra.mxu0 %v514
  %v2232 = vpop.f32.mrf.mxu0
  %v2233 = vadd.f32 %v2162, %v2232
  %v2234 = vpop.f32.mrf.mxu0
  %v2235 = vadd.f32 %v2164, %v2234
  %v2236 = vpop.f32.mrf.mxu0
  %v2237 = vadd.f32 %v2166, %v2236
  %v2238 = vpop.f32.mrf.mxu0
  %v2239 = vadd.f32 %v2168, %v2238
  %2240 = vmatprep.mubr.bf16.mxu0 %v531
  %2241 = vmatmul.mubr.bf16.gmra.mxu0 %v530
  %v2242 = vpop.f32.mrf.mxu0
  %v2243 = vadd.f32 %v2172, %v2242
  %v2244 = vpop.f32.mrf.mxu0
  %v2245 = vadd.f32 %v2174, %v2244
  %v2246 = vpop.f32.mrf.mxu0
  %v2247 = vadd.f32 %v2176, %v2246
  %v2248 = vpop.f32.mrf.mxu0
  %v2249 = vadd.f32 %v2178, %v2248
  %2250 = vmatprep.mubr.bf16.mxu0 %v547
  %2251 = vmatmul.mubr.bf16.gmra.mxu0 %v546
  %v2252 = vpop.f32.mrf.mxu0
  %v2253 = vadd.f32 %v2182, %v2252
  %v2254 = vpop.f32.mrf.mxu0
  %v2255 = vadd.f32 %v2184, %v2254
  %v2256 = vpop.f32.mrf.mxu0
  %v2257 = vadd.f32 %v2186, %v2256
  %v2258 = vpop.f32.mrf.mxu0
  %v2259 = vadd.f32 %v2188, %v2258
  %2260 = vmatprep.mubr.bf16.mxu0 %v563
  %2261 = vmatmul.mubr.bf16.gmra.mxu0 %v562
  %v2262 = vpop.f32.mrf.mxu0
  %v2263 = vadd.f32 %v2192, %v2262
  %v2264 = vpop.f32.mrf.mxu0
  %v2265 = vadd.f32 %v2194, %v2264
  %v2266 = vpop.f32.mrf.mxu0
  %v2267 = vpop.f32.mrf.mxu0
  %2268 = vdwg.mxu0
  %2269 = vmatprep.subr.bf16.mxu0 %v1577
  %2270 = vmatpush1.bf16.msra.mxu0 %v1576
  %2271 = vmatprep.subr.bf16.mxu0 %v1575
  %2272 = vmatpush1.bf16.msra.mxu0 %v1574
  %2273 = vmatprep.subr.bf16.mxu0 %v1573
  %2274 = vmatpush1.bf16.msra.mxu0 %v1572
  %2275 = vmatprep.subr.bf16.mxu0 %v1571
  %2276 = vmatpush1.bf16.msra.mxu0 %v1570
  %2277 = vmatprep.subr.bf16.mxu0 %v1569
  %2278 = vmatpush1.bf16.msra.mxu0 %v1568
  %2279 = vmatprep.subr.bf16.mxu0 %v1567
  %2280 = vmatpush1.bf16.msra.mxu0 %v1566
  %2281 = vmatprep.subr.bf16.mxu0 %v1565
  %2282 = vmatpush1.bf16.msra.mxu0 %v1564
  %2283 = vmatprep.subr.bf16.mxu0 %v1563
  %2284 = vmatpush1.bf16.msra.mxu0 %v1562
  %2285 = vmatprep.subr.bf16.mxu0 %v1593
  %2286 = vmatpush2.bf16.msra.mxu0 %v1592
  %2287 = vmatprep.subr.bf16.mxu0 %v1591
  %2288 = vmatpush2.bf16.msra.mxu0 %v1590
  %2289 = vmatprep.subr.bf16.mxu0 %v1589
  %2290 = vmatpush2.bf16.msra.mxu0 %v1588
  %2291 = vmatprep.subr.bf16.mxu0 %v1587
  %2292 = vmatpush2.bf16.msra.mxu0 %v1586
  %2293 = vmatprep.subr.bf16.mxu0 %v1585
  %2294 = vmatpush2.bf16.msra.mxu0 %v1584
  %2295 = vmatprep.subr.bf16.mxu0 %v1583
  %2296 = vmatpush2.bf16.msra.mxu0 %v1582
  %2297 = vmatprep.subr.bf16.mxu0 %v1581
  %2298 = vmatpush2.bf16.msra.mxu0 %v1580
  %2299 = vmatprep.subr.bf16.mxu0 %v1579
  %2300 = vmatpush2.bf16.msra.mxu0 %v1578
  %2301 = vmatprep.mubr.bf16.mxu0 %v517
  %2302 = vmatmul.mubr.bf16.gmra.mxu0 %v516
  %v2303 = vpop.f32.mrf.mxu0
  %v2304 = vadd.f32 %v2233, %v2303
  %v2305 = vpop.f32.mrf.mxu0
  %v2306 = vadd.f32 %v2235, %v2305
  %v2307 = vpop.f32.mrf.mxu0
  %v2308 = vadd.f32 %v2237, %v2307
  %v2309 = vpop.f32.mrf.mxu0
  %v2310 = vadd.f32 %v2239, %v2309
  %2311 = vmatprep.mubr.bf16.mxu0 %v533
  %2312 = vmatmul.mubr.bf16.gmra.mxu0 %v532
  %v2313 = vpop.f32.mrf.mxu0
  %v2314 = vadd.f32 %v2243, %v2313
  %v2315 = vpop.f32.mrf.mxu0
  %v2316 = vadd.f32 %v2245, %v2315
  %v2317 = vpop.f32.mrf.mxu0
  %v2318 = vadd.f32 %v2247, %v2317
  %v2319 = vpop.f32.mrf.mxu0
  %v2320 = vadd.f32 %v2249, %v2319
  %2321 = vmatprep.mubr.bf16.mxu0 %v549
  %2322 = vmatmul.mubr.bf16.gmra.mxu0 %v548
  %v2323 = vpop.f32.mrf.mxu0
  %v2324 = vadd.f32 %v2253, %v2323
  %v2325 = vpop.f32.mrf.mxu0
  %v2326 = vadd.f32 %v2255, %v2325
  %v2327 = vpop.f32.mrf.mxu0
  %v2328 = vadd.f32 %v2257, %v2327
  %v2329 = vpop.f32.mrf.mxu0
  %v2330 = vadd.f32 %v2259, %v2329
  %2331 = vmatprep.mubr.bf16.mxu0 %v565
  %2332 = vmatmul.mubr.bf16.gmra.mxu0 %v564
  %v2333 = vpop.f32.mrf.mxu0
  %v2334 = vadd.f32 %v2263, %v2333
  %v2335 = vpop.f32.mrf.mxu0
  %v2336 = vadd.f32 %v2265, %v2335
  %v2337 = vpop.f32.mrf.mxu0
  %v2338 = vpop.f32.mrf.mxu0
  %2339 = vdwg.mxu0
  %2340 = vmatprep.subr.bf16.mxu0 %v1609
  %2341 = vmatpush1.bf16.msra.mxu0 %v1608
  %2342 = vmatprep.subr.bf16.mxu0 %v1607
  %2343 = vmatpush1.bf16.msra.mxu0 %v1606
  %2344 = vmatprep.subr.bf16.mxu0 %v1605
  %2345 = vmatpush1.bf16.msra.mxu0 %v1604
  %2346 = vmatprep.subr.bf16.mxu0 %v1603
  %2347 = vmatpush1.bf16.msra.mxu0 %v1602
  %2348 = vmatprep.subr.bf16.mxu0 %v1601
  %2349 = vmatpush1.bf16.msra.mxu0 %v1600
  %2350 = vmatprep.subr.bf16.mxu0 %v1599
  %2351 = vmatpush1.bf16.msra.mxu0 %v1598
  %2352 = vmatprep.subr.bf16.mxu0 %v1597
  %2353 = vmatpush1.bf16.msra.mxu0 %v1596
  %2354 = vmatprep.subr.bf16.mxu0 %v1595
  %2355 = vmatpush1.bf16.msra.mxu0 %v1594
  %2356 = vmatprep.subr.bf16.mxu0 %v1625
  %2357 = vmatpush2.bf16.msra.mxu0 %v1624
  %2358 = vmatprep.subr.bf16.mxu0 %v1623
  %2359 = vmatpush2.bf16.msra.mxu0 %v1622
  %2360 = vmatprep.subr.bf16.mxu0 %v1621
  %2361 = vmatpush2.bf16.msra.mxu0 %v1620
  %2362 = vmatprep.subr.bf16.mxu0 %v1619
  %2363 = vmatpush2.bf16.msra.mxu0 %v1618
  %2364 = vmatprep.subr.bf16.mxu0 %v1617
  %2365 = vmatpush2.bf16.msra.mxu0 %v1616
  %2366 = vmatprep.subr.bf16.mxu0 %v1615
  %2367 = vmatpush2.bf16.msra.mxu0 %v1614
  %2368 = vmatprep.subr.bf16.mxu0 %v1613
  %2369 = vmatpush2.bf16.msra.mxu0 %v1612
  %2370 = vmatprep.subr.bf16.mxu0 %v1611
  %2371 = vmatpush2.bf16.msra.mxu0 %v1610
  %2372 = vmatprep.mubr.bf16.mxu0 %v519
  %2373 = vmatmul.mubr.bf16.gmra.mxu0 %v518
  %v2374 = vpop.f32.mrf.mxu0
  %v2375 = vadd.f32 %v2304, %v2374
  %v2376 = vpop.f32.mrf.mxu0
  %v2377 = vadd.f32 %v2306, %v2376
  %v2378 = vpop.f32.mrf.mxu0
  %v2379 = vadd.f32 %v2308, %v2378
  %v2380 = vpop.f32.mrf.mxu0
  %v2381 = vadd.f32 %v2310, %v2380
  %2382 = vmatprep.mubr.bf16.mxu0 %v535
  %2383 = vmatmul.mubr.bf16.gmra.mxu0 %v534
  %v2384 = vpop.f32.mrf.mxu0
  %v2385 = vadd.f32 %v2314, %v2384
  %v2386 = vpop.f32.mrf.mxu0
  %v2387 = vadd.f32 %v2316, %v2386
  %v2388 = vpop.f32.mrf.mxu0
  %v2389 = vadd.f32 %v2318, %v2388
  %v2390 = vpop.f32.mrf.mxu0
  %v2391 = vadd.f32 %v2320, %v2390
  %2392 = vmatprep.mubr.bf16.mxu0 %v551
  %2393 = vmatmul.mubr.bf16.gmra.mxu0 %v550
  %v2394 = vpop.f32.mrf.mxu0
  %v2395 = vadd.f32 %v2324, %v2394
  %v2396 = vpop.f32.mrf.mxu0
  %v2397 = vadd.f32 %v2326, %v2396
  %v2398 = vpop.f32.mrf.mxu0
  %v2399 = vadd.f32 %v2328, %v2398
  %v2400 = vpop.f32.mrf.mxu0
  %v2401 = vadd.f32 %v2330, %v2400
  %2402 = vmatprep.mubr.bf16.mxu0 %v567
  %2403 = vmatmul.mubr.bf16.gmra.mxu0 %v566
  %v2404 = vpop.f32.mrf.mxu0
  %v2405 = vadd.f32 %v2334, %v2404
  %v2406 = vpop.f32.mrf.mxu0
  %v2407 = vadd.f32 %v2336, %v2406
  %v2408 = vpop.f32.mrf.mxu0
  %v2409 = vpop.f32.mrf.mxu0
  %2410 = vdwg.mxu0
  %2411 = vmatprep.subr.bf16.mxu0 %v1641
  %2412 = vmatpush1.bf16.msra.mxu0 %v1640
  %2413 = vmatprep.subr.bf16.mxu0 %v1639
  %2414 = vmatpush1.bf16.msra.mxu0 %v1638
  %2415 = vmatprep.subr.bf16.mxu0 %v1637
  %2416 = vmatpush1.bf16.msra.mxu0 %v1636
  %2417 = vmatprep.subr.bf16.mxu0 %v1635
  %2418 = vmatpush1.bf16.msra.mxu0 %v1634
  %2419 = vmatprep.subr.bf16.mxu0 %v1633
  %2420 = vmatpush1.bf16.msra.mxu0 %v1632
  %2421 = vmatprep.subr.bf16.mxu0 %v1631
  %2422 = vmatpush1.bf16.msra.mxu0 %v1630
  %2423 = vmatprep.subr.bf16.mxu0 %v1629
  %2424 = vmatpush1.bf16.msra.mxu0 %v1628
  %2425 = vmatprep.subr.bf16.mxu0 %v1627
  %2426 = vmatpush1.bf16.msra.mxu0 %v1626
  %2427 = vmatprep.subr.bf16.mxu0 %v1657
  %2428 = vmatpush2.bf16.msra.mxu0 %v1656
  %2429 = vmatprep.subr.bf16.mxu0 %v1655
  %2430 = vmatpush2.bf16.msra.mxu0 %v1654
  %2431 = vmatprep.subr.bf16.mxu0 %v1653
  %2432 = vmatpush2.bf16.msra.mxu0 %v1652
  %2433 = vmatprep.subr.bf16.mxu0 %v1651
  %2434 = vmatpush2.bf16.msra.mxu0 %v1650
  %2435 = vmatprep.subr.bf16.mxu0 %v1649
  %2436 = vmatpush2.bf16.msra.mxu0 %v1648
  %2437 = vmatprep.subr.bf16.mxu0 %v1647
  %2438 = vmatpush2.bf16.msra.mxu0 %v1646
  %2439 = vmatprep.subr.bf16.mxu0 %v1645
  %2440 = vmatpush2.bf16.msra.mxu0 %v1644
  %2441 = vmatprep.subr.bf16.mxu0 %v1643
  %2442 = vmatpush2.bf16.msra.mxu0 %v1642
  %2443 = vmatprep.mubr.bf16.mxu0 %v521
  %2444 = vmatmul.mubr.bf16.gmra.mxu0 %v520
  %v2445 = vpop.f32.mrf.mxu0
  %v2446 = vadd.f32 %v2375, %v2445
  %v2447 = vpop.f32.mrf.mxu0
  %v2448 = vadd.f32 %v2377, %v2447
  %v2449 = vpop.f32.mrf.mxu0
  %v2450 = vadd.f32 %v2379, %v2449
  %v2451 = vpop.f32.mrf.mxu0
  %v2452 = vadd.f32 %v2381, %v2451
  %2453 = vmatprep.mubr.bf16.mxu0 %v537
  %2454 = vmatmul.mubr.bf16.gmra.mxu0 %v536
  %v2455 = vpop.f32.mrf.mxu0
  %v2456 = vadd.f32 %v2385, %v2455
  %v2457 = vpop.f32.mrf.mxu0
  %v2458 = vadd.f32 %v2387, %v2457
  %v2459 = vpop.f32.mrf.mxu0
  %v2460 = vadd.f32 %v2389, %v2459
  %v2461 = vpop.f32.mrf.mxu0
  %v2462 = vadd.f32 %v2391, %v2461
  %2463 = vmatprep.mubr.bf16.mxu0 %v553
  %2464 = vmatmul.mubr.bf16.gmra.mxu0 %v552
  %v2465 = vpop.f32.mrf.mxu0
  %v2466 = vadd.f32 %v2395, %v2465
  %v2467 = vpop.f32.mrf.mxu0
  %v2468 = vadd.f32 %v2397, %v2467
  %v2469 = vpop.f32.mrf.mxu0
  %v2470 = vadd.f32 %v2399, %v2469
  %v2471 = vpop.f32.mrf.mxu0
  %v2472 = vadd.f32 %v2401, %v2471
  %2473 = vmatprep.mubr.bf16.mxu0 %v569
  %2474 = vmatmul.mubr.bf16.gmra.mxu0 %v568
  %v2475 = vpop.f32.mrf.mxu0
  %v2476 = vadd.f32 %v2405, %v2475
  %v2477 = vpop.f32.mrf.mxu0
  %v2478 = vadd.f32 %v2407, %v2477
  %v2479 = vpop.f32.mrf.mxu0
  %v2480 = vpop.f32.mrf.mxu0
  %2481 = vdwg.mxu0
  %v2482 = vmax.f32 %v2446, 0.0
  %v2483 = vmax.f32 %v2448, 0.0
  %v2484 = vmax.f32 %v2450, 0.0
  %v2485 = vmax.f32 %v2452, 0.0
  %v2486 = vmax.f32 %v2456, 0.0
  %v2487 = vmax.f32 %v2458, 0.0
  %v2488 = vmax.f32 %v2460, 0.0
  %v2489 = vmax.f32 %v2462, 0.0
  %v2490 = vmax.f32 %v2466, 0.0
  %v2491 = vmax.f32 %v2468, 0.0
  %v2492 = vmax.f32 %v2470, 0.0
  %v2493 = vmax.f32 %v2472, 0.0
  %v2494 = vmax.f32 %v2476, 0.0
  %v2495 = vmax.f32 %v2478, 0.0
  %2496 = vst [vmem:[%s3] sm:$0xff] %v2482
  %2497 = vst [vmem:[%s3 + $0x8] sm:$0xff] %v2483
  %2498 = vst [vmem:[%s3 + $0x10] sm:$0xff] %v2484
  %2499 = vst [vmem:[%s3 + $0x18] sm:$0xff] %v2485
  %2500 = vst [vmem:[%s3 + $0x20] sm:$0xff] %v2486
  %2501 = vst [vmem:[%s3 + $0x28] sm:$0xff] %v2487
  %2502 = vst [vmem:[%s3 + $0x30] sm:$0xff] %v2488
  %2503 = vst [vmem:[%s3 + $0x38] sm:$0xff] %v2489
  %2504 = vst [vmem:[%s3 + $0x40] sm:$0xff] %v2490
  %2505 = vst [vmem:[%s3 + $0x48] sm:$0xff] %v2491
  %2506 = vst [vmem:[%s3 + $0x50] sm:$0xff] %v2492
  %2507 = vst [vmem:[%s3 + $0x58] sm:$0xff] %v2493
  %2508 = vst [vmem:[%s3 + $0x60] sm:$0xff] %v2494
  %2509 = vst [vmem:[%s3 + $0x68] sm:$0xff] %v2495
  // Predicated region
  $region14: #{dfganet_forward.3} parent=0 // pred_check
    _
  $region15: #{dfganet_forward.3} parent=0 // pred_check_branch
    %2511 = sbr.rel (0) target = $region17
  $region16: #{dfganet_forward.3} parent=0 // pred_region
    _
  $region17: #{dfganet_forward.3} parent=0 // pred_fallthru
    _
  // Predicated region
  $region18: #{dfganet_forward.3} parent=0 // pred_check
    _
  $region19: #{dfganet_forward.3} parent=0 // pred_check_branch
    %2513 = sbr.rel (0) target = $region21
  $region20: #{dfganet_forward.3} parent=0 // pred_region
    _
  $region21: #{dfganet_forward.3} parent=0 // pred_fallthru
    _

// kernel: dfganet_forward.5
$region0: #{dfganet_forward.5}
  #allocation0 [shape = 'u32[]', space=smem, size = 0x4, offset = 0x4, fixed_abs, tag = 'smem constant byte address 0x4 - core index']
  #allocation1 [shape = 'u32[144,128]{1,0:T(1,128)}', space=vmem, size = 0x12000, scoped, tag = 'internal scratch']
  %s0 = inlined_call_operand.vmem [shape: bf16[128,128], index: 0, kind: input, shape index: {}]
  %s1 = inlined_call_operand.vmem [shape: bf16[128,128], index: 1, kind: input, shape index: {}]
  %s2 = inlined_call_operand.vmem [shape: f32[1,128], index: 2, kind: input, shape index: {}]
  %s3 = inlined_call_operand.vmem [shape: f32[128,128], index: 3, kind: output, shape index: {}]
  %s4 = sld [smem:[#allocation0]]
  $region22: #{dfganet_forward.5} parent=0
    _
  %s6 = ssub.s32 1, %s4
  %s7 = scalar_select 0, %s6, %s4
  // Predicated region
  $region2: #{dfganet_forward.5} parent=0 // pred_check
    _
  $region3: #{dfganet_forward.5} parent=0 // pred_check_branch
    %9 = sbr.rel (0) target = $region5
  $region4: #{dfganet_forward.5} parent=0 // pred_region
    _
  $region5: #{dfganet_forward.5} parent=0 // pred_fallthru
    _
  // Predicated region
  $region6: #{dfganet_forward.5} parent=0 // pred_check
    _
  $region7: #{dfganet_forward.5} parent=0 // pred_check_branch
    %11 = sbr.rel (0) target = $region9
  $region8: #{dfganet_forward.5} parent=0 // pred_region
    _
  $region9: #{dfganet_forward.5} parent=0 // pred_fallthru
    _
  // Predicated region
  $region10: #{dfganet_forward.5} parent=0 // pred_check
    _
  $region11: #{dfganet_forward.5} parent=0 // pred_check_branch
    %13 = sbr.rel (0) target = $region13
  $region12: #{dfganet_forward.5} parent=0 // pred_region
    _
  $region13: #{dfganet_forward.5} parent=0 // pred_fallthru
    _
  %v15 = vld [vmem:[%s0] sm:$0xf]
  %v16 = vld [vmem:[%s0 + $0x4] sm:$0xf]
  %v17 = vld [vmem:[%s0 + $0x8] sm:$0xf]
  %v18 = vld [vmem:[%s0 + $0xc] sm:$0xf]
  %v19 = vld [vmem:[%s0 + $0x10] sm:$0xf]
  %v20 = vld [vmem:[%s0 + $0x14] sm:$0xf]
  %v21 = vld [vmem:[%s0 + $0x18] sm:$0xf]
  %v22 = vld [vmem:[%s0 + $0x1c] sm:$0xf]
  %v23 = vld [vmem:[%s0 + $0x20] sm:$0xf]
  %v24 = vld [vmem:[%s0 + $0x24] sm:$0xf]
  %v25 = vld [vmem:[%s0 + $0x28] sm:$0xf]
  %v26 = vld [vmem:[%s0 + $0x2c] sm:$0xf]
  %v27 = vld [vmem:[%s0 + $0x30] sm:$0xf]
  %v28 = vld [vmem:[%s0 + $0x34] sm:$0xf]
  %v29 = vld [vmem:[%s0 + $0x38] sm:$0xf]
  %v30 = vld [vmem:[%s0 + $0x3c] sm:$0xf]
  %v31 = vld [vmem:[%s1] sm:$0xf]
  %v32 = vld [vmem:[%s1 + $0x4] sm:$0xf]
  %v33 = vld [vmem:[%s1 + $0x8] sm:$0xf]
  %v34 = vld [vmem:[%s1 + $0xc] sm:$0xf]
  %v35 = vld [vmem:[%s1 + $0x10] sm:$0xf]
  %v36 = vld [vmem:[%s1 + $0x14] sm:$0xf]
  %v37 = vld [vmem:[%s1 + $0x18] sm:$0xf]
  %v38 = vld [vmem:[%s1 + $0x1c] sm:$0xf]
  %v39 = vld [vmem:[%s1 + $0x20] sm:$0xf]
  %v40 = vld [vmem:[%s1 + $0x24] sm:$0xf]
  %v41 = vld [vmem:[%s1 + $0x28] sm:$0xf]
  %v42 = vld [vmem:[%s1 + $0x2c] sm:$0xf]
  %v43 = vld [vmem:[%s1 + $0x30] sm:$0xf]
  %v44 = vld [vmem:[%s1 + $0x34] sm:$0xf]
  %v45 = vld [vmem:[%s1 + $0x38] sm:$0xf]
  %v46 = vld [vmem:[%s1 + $0x3c] sm:$0xf]
  %v47 = vld [vmem:[%s2] sm:$0x1]
  %v49 = vlaneseq
  %v50 = vshrl.u32 %v49, 7
  %v51 = vsub.s32 0, %v50
  %v52 = vrot.slane %v47, %v51
  %v70 = vunpack.c.l.b16 %v15
  %v71 = vunpack.c.l.b16 %v16
  %v72 = vunpack.c.l.b16 %v17
  %v73 = vunpack.c.l.b16 %v18
  %v74 = vunpack.c.l.b16 %v19
  %v75 = vunpack.c.l.b16 %v20
  %v76 = vunpack.c.l.b16 %v21
  %v77 = vunpack.c.l.b16 %v22
  %v78 = vunpack.c.l.b16 %v23
  %v79 = vunpack.c.l.b16 %v24
  %v80 = vunpack.c.l.b16 %v25
  %v81 = vunpack.c.l.b16 %v26
  %v82 = vunpack.c.l.b16 %v27
  %v83 = vunpack.c.l.b16 %v28
  %v84 = vunpack.c.l.b16 %v29
  %v85 = vunpack.c.l.b16 %v30
  %v86 = vpack.c.b16 %v71, %v70
  %v87 = vpack.c.b16 %v73, %v72
  %v88 = vpack.c.b16 %v75, %v74
  %v89 = vpack.c.b16 %v77, %v76
  %v90 = vpack.c.b16 %v79, %v78
  %v91 = vpack.c.b16 %v81, %v80
  %v92 = vpack.c.b16 %v83, %v82
  %v93 = vpack.c.b16 %v85, %v84
  %v118 = vunpack.c.l.b16 %v31
  %v119 = vunpack.c.l.b16 %v32
  %v120 = vunpack.c.l.b16 %v33
  %v121 = vunpack.c.l.b16 %v34
  %v122 = vunpack.c.l.b16 %v35
  %v123 = vunpack.c.l.b16 %v36
  %v124 = vunpack.c.l.b16 %v37
  %v125 = vunpack.c.l.b16 %v38
  %v126 = vunpack.c.l.b16 %v39
  %v127 = vunpack.c.l.b16 %v40
  %v128 = vunpack.c.l.b16 %v41
  %v129 = vunpack.c.l.b16 %v42
  %v130 = vunpack.c.l.b16 %v43
  %v131 = vunpack.c.l.b16 %v44
  %v132 = vunpack.c.l.b16 %v45
  %v133 = vunpack.c.l.b16 %v46
  %v134 = vpack.c.b16 %v119, %v118
  %v135 = vpack.c.b16 %v121, %v120
  %v136 = vpack.c.b16 %v123, %v122
  %v137 = vpack.c.b16 %v125, %v124
  %v138 = vpack.c.b16 %v127, %v126
  %v139 = vpack.c.b16 %v129, %v128
  %v140 = vpack.c.b16 %v131, %v130
  %v141 = vpack.c.b16 %v133, %v132
  %150 = vmatprep.subr.bf16.mxu0 0
  %151 = vmatpush1.bf16.msra.mxu0 %v141
  %152 = vmatprep.subr.bf16.mxu0 0
  %153 = vmatpush1.bf16.msra.mxu0 %v140
  %154 = vmatprep.subr.bf16.mxu0 0
  %155 = vmatpush1.bf16.msra.mxu0 %v139
  %156 = vmatprep.subr.bf16.mxu0 0
  %157 = vmatpush1.bf16.msra.mxu0 %v138
  %158 = vmatprep.subr.bf16.mxu0 0
  %159 = vmatpush1.bf16.msra.mxu0 %v137
  %160 = vmatprep.subr.bf16.mxu0 0
  %161 = vmatpush1.bf16.msra.mxu0 %v136
  %162 = vmatprep.subr.bf16.mxu0 0
  %163 = vmatpush1.bf16.msra.mxu0 %v135
  %164 = vmatprep.subr.bf16.mxu0 0
  %165 = vmatpush1.bf16.msra.mxu0 %v134
  %166 = vmatprep.subr.bf16.mxu0 0
  %167 = vmatpush2.bf16.msra.mxu0 0
  %168 = vmatprep.subr.bf16.mxu0 0
  %169 = vmatpush2.bf16.msra.mxu0 0
  %170 = vmatprep.subr.bf16.mxu0 0
  %171 = vmatpush2.bf16.msra.mxu0 0
  %172 = vmatprep.subr.bf16.mxu0 0
  %173 = vmatpush2.bf16.msra.mxu0 0
  %174 = vmatprep.subr.bf16.mxu0 0
  %175 = vmatpush2.bf16.msra.mxu0 0
  %176 = vmatprep.subr.bf16.mxu0 0
  %177 = vmatpush2.bf16.msra.mxu0 0
  %178 = vmatprep.subr.bf16.mxu0 0
  %179 = vmatpush2.bf16.msra.mxu0 0
  %180 = vmatprep.subr.bf16.mxu0 0
  %181 = vmatpush2.bf16.msra.mxu0 0
  %182 = vmatprep.mubr.bf16.mxu0 0
  %183 = vmatmul.mubr.bf16.gmra.mxu0 %v86
  %v184 = vpop.f32.mrf.mxu0
  %v185 = vadd.f32 %v52, %v184
  %v186 = vpop.f32.mrf.mxu0
  %v187 = vpop.f32.mrf.mxu0
  %v188 = vadd.f32 %v52, %v187
  %v189 = vpop.f32.mrf.mxu0
  %190 = vmatprep.mubr.bf16.mxu0 0
  %191 = vmatmul.mubr.bf16.gmra.mxu0 %v87
  %v192 = vpop.f32.mrf.mxu0
  %v193 = vadd.f32 %v52, %v192
  %v194 = vpop.f32.mrf.mxu0
  %v195 = vpop.f32.mrf.mxu0
  %v196 = vadd.f32 %v52, %v195
  %v197 = vpop.f32.mrf.mxu0
  %198 = vmatprep.mubr.bf16.mxu0 0
  %199 = vmatmul.mubr.bf16.gmra.mxu0 %v88
  %v200 = vpop.f32.mrf.mxu0
  %v201 = vadd.f32 %v52, %v200
  %v202 = vpop.f32.mrf.mxu0
  %v203 = vpop.f32.mrf.mxu0
  %v204 = vadd.f32 %v52, %v203
  %v205 = vpop.f32.mrf.mxu0
  %206 = vmatprep.mubr.bf16.mxu0 0
  %207 = vmatmul.mubr.bf16.gmra.mxu0 %v89
  %v208 = vpop.f32.mrf.mxu0
  %v209 = vadd.f32 %v52, %v208
  %v210 = vpop.f32.mrf.mxu0
  %v211 = vpop.f32.mrf.mxu0
  %v212 = vadd.f32 %v52, %v211
  %v213 = vpop.f32.mrf.mxu0
  %214 = vmatprep.mubr.bf16.mxu0 0
  %215 = vmatmul.mubr.bf16.gmra.mxu0 %v90
  %v216 = vpop.f32.mrf.mxu0
  %v217 = vadd.f32 %v52, %v216
  %v218 = vpop.f32.mrf.mxu0
  %v219 = vpop.f32.mrf.mxu0
  %v220 = vadd.f32 %v52, %v219
  %v221 = vpop.f32.mrf.mxu0
  %222 = vmatprep.mubr.bf16.mxu0 0
  %223 = vmatmul.mubr.bf16.gmra.mxu0 %v91
  %v224 = vpop.f32.mrf.mxu0
  %v225 = vadd.f32 %v52, %v224
  %v226 = vpop.f32.mrf.mxu0
  %v227 = vpop.f32.mrf.mxu0
  %v228 = vadd.f32 %v52, %v227
  %v229 = vpop.f32.mrf.mxu0
  %230 = vmatprep.mubr.bf16.mxu0 0
  %231 = vmatmul.mubr.bf16.gmra.mxu0 %v92
  %v232 = vpop.f32.mrf.mxu0
  %v233 = vadd.f32 %v52, %v232
  %v234 = vpop.f32.mrf.mxu0
  %v235 = vpop.f32.mrf.mxu0
  %v236 = vadd.f32 %v52, %v235
  %v237 = vpop.f32.mrf.mxu0
  %238 = vmatprep.mubr.bf16.mxu0 0
  %239 = vmatmul.mubr.bf16.gmra.mxu0 %v93
  %v240 = vpop.f32.mrf.mxu0
  %v241 = vadd.f32 %v52, %v240
  %v242 = vpop.f32.mrf.mxu0
  %v243 = vpop.f32.mrf.mxu0
  %v244 = vadd.f32 %v52, %v243
  %v245 = vpop.f32.mrf.mxu0
  %246 = vdwg.mxu0
  %247 = vst [vmem:[%s3] sm:$0xff] %v185
  %248 = vst [vmem:[%s3 + $0x8] sm:$0xff] %v188
  %249 = vst [vmem:[%s3 + $0x10] sm:$0xff] %v193
  %250 = vst [vmem:[%s3 + $0x18] sm:$0xff] %v196
  %251 = vst [vmem:[%s3 + $0x20] sm:$0xff] %v201
  %252 = vst [vmem:[%s3 + $0x28] sm:$0xff] %v204
  %253 = vst [vmem:[%s3 + $0x30] sm:$0xff] %v209
  %254 = vst [vmem:[%s3 + $0x38] sm:$0xff] %v212
  %255 = vst [vmem:[%s3 + $0x40] sm:$0xff] %v217
  %256 = vst [vmem:[%s3 + $0x48] sm:$0xff] %v220
  %257 = vst [vmem:[%s3 + $0x50] sm:$0xff] %v225
  %258 = vst [vmem:[%s3 + $0x58] sm:$0xff] %v228
  %259 = vst [vmem:[%s3 + $0x60] sm:$0xff] %v233
  %260 = vst [vmem:[%s3 + $0x68] sm:$0xff] %v236
  %261 = vst [vmem:[%s3 + $0x70] sm:$0xff] %v241
  %262 = vst [vmem:[%s3 + $0x78] sm:$0xff] %v244
  // Predicated region
  $region14: #{dfganet_forward.5} parent=0 // pred_check
    _
  $region15: #{dfganet_forward.5} parent=0 // pred_check_branch
    %264 = sbr.rel (0) target = $region17
  $region16: #{dfganet_forward.5} parent=0 // pred_region
    _
  $region17: #{dfganet_forward.5} parent=0 // pred_fallthru
    _
  // Predicated region
  $region18: #{dfganet_forward.5} parent=0 // pred_check
    _
  $region19: #{dfganet_forward.5} parent=0 // pred_check_branch
    %266 = sbr.rel (0) target = $region21
  $region20: #{dfganet_forward.5} parent=0 // pred_region
    _
  $region21: #{dfganet_forward.5} parent=0 // pred_fallthru
    _

// kernel: dfganet_forward.4
$region0: #{dfganet_forward.4}
  #allocation0 [shape = 'u32[]', space=smem, size = 0x4, offset = 0x4, fixed_abs, tag = 'smem constant byte address 0x4 - core index']
  #allocation1 [shape = 'u32[144,128]{1,0:T(1,128)}', space=vmem, size = 0x12000, scoped, tag = 'internal scratch']
  %s0 = inlined_call_operand.vmem [shape: bf16[256,640], index: 0, kind: input, shape index: {}]
  %s1 = inlined_call_operand.vmem [shape: bf16[640,128], index: 1, kind: input, shape index: {}]
  %s2 = inlined_call_operand.vmem [shape: f32[1,128], index: 2, kind: input, shape index: {}]
  %s3 = inlined_call_operand.vmem [shape: bf16[128,128], index: 3, kind: input, shape index: {}]
  %s4 = inlined_call_operand.vmem [shape: f32[1,128], index: 4, kind: input, shape index: {}]
  %s5 = inlined_call_operand.vmem [shape: f32[256,128], index: 5, kind: output, shape index: {}]
  %s6 = sld [smem:[#allocation0]]
  $region30: #{dfganet_forward.4} parent=0
    _
  %s8 = ssub.s32 1, %s6
  %s9 = scalar_select 0, %s8, %s6
  // Predicated region
  $region2: #{dfganet_forward.4} parent=0 // pred_check
    _
  $region3: #{dfganet_forward.4} parent=0 // pred_check_branch
    %11 = sbr.rel (0) target = $region5
  $region4: #{dfganet_forward.4} parent=0 // pred_region
    _
  $region5: #{dfganet_forward.4} parent=0 // pred_fallthru
    _
  // Predicated region
  $region6: #{dfganet_forward.4} parent=0 // pred_check
    _
  $region7: #{dfganet_forward.4} parent=0 // pred_check_branch
    %13 = sbr.rel (0) target = $region9
  $region8: #{dfganet_forward.4} parent=0 // pred_region
    _
  $region9: #{dfganet_forward.4} parent=0 // pred_fallthru
    _
  // Predicated region
  $region10: #{dfganet_forward.4} parent=0 // pred_check
    _
  $region11: #{dfganet_forward.4} parent=0 // pred_check_branch
    %15 = sbr.rel (0) target = $region13
  $region12: #{dfganet_forward.4} parent=0 // pred_region
    _
  $region13: #{dfganet_forward.4} parent=0 // pred_fallthru
    _
  // Predicated region
  $region14: #{dfganet_forward.4} parent=0 // pred_check
    _
  $region15: #{dfganet_forward.4} parent=0 // pred_check_branch
    %17 = sbr.rel (0) target = $region17
  $region16: #{dfganet_forward.4} parent=0 // pred_region
    _
  $region17: #{dfganet_forward.4} parent=0 // pred_fallthru
    _
  // Predicated region
  $region18: #{dfganet_forward.4} parent=0 // pred_check
    _
  $region19: #{dfganet_forward.4} parent=0 // pred_check_branch
    %19 = sbr.rel (0) target = $region21
  $region20: #{dfganet_forward.4} parent=0 // pred_region
    _
  $region21: #{dfganet_forward.4} parent=0 // pred_fallthru
    _
  %v21 = vld [vmem:[%s0] sm:$0xff]
  %v22 = vld [vmem:[%s0 + $0x8] sm:$0xff]
  %v23 = vld [vmem:[%s0 + $0x10] sm:$0xf]
  %v24 = vld [vmem:[%s0 + $0x14] sm:$0xff]
  %v25 = vld [vmem:[%s0 + $0x1c] sm:$0xff]
  %v26 = vld [vmem:[%s0 + $0x24] sm:$0xf]
  %v27 = vld [vmem:[%s0 + $0x28] sm:$0xff]
  %v28 = vld [vmem:[%s0 + $0x30] sm:$0xff]
  %v29 = vld [vmem:[%s0 + $0x38] sm:$0xf]
  %v30 = vld [vmem:[%s0 + $0x3c] sm:$0xff]
  %v31 = vld [vmem:[%s0 + $0x44] sm:$0xff]
  %v32 = vld [vmem:[%s0 + $0x4c] sm:$0xf]
  %v33 = vld [vmem:[%s0 + $0x50] sm:$0xff]
  %v34 = vld [vmem:[%s0 + $0x58] sm:$0xff]
  %v35 = vld [vmem:[%s0 + $0x60] sm:$0xf]
  %v36 = vld [vmem:[%s0 + $0x64] sm:$0xff]
  %v37 = vld [vmem:[%s0 + $0x6c] sm:$0xff]
  %v38 = vld [vmem:[%s0 + $0x74] sm:$0xf]
  %v39 = vld [vmem:[%s0 + $0x78] sm:$0xff]
  %v40 = vld [vmem:[%s0 + $0x80] sm:$0xff]
  %v41 = vld [vmem:[%s0 + $0x88] sm:$0xf]
  %v42 = vld [vmem:[%s0 + $0x8c] sm:$0xff]
  %v43 = vld [vmem:[%s0 + $0x94] sm:$0xff]
  %v44 = vld [vmem:[%s0 + $0x9c] sm:$0xf]
  %v45 = vld [vmem:[%s0 + $0xa0] sm:$0xff]
  %v46 = vld [vmem:[%s0 + $0xa8] sm:$0xff]
  %v47 = vld [vmem:[%s0 + $0xb0] sm:$0xf]
  %v48 = vld [vmem:[%s0 + $0xb4] sm:$0xff]
  %v49 = vld [vmem:[%s0 + $0xbc] sm:$0xff]
  %v50 = vld [vmem:[%s0 + $0xc4] sm:$0xf]
  %v51 = vld [vmem:[%s0 + $0xc8] sm:$0xff]
  %v52 = vld [vmem:[%s0 + $0xd0] sm:$0xff]
  %v53 = vld [vmem:[%s0 + $0xd8] sm:$0xf]
  %v54 = vld [vmem:[%s0 + $0xdc] sm:$0xff]
  %v55 = vld [vmem:[%s0 + $0xe4] sm:$0xff]
  %v56 = vld [vmem:[%s0 + $0xec] sm:$0xf]
  %v57 = vld [vmem:[%s0 + $0xf0] sm:$0xff]
  %v58 = vld [vmem:[%s0 + $0xf8] sm:$0xff]
  %v59 = vld [vmem:[%s0 + $0x100] sm:$0xf]
  %v60 = vld [vmem:[%s0 + $0x104] sm:$0xff]
  %v61 = vld [vmem:[%s0 + $0x10c] sm:$0xff]
  %v62 = vld [vmem:[%s0 + $0x114] sm:$0xf]
  %v63 = vld [vmem:[%s0 + $0x118] sm:$0xff]
  %v64 = vld [vmem:[%s0 + $0x120] sm:$0xff]
  %v65 = vld [vmem:[%s0 + $0x128] sm:$0xf]
  %v66 = vld [vmem:[%s0 + $0x12c] sm:$0xff]
  %v67 = vld [vmem:[%s0 + $0x134] sm:$0xff]
  %v68 = vld [vmem:[%s0 + $0x13c] sm:$0xf]
  %v69 = vld [vmem:[%s0 + $0x140] sm:$0xff]
  %v70 = vld [vmem:[%s0 + $0x148] sm:$0xff]
  %v71 = vld [vmem:[%s0 + $0x150] sm:$0xf]
  %v72 = vld [vmem:[%s0 + $0x154] sm:$0xff]
  %v73 = vld [vmem:[%s0 + $0x15c] sm:$0xff]
  %v74 = vld [vmem:[%s0 + $0x164] sm:$0xf]
  %v75 = vld [vmem:[%s0 + $0x168] sm:$0xff]
  %v76 = vld [vmem:[%s0 + $0x170] sm:$0xff]
  %v77 = vld [vmem:[%s0 + $0x178] sm:$0xf]
  %v78 = vld [vmem:[%s0 + $0x17c] sm:$0xff]
  %v79 = vld [vmem:[%s0 + $0x184] sm:$0xff]
  %v80 = vld [vmem:[%s0 + $0x18c] sm:$0xf]
  %v81 = vld [vmem:[%s0 + $0x190] sm:$0xff]
  %v82 = vld [vmem:[%s0 + $0x198] sm:$0xff]
  %v83 = vld [vmem:[%s0 + $0x1a0] sm:$0xf]
  %v84 = vld [vmem:[%s0 + $0x1a4] sm:$0xff]
  %v85 = vld [vmem:[%s0 + $0x1ac] sm:$0xff]
  %v86 = vld [vmem:[%s0 + $0x1b4] sm:$0xf]
  %v87 = vld [vmem:[%s0 + $0x1b8] sm:$0xff]
  %v88 = vld [vmem:[%s0 + $0x1c0] sm:$0xff]
  %v89 = vld [vmem:[%s0 + $0x1c8] sm:$0xf]
  %v90 = vld [vmem:[%s0 + $0x1cc] sm:$0xff]
  %v91 = vld [vmem:[%s0 + $0x1d4] sm:$0xff]
  %v92 = vld [vmem:[%s0 + $0x1dc] sm:$0xf]
  %v93 = vld [vmem:[%s0 + $0x1e0] sm:$0xff]
  %v94 = vld [vmem:[%s0 + $0x1e8] sm:$0xff]
  %v95 = vld [vmem:[%s0 + $0x1f0] sm:$0xf]
  %v96 = vld [vmem:[%s0 + $0x1f4] sm:$0xff]
  %v97 = vld [vmem:[%s0 + $0x1fc] sm:$0xff]
  %v98 = vld [vmem:[%s0 + $0x204] sm:$0xf]
  %v99 = vld [vmem:[%s0 + $0x208] sm:$0xff]
  %v100 = vld [vmem:[%s0 + $0x210] sm:$0xff]
  %v101 = vld [vmem:[%s0 + $0x218] sm:$0xf]
  %v102 = vld [vmem:[%s0 + $0x21c] sm:$0xff]
  %v103 = vld [vmem:[%s0 + $0x224] sm:$0xff]
  %v104 = vld [vmem:[%s0 + $0x22c] sm:$0xf]
  %v105 = vld [vmem:[%s0 + $0x230] sm:$0xff]
  %v106 = vld [vmem:[%s0 + $0x238] sm:$0xff]
  %v107 = vld [vmem:[%s0 + $0x240] sm:$0xf]
  %v108 = vld [vmem:[%s0 + $0x244] sm:$0xff]
  %v109 = vld [vmem:[%s0 + $0x24c] sm:$0xff]
  %v110 = vld [vmem:[%s0 + $0x254] sm:$0xf]
  %v111 = vld [vmem:[%s0 + $0x258] sm:$0xff]
  %v112 = vld [vmem:[%s0 + $0x260] sm:$0xff]
  %v113 = vld [vmem:[%s0 + $0x268] sm:$0xf]
  %v114 = vld [vmem:[%s0 + $0x26c] sm:$0xff]
  %v115 = vld [vmem:[%s0 + $0x274] sm:$0xff]
  %v116 = vld [vmem:[%s0 + $0x27c] sm:$0xf]
  %v117 = vld [vmem:[%s1] sm:$0xf]
  %v118 = vld [vmem:[%s1 + $0x4] sm:$0xf]
  %v119 = vld [vmem:[%s1 + $0x8] sm:$0xf]
  %v120 = vld [vmem:[%s1 + $0xc] sm:$0xf]
  %v121 = vld [vmem:[%s1 + $0x10] sm:$0xf]
  %v122 = vld [vmem:[%s1 + $0x14] sm:$0xf]
  %v123 = vld [vmem:[%s1 + $0x18] sm:$0xf]
  %v124 = vld [vmem:[%s1 + $0x1c] sm:$0xf]
  %v125 = vld [vmem:[%s1 + $0x20] sm:$0xf]
  %v126 = vld [vmem:[%s1 + $0x24] sm:$0xf]
  %v127 = vld [vmem:[%s1 + $0x28] sm:$0xf]
  %v128 = vld [vmem:[%s1 + $0x2c] sm:$0xf]
  %v129 = vld [vmem:[%s1 + $0x30] sm:$0xf]
  %v130 = vld [vmem:[%s1 + $0x34] sm:$0xf]
  %v131 = vld [vmem:[%s1 + $0x38] sm:$0xf]
  %v132 = vld [vmem:[%s1 + $0x3c] sm:$0xf]
  %v133 = vld [vmem:[%s1 + $0x40] sm:$0xf]
  %v134 = vld [vmem:[%s1 + $0x44] sm:$0xf]
  %v135 = vld [vmem:[%s1 + $0x48] sm:$0xf]
  %v136 = vld [vmem:[%s1 + $0x4c] sm:$0xf]
  %v137 = vld [vmem:[%s1 + $0x50] sm:$0xf]
  %v138 = vld [vmem:[%s1 + $0x54] sm:$0xf]
  %v139 = vld [vmem:[%s1 + $0x58] sm:$0xf]
  %v140 = vld [vmem:[%s1 + $0x5c] sm:$0xf]
  %v141 = vld [vmem:[%s1 + $0x60] sm:$0xf]
  %v142 = vld [vmem:[%s1 + $0x64] sm:$0xf]
  %v143 = vld [vmem:[%s1 + $0x68] sm:$0xf]
  %v144 = vld [vmem:[%s1 + $0x6c] sm:$0xf]
  %v145 = vld [vmem:[%s1 + $0x70] sm:$0xf]
  %v146 = vld [vmem:[%s1 + $0x74] sm:$0xf]
  %v147 = vld [vmem:[%s1 + $0x78] sm:$0xf]
  %v148 = vld [vmem:[%s1 + $0x7c] sm:$0xf]
  %v149 = vld [vmem:[%s1 + $0x80] sm:$0xf]
  %v150 = vld [vmem:[%s1 + $0x84] sm:$0xf]
  %v151 = vld [vmem:[%s1 + $0x88] sm:$0xf]
  %v152 = vld [vmem:[%s1 + $0x8c] sm:$0xf]
  %v153 = vld [vmem:[%s1 + $0x90] sm:$0xf]
  %v154 = vld [vmem:[%s1 + $0x94] sm:$0xf]
  %v155 = vld [vmem:[%s1 + $0x98] sm:$0xf]
  %v156 = vld [vmem:[%s1 + $0x9c] sm:$0xf]
  %v157 = vld [vmem:[%s1 + $0xa0] sm:$0xf]
  %v158 = vld [vmem:[%s1 + $0xa4] sm:$0xf]
  %v159 = vld [vmem:[%s1 + $0xa8] sm:$0xf]
  %v160 = vld [vmem:[%s1 + $0xac] sm:$0xf]
  %v161 = vld [vmem:[%s1 + $0xb0] sm:$0xf]
  %v162 = vld [vmem:[%s1 + $0xb4] sm:$0xf]
  %v163 = vld [vmem:[%s1 + $0xb8] sm:$0xf]
  %v164 = vld [vmem:[%s1 + $0xbc] sm:$0xf]
  %v165 = vld [vmem:[%s1 + $0xc0] sm:$0xf]
  %v166 = vld [vmem:[%s1 + $0xc4] sm:$0xf]
  %v167 = vld [vmem:[%s1 + $0xc8] sm:$0xf]
  %v168 = vld [vmem:[%s1 + $0xcc] sm:$0xf]
  %v169 = vld [vmem:[%s1 + $0xd0] sm:$0xf]
  %v170 = vld [vmem:[%s1 + $0xd4] sm:$0xf]
  %v171 = vld [vmem:[%s1 + $0xd8] sm:$0xf]
  %v172 = vld [vmem:[%s1 + $0xdc] sm:$0xf]
  %v173 = vld [vmem:[%s1 + $0xe0] sm:$0xf]
  %v174 = vld [vmem:[%s1 + $0xe4] sm:$0xf]
  %v175 = vld [vmem:[%s1 + $0xe8] sm:$0xf]
  %v176 = vld [vmem:[%s1 + $0xec] sm:$0xf]
  %v177 = vld [vmem:[%s1 + $0xf0] sm:$0xf]
  %v178 = vld [vmem:[%s1 + $0xf4] sm:$0xf]
  %v179 = vld [vmem:[%s1 + $0xf8] sm:$0xf]
  %v180 = vld [vmem:[%s1 + $0xfc] sm:$0xf]
  %v181 = vld [vmem:[%s1 + $0x100] sm:$0xf]
  %v182 = vld [vmem:[%s1 + $0x104] sm:$0xf]
  %v183 = vld [vmem:[%s1 + $0x108] sm:$0xf]
  %v184 = vld [vmem:[%s1 + $0x10c] sm:$0xf]
  %v185 = vld [vmem:[%s1 + $0x110] sm:$0xf]
  %v186 = vld [vmem:[%s1 + $0x114] sm:$0xf]
  %v187 = vld [vmem:[%s1 + $0x118] sm:$0xf]
  %v188 = vld [vmem:[%s1 + $0x11c] sm:$0xf]
  %v189 = vld [vmem:[%s1 + $0x120] sm:$0xf]
  %v190 = vld [vmem:[%s1 + $0x124] sm:$0xf]
  %v191 = vld [vmem:[%s1 + $0x128] sm:$0xf]
  %v192 = vld [vmem:[%s1 + $0x12c] sm:$0xf]
  %v193 = vld [vmem:[%s1 + $0x130] sm:$0xf]
  %v194 = vld [vmem:[%s1 + $0x134] sm:$0xf]
  %v195 = vld [vmem:[%s1 + $0x138] sm:$0xf]
  %v196 = vld [vmem:[%s1 + $0x13c] sm:$0xf]
  %v197 = vld [vmem:[%s2] sm:$0x1]
  %v199 = vlaneseq
  %v200 = vshrl.u32 %v199, 7
  %v201 = vsub.s32 0, %v200
  %v202 = vrot.slane %v197, %v201
  %v300 = vunpack.c.l.b16 %v21
  %v301 = vunpack.c.h.b16 %v21
  %v302 = vunpack.c.l.b16 %v22
  %v303 = vunpack.c.h.b16 %v22
  %v304 = vunpack.c.l.b16 %v23
  %v305 = vunpack.c.l.b16 %v24
  %v306 = vunpack.c.h.b16 %v24
  %v307 = vunpack.c.l.b16 %v25
  %v308 = vunpack.c.h.b16 %v25
  %v309 = vunpack.c.l.b16 %v26
  %v310 = vunpack.c.l.b16 %v27
  %v311 = vunpack.c.h.b16 %v27
  %v312 = vunpack.c.l.b16 %v28
  %v313 = vunpack.c.h.b16 %v28
  %v314 = vunpack.c.l.b16 %v29
  %v315 = vunpack.c.l.b16 %v30
  %v316 = vunpack.c.h.b16 %v30
  %v317 = vunpack.c.l.b16 %v31
  %v318 = vunpack.c.h.b16 %v31
  %v319 = vunpack.c.l.b16 %v32
  %v320 = vunpack.c.l.b16 %v33
  %v321 = vunpack.c.h.b16 %v33
  %v322 = vunpack.c.l.b16 %v34
  %v323 = vunpack.c.h.b16 %v34
  %v324 = vunpack.c.l.b16 %v35
  %v325 = vunpack.c.l.b16 %v36
  %v326 = vunpack.c.h.b16 %v36
  %v327 = vunpack.c.l.b16 %v37
  %v328 = vunpack.c.h.b16 %v37
  %v329 = vunpack.c.l.b16 %v38
  %v330 = vunpack.c.l.b16 %v39
  %v331 = vunpack.c.h.b16 %v39
  %v332 = vunpack.c.l.b16 %v40
  %v333 = vunpack.c.h.b16 %v40
  %v334 = vunpack.c.l.b16 %v41
  %v335 = vunpack.c.l.b16 %v42
  %v336 = vunpack.c.h.b16 %v42
  %v337 = vunpack.c.l.b16 %v43
  %v338 = vunpack.c.h.b16 %v43
  %v339 = vunpack.c.l.b16 %v44
  %v340 = vunpack.c.l.b16 %v45
  %v341 = vunpack.c.h.b16 %v45
  %v342 = vunpack.c.l.b16 %v46
  %v343 = vunpack.c.h.b16 %v46
  %v344 = vunpack.c.l.b16 %v47
  %v345 = vunpack.c.l.b16 %v48
  %v346 = vunpack.c.h.b16 %v48
  %v347 = vunpack.c.l.b16 %v49
  %v348 = vunpack.c.h.b16 %v49
  %v349 = vunpack.c.l.b16 %v50
  %v350 = vunpack.c.l.b16 %v51
  %v351 = vunpack.c.h.b16 %v51
  %v352 = vunpack.c.l.b16 %v52
  %v353 = vunpack.c.h.b16 %v52
  %v354 = vunpack.c.l.b16 %v53
  %v355 = vunpack.c.l.b16 %v54
  %v356 = vunpack.c.h.b16 %v54
  %v357 = vunpack.c.l.b16 %v55
  %v358 = vunpack.c.h.b16 %v55
  %v359 = vunpack.c.l.b16 %v56
  %v360 = vunpack.c.l.b16 %v57
  %v361 = vunpack.c.h.b16 %v57
  %v362 = vunpack.c.l.b16 %v58
  %v363 = vunpack.c.h.b16 %v58
  %v364 = vunpack.c.l.b16 %v59
  %v365 = vunpack.c.l.b16 %v60
  %v366 = vunpack.c.h.b16 %v60
  %v367 = vunpack.c.l.b16 %v61
  %v368 = vunpack.c.h.b16 %v61
  %v369 = vunpack.c.l.b16 %v62
  %v370 = vunpack.c.l.b16 %v63
  %v371 = vunpack.c.h.b16 %v63
  %v372 = vunpack.c.l.b16 %v64
  %v373 = vunpack.c.h.b16 %v64
  %v374 = vunpack.c.l.b16 %v65
  %v375 = vunpack.c.l.b16 %v66
  %v376 = vunpack.c.h.b16 %v66
  %v377 = vunpack.c.l.b16 %v67
  %v378 = vunpack.c.h.b16 %v67
  %v379 = vunpack.c.l.b16 %v68
  %v380 = vunpack.c.l.b16 %v69
  %v381 = vunpack.c.h.b16 %v69
  %v382 = vunpack.c.l.b16 %v70
  %v383 = vunpack.c.h.b16 %v70
  %v384 = vunpack.c.l.b16 %v71
  %v385 = vunpack.c.l.b16 %v72
  %v386 = vunpack.c.h.b16 %v72
  %v387 = vunpack.c.l.b16 %v73
  %v388 = vunpack.c.h.b16 %v73
  %v389 = vunpack.c.l.b16 %v74
  %v390 = vunpack.c.l.b16 %v75
  %v391 = vunpack.c.h.b16 %v75
  %v392 = vunpack.c.l.b16 %v76
  %v393 = vunpack.c.h.b16 %v76
  %v394 = vunpack.c.l.b16 %v77
  %v395 = vunpack.c.l.b16 %v78
  %v396 = vunpack.c.h.b16 %v78
  %v397 = vunpack.c.l.b16 %v79
  %v398 = vunpack.c.h.b16 %v79
  %v399 = vunpack.c.l.b16 %v80
  %v400 = vunpack.c.l.b16 %v81
  %v401 = vunpack.c.h.b16 %v81
  %v402 = vunpack.c.l.b16 %v82
  %v403 = vunpack.c.h.b16 %v82
  %v404 = vunpack.c.l.b16 %v83
  %v405 = vunpack.c.l.b16 %v84
  %v406 = vunpack.c.h.b16 %v84
  %v407 = vunpack.c.l.b16 %v85
  %v408 = vunpack.c.h.b16 %v85
  %v409 = vunpack.c.l.b16 %v86
  %v410 = vunpack.c.l.b16 %v87
  %v411 = vunpack.c.h.b16 %v87
  %v412 = vunpack.c.l.b16 %v88
  %v413 = vunpack.c.h.b16 %v88
  %v414 = vunpack.c.l.b16 %v89
  %v415 = vunpack.c.l.b16 %v90
  %v416 = vunpack.c.h.b16 %v90
  %v417 = vunpack.c.l.b16 %v91
  %v418 = vunpack.c.h.b16 %v91
  %v419 = vunpack.c.l.b16 %v92
  %v420 = vunpack.c.l.b16 %v93
  %v421 = vunpack.c.h.b16 %v93
  %v422 = vunpack.c.l.b16 %v94
  %v423 = vunpack.c.h.b16 %v94
  %v424 = vunpack.c.l.b16 %v95
  %v425 = vunpack.c.l.b16 %v96
  %v426 = vunpack.c.h.b16 %v96
  %v427 = vunpack.c.l.b16 %v97
  %v428 = vunpack.c.h.b16 %v97
  %v429 = vunpack.c.l.b16 %v98
  %v430 = vunpack.c.l.b16 %v99
  %v431 = vunpack.c.h.b16 %v99
  %v432 = vunpack.c.l.b16 %v100
  %v433 = vunpack.c.h.b16 %v100
  %v434 = vunpack.c.l.b16 %v101
  %v435 = vunpack.c.l.b16 %v102
  %v436 = vunpack.c.h.b16 %v102
  %v437 = vunpack.c.l.b16 %v103
  %v438 = vunpack.c.h.b16 %v103
  %v439 = vunpack.c.l.b16 %v104
  %v440 = vunpack.c.l.b16 %v105
  %v441 = vunpack.c.h.b16 %v105
  %v442 = vunpack.c.l.b16 %v106
  %v443 = vunpack.c.h.b16 %v106
  %v444 = vunpack.c.l.b16 %v107
  %v445 = vunpack.c.l.b16 %v108
  %v446 = vunpack.c.h.b16 %v108
  %v447 = vunpack.c.l.b16 %v109
  %v448 = vunpack.c.h.b16 %v109
  %v449 = vunpack.c.l.b16 %v110
  %v450 = vunpack.c.l.b16 %v111
  %v451 = vunpack.c.h.b16 %v111
  %v452 = vunpack.c.l.b16 %v112
  %v453 = vunpack.c.h.b16 %v112
  %v454 = vunpack.c.l.b16 %v113
  %v455 = vunpack.c.l.b16 %v114
  %v456 = vunpack.c.h.b16 %v114
  %v457 = vunpack.c.l.b16 %v115
  %v458 = vunpack.c.h.b16 %v115
  %v459 = vunpack.c.l.b16 %v116
  %v460 = vpack.c.b16 %v305, %v300
  %v461 = vpack.c.b16 %v306, %v301
  %v462 = vpack.c.b16 %v307, %v302
  %v463 = vpack.c.b16 %v308, %v303
  %v464 = vpack.c.b16 %v309, %v304
  %v465 = vpack.c.b16 %v315, %v310
  %v466 = vpack.c.b16 %v316, %v311
  %v467 = vpack.c.b16 %v317, %v312
  %v468 = vpack.c.b16 %v318, %v313
  %v469 = vpack.c.b16 %v319, %v314
  %v470 = vpack.c.b16 %v325, %v320
  %v471 = vpack.c.b16 %v326, %v321
  %v472 = vpack.c.b16 %v327, %v322
  %v473 = vpack.c.b16 %v328, %v323
  %v474 = vpack.c.b16 %v329, %v324
  %v475 = vpack.c.b16 %v335, %v330
  %v476 = vpack.c.b16 %v336, %v331
  %v477 = vpack.c.b16 %v337, %v332
  %v478 = vpack.c.b16 %v338, %v333
  %v479 = vpack.c.b16 %v339, %v334
  %v480 = vpack.c.b16 %v345, %v340
  %v481 = vpack.c.b16 %v346, %v341
  %v482 = vpack.c.b16 %v347, %v342
  %v483 = vpack.c.b16 %v348, %v343
  %v484 = vpack.c.b16 %v349, %v344
  %v485 = vpack.c.b16 %v355, %v350
  %v486 = vpack.c.b16 %v356, %v351
  %v487 = vpack.c.b16 %v357, %v352
  %v488 = vpack.c.b16 %v358, %v353
  %v489 = vpack.c.b16 %v359, %v354
  %v490 = vpack.c.b16 %v365, %v360
  %v491 = vpack.c.b16 %v366, %v361
  %v492 = vpack.c.b16 %v367, %v362
  %v493 = vpack.c.b16 %v368, %v363
  %v494 = vpack.c.b16 %v369, %v364
  %v495 = vpack.c.b16 %v375, %v370
  %v496 = vpack.c.b16 %v376, %v371
  %v497 = vpack.c.b16 %v377, %v372
  %v498 = vpack.c.b16 %v378, %v373
  %v499 = vpack.c.b16 %v379, %v374
  %v500 = vpack.c.b16 %v385, %v380
  %v501 = vpack.c.b16 %v386, %v381
  %v502 = vpack.c.b16 %v387, %v382
  %v503 = vpack.c.b16 %v388, %v383
  %v504 = vpack.c.b16 %v389, %v384
  %v505 = vpack.c.b16 %v395, %v390
  %v506 = vpack.c.b16 %v396, %v391
  %v507 = vpack.c.b16 %v397, %v392
  %v508 = vpack.c.b16 %v398, %v393
  %v509 = vpack.c.b16 %v399, %v394
  %v510 = vpack.c.b16 %v405, %v400
  %v511 = vpack.c.b16 %v406, %v401
  %v512 = vpack.c.b16 %v407, %v402
  %v513 = vpack.c.b16 %v408, %v403
  %v514 = vpack.c.b16 %v409, %v404
  %v515 = vpack.c.b16 %v415, %v410
  %v516 = vpack.c.b16 %v416, %v411
  %v517 = vpack.c.b16 %v417, %v412
  %v518 = vpack.c.b16 %v418, %v413
  %v519 = vpack.c.b16 %v419, %v414
  %v520 = vpack.c.b16 %v425, %v420
  %v521 = vpack.c.b16 %v426, %v421
  %v522 = vpack.c.b16 %v427, %v422
  %v523 = vpack.c.b16 %v428, %v423
  %v524 = vpack.c.b16 %v429, %v424
  %v525 = vpack.c.b16 %v435, %v430
  %v526 = vpack.c.b16 %v436, %v431
  %v527 = vpack.c.b16 %v437, %v432
  %v528 = vpack.c.b16 %v438, %v433
  %v529 = vpack.c.b16 %v439, %v434
  %v530 = vpack.c.b16 %v445, %v440
  %v531 = vpack.c.b16 %v446, %v441
  %v532 = vpack.c.b16 %v447, %v442
  %v533 = vpack.c.b16 %v448, %v443
  %v534 = vpack.c.b16 %v449, %v444
  %v535 = vpack.c.b16 %v455, %v450
  %v536 = vpack.c.b16 %v456, %v451
  %v537 = vpack.c.b16 %v457, %v452
  %v538 = vpack.c.b16 %v458, %v453
  %v539 = vpack.c.b16 %v459, %v454
  %v700 = vunpack.c.l.b16 %v117
  %v701 = vunpack.c.l.b16 %v118
  %v702 = vunpack.c.l.b16 %v119
  %v703 = vunpack.c.l.b16 %v120
  %v704 = vunpack.c.l.b16 %v121
  %v705 = vunpack.c.l.b16 %v122
  %v706 = vunpack.c.l.b16 %v123
  %v707 = vunpack.c.l.b16 %v124
  %v708 = vunpack.c.l.b16 %v125
  %v709 = vunpack.c.l.b16 %v126
  %v710 = vunpack.c.l.b16 %v127
  %v711 = vunpack.c.l.b16 %v128
  %v712 = vunpack.c.l.b16 %v129
  %v713 = vunpack.c.l.b16 %v130
  %v714 = vunpack.c.l.b16 %v131
  %v715 = vunpack.c.l.b16 %v132
  %v716 = vunpack.c.l.b16 %v133
  %v717 = vunpack.c.l.b16 %v134
  %v718 = vunpack.c.l.b16 %v135
  %v719 = vunpack.c.l.b16 %v136
  %v720 = vunpack.c.l.b16 %v137
  %v721 = vunpack.c.l.b16 %v138
  %v722 = vunpack.c.l.b16 %v139
  %v723 = vunpack.c.l.b16 %v140
  %v724 = vunpack.c.l.b16 %v141
  %v725 = vunpack.c.l.b16 %v142
  %v726 = vunpack.c.l.b16 %v143
  %v727 = vunpack.c.l.b16 %v144
  %v728 = vunpack.c.l.b16 %v145
  %v729 = vunpack.c.l.b16 %v146
  %v730 = vunpack.c.l.b16 %v147
  %v731 = vunpack.c.l.b16 %v148
  %v732 = vunpack.c.l.b16 %v149
  %v733 = vunpack.c.l.b16 %v150
  %v734 = vunpack.c.l.b16 %v151
  %v735 = vunpack.c.l.b16 %v152
  %v736 = vunpack.c.l.b16 %v153
  %v737 = vunpack.c.l.b16 %v154
  %v738 = vunpack.c.l.b16 %v155
  %v739 = vunpack.c.l.b16 %v156
  %v740 = vunpack.c.l.b16 %v157
  %v741 = vunpack.c.l.b16 %v158
  %v742 = vunpack.c.l.b16 %v159
  %v743 = vunpack.c.l.b16 %v160
  %v744 = vunpack.c.l.b16 %v161
  %v745 = vunpack.c.l.b16 %v162
  %v746 = vunpack.c.l.b16 %v163
  %v747 = vunpack.c.l.b16 %v164
  %v748 = vunpack.c.l.b16 %v165
  %v749 = vunpack.c.l.b16 %v166
  %v750 = vunpack.c.l.b16 %v167
  %v751 = vunpack.c.l.b16 %v168
  %v752 = vunpack.c.l.b16 %v169
  %v753 = vunpack.c.l.b16 %v170
  %v754 = vunpack.c.l.b16 %v171
  %v755 = vunpack.c.l.b16 %v172
  %v756 = vunpack.c.l.b16 %v173
  %v757 = vunpack.c.l.b16 %v174
  %v758 = vunpack.c.l.b16 %v175
  %v759 = vunpack.c.l.b16 %v176
  %v760 = vunpack.c.l.b16 %v177
  %v761 = vunpack.c.l.b16 %v178
  %v762 = vunpack.c.l.b16 %v179
  %v763 = vunpack.c.l.b16 %v180
  %v764 = vunpack.c.l.b16 %v181
  %v765 = vunpack.c.l.b16 %v182
  %v766 = vunpack.c.l.b16 %v183
  %v767 = vunpack.c.l.b16 %v184
  %v768 = vunpack.c.l.b16 %v185
  %v769 = vunpack.c.l.b16 %v186
  %v770 = vunpack.c.l.b16 %v187
  %v771 = vunpack.c.l.b16 %v188
  %v772 = vunpack.c.l.b16 %v189
  %v773 = vunpack.c.l.b16 %v190
  %v774 = vunpack.c.l.b16 %v191
  %v775 = vunpack.c.l.b16 %v192
  %v776 = vunpack.c.l.b16 %v193
  %v777 = vunpack.c.l.b16 %v194
  %v778 = vunpack.c.l.b16 %v195
  %v779 = vunpack.c.l.b16 %v196
  %v780 = vpack.c.b16 %v701, %v700
  %v781 = vpack.c.b16 %v703, %v702
  %v782 = vpack.c.b16 %v705, %v704
  %v783 = vpack.c.b16 %v707, %v706
  %v784 = vpack.c.b16 %v709, %v708
  %v785 = vpack.c.b16 %v711, %v710
  %v786 = vpack.c.b16 %v713, %v712
  %v787 = vpack.c.b16 %v715, %v714
  %v788 = vpack.c.b16 %v717, %v716
  %v789 = vpack.c.b16 %v719, %v718
  %v790 = vpack.c.b16 %v721, %v720
  %v791 = vpack.c.b16 %v723, %v722
  %v792 = vpack.c.b16 %v725, %v724
  %v793 = vpack.c.b16 %v727, %v726
  %v794 = vpack.c.b16 %v729, %v728
  %v795 = vpack.c.b16 %v731, %v730
  %v796 = vpack.c.b16 %v733, %v732
  %v797 = vpack.c.b16 %v735, %v734
  %v798 = vpack.c.b16 %v737, %v736
  %v799 = vpack.c.b16 %v739, %v738
  %v800 = vpack.c.b16 %v741, %v740
  %v801 = vpack.c.b16 %v743, %v742
  %v802 = vpack.c.b16 %v745, %v744
  %v803 = vpack.c.b16 %v747, %v746
  %v804 = vpack.c.b16 %v749, %v748
  %v805 = vpack.c.b16 %v751, %v750
  %v806 = vpack.c.b16 %v753, %v752
  %v807 = vpack.c.b16 %v755, %v754
  %v808 = vpack.c.b16 %v757, %v756
  %v809 = vpack.c.b16 %v759, %v758
  %v810 = vpack.c.b16 %v761, %v760
  %v811 = vpack.c.b16 %v763, %v762
  %v812 = vpack.c.b16 %v765, %v764
  %v813 = vpack.c.b16 %v767, %v766
  %v814 = vpack.c.b16 %v769, %v768
  %v815 = vpack.c.b16 %v771, %v770
  %v816 = vpack.c.b16 %v773, %v772
  %v817 = vpack.c.b16 %v775, %v774
  %v818 = vpack.c.b16 %v777, %v776
  %v819 = vpack.c.b16 %v779, %v778
  %860 = vmatprep.subr.bf16.mxu0 0
  %861 = vmatpush1.bf16.msra.mxu0 %v787
  %862 = vmatprep.subr.bf16.mxu0 0
  %863 = vmatpush1.bf16.msra.mxu0 %v786
  %864 = vmatprep.subr.bf16.mxu0 0
  %865 = vmatpush1.bf16.msra.mxu0 %v785
  %866 = vmatprep.subr.bf16.mxu0 0
  %867 = vmatpush1.bf16.msra.mxu0 %v784
  %868 = vmatprep.subr.bf16.mxu0 0
  %869 = vmatpush1.bf16.msra.mxu0 %v783
  %870 = vmatprep.subr.bf16.mxu0 0
  %871 = vmatpush1.bf16.msra.mxu0 %v782
  %872 = vmatprep.subr.bf16.mxu0 0
  %873 = vmatpush1.bf16.msra.mxu0 %v781
  %874 = vmatprep.subr.bf16.mxu0 0
  %875 = vmatpush1.bf16.msra.mxu0 %v780
  %876 = vmatprep.subr.bf16.mxu0 0
  %877 = vmatpush2.bf16.msra.mxu0 %v795
  %878 = vmatprep.subr.bf16.mxu0 0
  %879 = vmatpush2.bf16.msra.mxu0 %v794
  %880 = vmatprep.subr.bf16.mxu0 0
  %881 = vmatpush2.bf16.msra.mxu0 %v793
  %882 = vmatprep.subr.bf16.mxu0 0
  %883 = vmatpush2.bf16.msra.mxu0 %v792
  %884 = vmatprep.subr.bf16.mxu0 0
  %885 = vmatpush2.bf16.msra.mxu0 %v791
  %886 = vmatprep.subr.bf16.mxu0 0
  %887 = vmatpush2.bf16.msra.mxu0 %v790
  %888 = vmatprep.subr.bf16.mxu0 0
  %889 = vmatpush2.bf16.msra.mxu0 %v789
  %890 = vmatprep.subr.bf16.mxu0 0
  %891 = vmatpush2.bf16.msra.mxu0 %v788
  %892 = vmatprep.mubr.bf16.mxu0 %v461
  %893 = vmatmul.mubr.bf16.gmra.mxu0 %v460
  %v894 = vpop.f32.mrf.mxu0
  %v895 = vadd.f32 %v202, %v894
  %v896 = vpop.f32.mrf.mxu0
  %v897 = vpop.f32.mrf.mxu0
  %v898 = vadd.f32 %v202, %v897
  %v899 = vpop.f32.mrf.mxu0
  %900 = vmatprep.mubr.bf16.mxu0 %v466
  %901 = vmatmul.mubr.bf16.gmra.mxu0 %v465
  %v902 = vpop.f32.mrf.mxu0
  %v903 = vadd.f32 %v202, %v902
  %v904 = vpop.f32.mrf.mxu0
  %v905 = vpop.f32.mrf.mxu0
  %v906 = vadd.f32 %v202, %v905
  %v907 = vpop.f32.mrf.mxu0
  %908 = vmatprep.mubr.bf16.mxu0 %v471
  %909 = vmatmul.mubr.bf16.gmra.mxu0 %v470
  %v910 = vpop.f32.mrf.mxu0
  %v911 = vadd.f32 %v202, %v910
  %v912 = vpop.f32.mrf.mxu0
  %v913 = vpop.f32.mrf.mxu0
  %v914 = vadd.f32 %v202, %v913
  %v915 = vpop.f32.mrf.mxu0
  %916 = vmatprep.mubr.bf16.mxu0 %v476
  %917 = vmatmul.mubr.bf16.gmra.mxu0 %v475
  %v918 = vpop.f32.mrf.mxu0
  %v919 = vadd.f32 %v202, %v918
  %v920 = vpop.f32.mrf.mxu0
  %v921 = vpop.f32.mrf.mxu0
  %v922 = vadd.f32 %v202, %v921
  %v923 = vpop.f32.mrf.mxu0
  %924 = vmatprep.mubr.bf16.mxu0 %v481
  %925 = vmatmul.mubr.bf16.gmra.mxu0 %v480
  %v926 = vpop.f32.mrf.mxu0
  %v927 = vadd.f32 %v202, %v926
  %v928 = vpop.f32.mrf.mxu0
  %v929 = vpop.f32.mrf.mxu0
  %v930 = vadd.f32 %v202, %v929
  %v931 = vpop.f32.mrf.mxu0
  %932 = vmatprep.mubr.bf16.mxu0 %v486
  %933 = vmatmul.mubr.bf16.gmra.mxu0 %v485
  %v934 = vpop.f32.mrf.mxu0
  %v935 = vadd.f32 %v202, %v934
  %v936 = vpop.f32.mrf.mxu0
  %v937 = vpop.f32.mrf.mxu0
  %v938 = vadd.f32 %v202, %v937
  %v939 = vpop.f32.mrf.mxu0
  %940 = vmatprep.mubr.bf16.mxu0 %v491
  %941 = vmatmul.mubr.bf16.gmra.mxu0 %v490
  %v942 = vpop.f32.mrf.mxu0
  %v943 = vadd.f32 %v202, %v942
  %v944 = vpop.f32.mrf.mxu0
  %v945 = vpop.f32.mrf.mxu0
  %v946 = vadd.f32 %v202, %v945
  %v947 = vpop.f32.mrf.mxu0
  %948 = vmatprep.mubr.bf16.mxu0 %v496
  %949 = vmatmul.mubr.bf16.gmra.mxu0 %v495
  %v950 = vpop.f32.mrf.mxu0
  %v951 = vadd.f32 %v202, %v950
  %v952 = vpop.f32.mrf.mxu0
  %v953 = vpop.f32.mrf.mxu0
  %v954 = vadd.f32 %v202, %v953
  %v955 = vpop.f32.mrf.mxu0
  %956 = vmatprep.mubr.bf16.mxu0 %v501
  %957 = vmatmul.mubr.bf16.gmra.mxu0 %v500
  %v958 = vpop.f32.mrf.mxu0
  %v959 = vadd.f32 %v202, %v958
  %v960 = vpop.f32.mrf.mxu0
  %v961 = vpop.f32.mrf.mxu0
  %v962 = vadd.f32 %v202, %v961
  %v963 = vpop.f32.mrf.mxu0
  %964 = vmatprep.mubr.bf16.mxu0 %v506
  %965 = vmatmul.mubr.bf16.gmra.mxu0 %v505
  %v966 = vpop.f32.mrf.mxu0
  %v967 = vadd.f32 %v202, %v966
  %v968 = vpop.f32.mrf.mxu0
  %v969 = vpop.f32.mrf.mxu0
  %v970 = vadd.f32 %v202, %v969
  %v971 = vpop.f32.mrf.mxu0
  %972 = vmatprep.mubr.bf16.mxu0 %v511
  %973 = vmatmul.mubr.bf16.gmra.mxu0 %v510
  %v974 = vpop.f32.mrf.mxu0
  %v975 = vadd.f32 %v202, %v974
  %v976 = vpop.f32.mrf.mxu0
  %v977 = vpop.f32.mrf.mxu0
  %v978 = vadd.f32 %v202, %v977
  %v979 = vpop.f32.mrf.mxu0
  %980 = vmatprep.mubr.bf16.mxu0 %v516
  %981 = vmatmul.mubr.bf16.gmra.mxu0 %v515
  %v982 = vpop.f32.mrf.mxu0
  %v983 = vadd.f32 %v202, %v982
  %v984 = vpop.f32.mrf.mxu0
  %v985 = vpop.f32.mrf.mxu0
  %v986 = vadd.f32 %v202, %v985
  %v987 = vpop.f32.mrf.mxu0
  %988 = vmatprep.mubr.bf16.mxu0 %v521
  %989 = vmatmul.mubr.bf16.gmra.mxu0 %v520
  %v990 = vpop.f32.mrf.mxu0
  %v991 = vadd.f32 %v202, %v990
  %v992 = vpop.f32.mrf.mxu0
  %v993 = vpop.f32.mrf.mxu0
  %v994 = vadd.f32 %v202, %v993
  %v995 = vpop.f32.mrf.mxu0
  %996 = vmatprep.mubr.bf16.mxu0 %v526
  %997 = vmatmul.mubr.bf16.gmra.mxu0 %v525
  %v998 = vpop.f32.mrf.mxu0
  %v999 = vadd.f32 %v202, %v998
  %v1000 = vpop.f32.mrf.mxu0
  %v1001 = vpop.f32.mrf.mxu0
  %v1002 = vadd.f32 %v202, %v1001
  %v1003 = vpop.f32.mrf.mxu0
  %1004 = vmatprep.mubr.bf16.mxu0 %v531
  %1005 = vmatmul.mubr.bf16.gmra.mxu0 %v530
  %v1006 = vpop.f32.mrf.mxu0
  %v1007 = vadd.f32 %v202, %v1006
  %v1008 = vpop.f32.mrf.mxu0
  %v1009 = vpop.f32.mrf.mxu0
  %v1010 = vadd.f32 %v202, %v1009
  %v1011 = vpop.f32.mrf.mxu0
  %1012 = vmatprep.mubr.bf16.mxu0 %v536
  %1013 = vmatmul.mubr.bf16.gmra.mxu0 %v535
  %v1014 = vpop.f32.mrf.mxu0
  %v1015 = vadd.f32 %v202, %v1014
  %v1016 = vpop.f32.mrf.mxu0
  %v1017 = vpop.f32.mrf.mxu0
  %v1018 = vadd.f32 %v202, %v1017
  %v1019 = vpop.f32.mrf.mxu0
  %1020 = vdwg.mxu0
  %1021 = vmatprep.subr.bf16.mxu0 0
  %1022 = vmatpush1.bf16.msra.mxu0 %v803
  %1023 = vmatprep.subr.bf16.mxu0 0
  %1024 = vmatpush1.bf16.msra.mxu0 %v802
  %1025 = vmatprep.subr.bf16.mxu0 0
  %1026 = vmatpush1.bf16.msra.mxu0 %v801
  %1027 = vmatprep.subr.bf16.mxu0 0
  %1028 = vmatpush1.bf16.msra.mxu0 %v800
  %1029 = vmatprep.subr.bf16.mxu0 0
  %1030 = vmatpush1.bf16.msra.mxu0 %v799
  %1031 = vmatprep.subr.bf16.mxu0 0
  %1032 = vmatpush1.bf16.msra.mxu0 %v798
  %1033 = vmatprep.subr.bf16.mxu0 0
  %1034 = vmatpush1.bf16.msra.mxu0 %v797
  %1035 = vmatprep.subr.bf16.mxu0 0
  %1036 = vmatpush1.bf16.msra.mxu0 %v796
  %1037 = vmatprep.subr.bf16.mxu0 0
  %1038 = vmatpush2.bf16.msra.mxu0 %v811
  %1039 = vmatprep.subr.bf16.mxu0 0
  %1040 = vmatpush2.bf16.msra.mxu0 %v810
  %1041 = vmatprep.subr.bf16.mxu0 0
  %1042 = vmatpush2.bf16.msra.mxu0 %v809
  %1043 = vmatprep.subr.bf16.mxu0 0
  %1044 = vmatpush2.bf16.msra.mxu0 %v808
  %1045 = vmatprep.subr.bf16.mxu0 0
  %1046 = vmatpush2.bf16.msra.mxu0 %v807
  %1047 = vmatprep.subr.bf16.mxu0 0
  %1048 = vmatpush2.bf16.msra.mxu0 %v806
  %1049 = vmatprep.subr.bf16.mxu0 0
  %1050 = vmatpush2.bf16.msra.mxu0 %v805
  %1051 = vmatprep.subr.bf16.mxu0 0
  %1052 = vmatpush2.bf16.msra.mxu0 %v804
  %1053 = vmatprep.mubr.bf16.mxu0 %v463
  %1054 = vmatmul.mubr.bf16.gmra.mxu0 %v462
  %v1055 = vpop.f32.mrf.mxu0
  %v1056 = vadd.f32 %v895, %v1055
  %v1057 = vpop.f32.mrf.mxu0
  %v1058 = vpop.f32.mrf.mxu0
  %v1059 = vadd.f32 %v898, %v1058
  %v1060 = vpop.f32.mrf.mxu0
  %1061 = vmatprep.mubr.bf16.mxu0 %v468
  %1062 = vmatmul.mubr.bf16.gmra.mxu0 %v467
  %v1063 = vpop.f32.mrf.mxu0
  %v1064 = vadd.f32 %v903, %v1063
  %v1065 = vpop.f32.mrf.mxu0
  %v1066 = vpop.f32.mrf.mxu0
  %v1067 = vadd.f32 %v906, %v1066
  %v1068 = vpop.f32.mrf.mxu0
  %1069 = vmatprep.mubr.bf16.mxu0 %v473
  %1070 = vmatmul.mubr.bf16.gmra.mxu0 %v472
  %v1071 = vpop.f32.mrf.mxu0
  %v1072 = vadd.f32 %v911, %v1071
  %v1073 = vpop.f32.mrf.mxu0
  %v1074 = vpop.f32.mrf.mxu0
  %v1075 = vadd.f32 %v914, %v1074
  %v1076 = vpop.f32.mrf.mxu0
  %1077 = vmatprep.mubr.bf16.mxu0 %v478
  %1078 = vmatmul.mubr.bf16.gmra.mxu0 %v477
  %v1079 = vpop.f32.mrf.mxu0
  %v1080 = vadd.f32 %v919, %v1079
  %v1081 = vpop.f32.mrf.mxu0
  %v1082 = vpop.f32.mrf.mxu0
  %v1083 = vadd.f32 %v922, %v1082
  %v1084 = vpop.f32.mrf.mxu0
  %1085 = vmatprep.mubr.bf16.mxu0 %v483
  %1086 = vmatmul.mubr.bf16.gmra.mxu0 %v482
  %v1087 = vpop.f32.mrf.mxu0
  %v1088 = vadd.f32 %v927, %v1087
  %v1089 = vpop.f32.mrf.mxu0
  %v1090 = vpop.f32.mrf.mxu0
  %v1091 = vadd.f32 %v930, %v1090
  %v1092 = vpop.f32.mrf.mxu0
  %1093 = vmatprep.mubr.bf16.mxu0 %v488
  %1094 = vmatmul.mubr.bf16.gmra.mxu0 %v487
  %v1095 = vpop.f32.mrf.mxu0
  %v1096 = vadd.f32 %v935, %v1095
  %v1097 = vpop.f32.mrf.mxu0
  %v1098 = vpop.f32.mrf.mxu0
  %v1099 = vadd.f32 %v938, %v1098
  %v1100 = vpop.f32.mrf.mxu0
  %1101 = vmatprep.mubr.bf16.mxu0 %v493
  %1102 = vmatmul.mubr.bf16.gmra.mxu0 %v492
  %v1103 = vpop.f32.mrf.mxu0
  %v1104 = vadd.f32 %v943, %v1103
  %v1105 = vpop.f32.mrf.mxu0
  %v1106 = vpop.f32.mrf.mxu0
  %v1107 = vadd.f32 %v946, %v1106
  %v1108 = vpop.f32.mrf.mxu0
  %1109 = vmatprep.mubr.bf16.mxu0 %v498
  %1110 = vmatmul.mubr.bf16.gmra.mxu0 %v497
  %v1111 = vpop.f32.mrf.mxu0
  %v1112 = vadd.f32 %v951, %v1111
  %v1113 = vpop.f32.mrf.mxu0
  %v1114 = vpop.f32.mrf.mxu0
  %v1115 = vadd.f32 %v954, %v1114
  %v1116 = vpop.f32.mrf.mxu0
  %1117 = vmatprep.mubr.bf16.mxu0 %v503
  %1118 = vmatmul.mubr.bf16.gmra.mxu0 %v502
  %v1119 = vpop.f32.mrf.mxu0
  %v1120 = vadd.f32 %v959, %v1119
  %v1121 = vpop.f32.mrf.mxu0
  %v1122 = vpop.f32.mrf.mxu0
  %v1123 = vadd.f32 %v962, %v1122
  %v1124 = vpop.f32.mrf.mxu0
  %1125 = vmatprep.mubr.bf16.mxu0 %v508
  %1126 = vmatmul.mubr.bf16.gmra.mxu0 %v507
  %v1127 = vpop.f32.mrf.mxu0
  %v1128 = vadd.f32 %v967, %v1127
  %v1129 = vpop.f32.mrf.mxu0
  %v1130 = vpop.f32.mrf.mxu0
  %v1131 = vadd.f32 %v970, %v1130
  %v1132 = vpop.f32.mrf.mxu0
  %1133 = vmatprep.mubr.bf16.mxu0 %v513
  %1134 = vmatmul.mubr.bf16.gmra.mxu0 %v512
  %v1135 = vpop.f32.mrf.mxu0
  %v1136 = vadd.f32 %v975, %v1135
  %v1137 = vpop.f32.mrf.mxu0
  %v1138 = vpop.f32.mrf.mxu0
  %v1139 = vadd.f32 %v978, %v1138
  %v1140 = vpop.f32.mrf.mxu0
  %1141 = vmatprep.mubr.bf16.mxu0 %v518
  %1142 = vmatmul.mubr.bf16.gmra.mxu0 %v517
  %v1143 = vpop.f32.mrf.mxu0
  %v1144 = vadd.f32 %v983, %v1143
  %v1145 = vpop.f32.mrf.mxu0
  %v1146 = vpop.f32.mrf.mxu0
  %v1147 = vadd.f32 %v986, %v1146
  %v1148 = vpop.f32.mrf.mxu0
  %1149 = vmatprep.mubr.bf16.mxu0 %v523
  %1150 = vmatmul.mubr.bf16.gmra.mxu0 %v522
  %v1151 = vpop.f32.mrf.mxu0
  %v1152 = vadd.f32 %v991, %v1151
  %v1153 = vpop.f32.mrf.mxu0
  %v1154 = vpop.f32.mrf.mxu0
  %v1155 = vadd.f32 %v994, %v1154
  %v1156 = vpop.f32.mrf.mxu0
  %1157 = vmatprep.mubr.bf16.mxu0 %v528
  %1158 = vmatmul.mubr.bf16.gmra.mxu0 %v527
  %v1159 = vpop.f32.mrf.mxu0
  %v1160 = vadd.f32 %v999, %v1159
  %v1161 = vpop.f32.mrf.mxu0
  %v1162 = vpop.f32.mrf.mxu0
  %v1163 = vadd.f32 %v1002, %v1162
  %v1164 = vpop.f32.mrf.mxu0
  %1165 = vmatprep.mubr.bf16.mxu0 %v533
  %1166 = vmatmul.mubr.bf16.gmra.mxu0 %v532
  %v1167 = vpop.f32.mrf.mxu0
  %v1168 = vadd.f32 %v1007, %v1167
  %v1169 = vpop.f32.mrf.mxu0
  %v1170 = vpop.f32.mrf.mxu0
  %v1171 = vadd.f32 %v1010, %v1170
  %v1172 = vpop.f32.mrf.mxu0
  %1173 = vmatprep.mubr.bf16.mxu0 %v538
  %1174 = vmatmul.mubr.bf16.gmra.mxu0 %v537
  %v1175 = vpop.f32.mrf.mxu0
  %v1176 = vadd.f32 %v1015, %v1175
  %v1177 = vpop.f32.mrf.mxu0
  %v1178 = vpop.f32.mrf.mxu0
  %v1179 = vadd.f32 %v1018, %v1178
  %v1180 = vpop.f32.mrf.mxu0
  %1181 = vdwg.mxu0
  %1182 = vmatprep.subr.bf16.mxu0 0
  %1183 = vmatpush1.bf16.msra.mxu0 %v819
  %1184 = vmatprep.subr.bf16.mxu0 0
  %1185 = vmatpush1.bf16.msra.mxu0 %v818
  %1186 = vmatprep.subr.bf16.mxu0 0
  %1187 = vmatpush1.bf16.msra.mxu0 %v817
  %1188 = vmatprep.subr.bf16.mxu0 0
  %1189 = vmatpush1.bf16.msra.mxu0 %v816
  %1190 = vmatprep.subr.bf16.mxu0 0
  %1191 = vmatpush1.bf16.msra.mxu0 %v815
  %1192 = vmatprep.subr.bf16.mxu0 0
  %1193 = vmatpush1.bf16.msra.mxu0 %v814
  %1194 = vmatprep.subr.bf16.mxu0 0
  %1195 = vmatpush1.bf16.msra.mxu0 %v813
  %1196 = vmatprep.subr.bf16.mxu0 0
  %1197 = vmatpush1.bf16.msra.mxu0 %v812
  %1198 = vmatprep.subr.bf16.mxu0 0
  %1199 = vmatpush2.bf16.msra.mxu0 0
  %1200 = vmatprep.subr.bf16.mxu0 0
  %1201 = vmatpush2.bf16.msra.mxu0 0
  %1202 = vmatprep.subr.bf16.mxu0 0
  %1203 = vmatpush2.bf16.msra.mxu0 0
  %1204 = vmatprep.subr.bf16.mxu0 0
  %1205 = vmatpush2.bf16.msra.mxu0 0
  %1206 = vmatprep.subr.bf16.mxu0 0
  %1207 = vmatpush2.bf16.msra.mxu0 0
  %1208 = vmatprep.subr.bf16.mxu0 0
  %1209 = vmatpush2.bf16.msra.mxu0 0
  %1210 = vmatprep.subr.bf16.mxu0 0
  %1211 = vmatpush2.bf16.msra.mxu0 0
  %1212 = vmatprep.subr.bf16.mxu0 0
  %1213 = vmatpush2.bf16.msra.mxu0 0
  %1214 = vmatprep.mubr.bf16.mxu0 0
  %1215 = vmatmul.mubr.bf16.gmra.mxu0 %v464
  %v1216 = vpop.f32.mrf.mxu0
  %v1217 = vadd.f32 %v1056, %v1216
  %v1218 = vpop.f32.mrf.mxu0
  %v1219 = vpop.f32.mrf.mxu0
  %v1220 = vadd.f32 %v1059, %v1219
  %v1221 = vpop.f32.mrf.mxu0
  %1222 = vmatprep.mubr.bf16.mxu0 0
  %1223 = vmatmul.mubr.bf16.gmra.mxu0 %v469
  %v1224 = vpop.f32.mrf.mxu0
  %v1225 = vadd.f32 %v1064, %v1224
  %v1226 = vpop.f32.mrf.mxu0
  %v1227 = vpop.f32.mrf.mxu0
  %v1228 = vadd.f32 %v1067, %v1227
  %v1229 = vpop.f32.mrf.mxu0
  %1230 = vmatprep.mubr.bf16.mxu0 0
  %1231 = vmatmul.mubr.bf16.gmra.mxu0 %v474
  %v1232 = vpop.f32.mrf.mxu0
  %v1233 = vadd.f32 %v1072, %v1232
  %v1234 = vpop.f32.mrf.mxu0
  %v1235 = vpop.f32.mrf.mxu0
  %v1236 = vadd.f32 %v1075, %v1235
  %v1237 = vpop.f32.mrf.mxu0
  %1238 = vmatprep.mubr.bf16.mxu0 0
  %1239 = vmatmul.mubr.bf16.gmra.mxu0 %v479
  %v1240 = vpop.f32.mrf.mxu0
  %v1241 = vadd.f32 %v1080, %v1240
  %v1242 = vpop.f32.mrf.mxu0
  %v1243 = vpop.f32.mrf.mxu0
  %v1244 = vadd.f32 %v1083, %v1243
  %v1245 = vpop.f32.mrf.mxu0
  %1246 = vmatprep.mubr.bf16.mxu0 0
  %1247 = vmatmul.mubr.bf16.gmra.mxu0 %v484
  %v1248 = vpop.f32.mrf.mxu0
  %v1249 = vadd.f32 %v1088, %v1248
  %v1250 = vpop.f32.mrf.mxu0
  %v1251 = vpop.f32.mrf.mxu0
  %v1252 = vadd.f32 %v1091, %v1251
  %v1253 = vpop.f32.mrf.mxu0
  %1254 = vmatprep.mubr.bf16.mxu0 0
  %1255 = vmatmul.mubr.bf16.gmra.mxu0 %v489
  %v1256 = vpop.f32.mrf.mxu0
  %v1257 = vadd.f32 %v1096, %v1256
  %v1258 = vpop.f32.mrf.mxu0
  %v1259 = vpop.f32.mrf.mxu0
  %v1260 = vadd.f32 %v1099, %v1259
  %v1261 = vpop.f32.mrf.mxu0
  %1262 = vmatprep.mubr.bf16.mxu0 0
  %1263 = vmatmul.mubr.bf16.gmra.mxu0 %v494
  %v1264 = vpop.f32.mrf.mxu0
  %v1265 = vadd.f32 %v1104, %v1264
  %v1266 = vpop.f32.mrf.mxu0
  %v1267 = vpop.f32.mrf.mxu0
  %v1268 = vadd.f32 %v1107, %v1267
  %v1269 = vpop.f32.mrf.mxu0
  %1270 = vmatprep.mubr.bf16.mxu0 0
  %1271 = vmatmul.mubr.bf16.gmra.mxu0 %v499
  %v1272 = vpop.f32.mrf.mxu0
  %v1273 = vadd.f32 %v1112, %v1272
  %v1274 = vpop.f32.mrf.mxu0
  %v1275 = vpop.f32.mrf.mxu0
  %v1276 = vadd.f32 %v1115, %v1275
  %v1277 = vpop.f32.mrf.mxu0
  %1278 = vmatprep.mubr.bf16.mxu0 0
  %1279 = vmatmul.mubr.bf16.gmra.mxu0 %v504
  %v1280 = vpop.f32.mrf.mxu0
  %v1281 = vadd.f32 %v1120, %v1280
  %v1282 = vpop.f32.mrf.mxu0
  %v1283 = vpop.f32.mrf.mxu0
  %v1284 = vadd.f32 %v1123, %v1283
  %v1285 = vpop.f32.mrf.mxu0
  %1286 = vmatprep.mubr.bf16.mxu0 0
  %1287 = vmatmul.mubr.bf16.gmra.mxu0 %v509
  %v1288 = vpop.f32.mrf.mxu0
  %v1289 = vadd.f32 %v1128, %v1288
  %v1290 = vpop.f32.mrf.mxu0
  %v1291 = vpop.f32.mrf.mxu0
  %v1292 = vadd.f32 %v1131, %v1291
  %v1293 = vpop.f32.mrf.mxu0
  %1294 = vmatprep.mubr.bf16.mxu0 0
  %1295 = vmatmul.mubr.bf16.gmra.mxu0 %v514
  %v1296 = vpop.f32.mrf.mxu0
  %v1297 = vadd.f32 %v1136, %v1296
  %v1298 = vpop.f32.mrf.mxu0
  %v1299 = vpop.f32.mrf.mxu0
  %v1300 = vadd.f32 %v1139, %v1299
  %v1301 = vpop.f32.mrf.mxu0
  %1302 = vmatprep.mubr.bf16.mxu0 0
  %1303 = vmatmul.mubr.bf16.gmra.mxu0 %v519
  %v1304 = vpop.f32.mrf.mxu0
  %v1305 = vadd.f32 %v1144, %v1304
  %v1306 = vpop.f32.mrf.mxu0
  %v1307 = vpop.f32.mrf.mxu0
  %v1308 = vadd.f32 %v1147, %v1307
  %v1309 = vpop.f32.mrf.mxu0
  %1310 = vmatprep.mubr.bf16.mxu0 0
  %1311 = vmatmul.mubr.bf16.gmra.mxu0 %v524
  %v1312 = vpop.f32.mrf.mxu0
  %v1313 = vadd.f32 %v1152, %v1312
  %v1314 = vpop.f32.mrf.mxu0
  %v1315 = vpop.f32.mrf.mxu0
  %v1316 = vadd.f32 %v1155, %v1315
  %v1317 = vpop.f32.mrf.mxu0
  %1318 = vmatprep.mubr.bf16.mxu0 0
  %1319 = vmatmul.mubr.bf16.gmra.mxu0 %v529
  %v1320 = vpop.f32.mrf.mxu0
  %v1321 = vadd.f32 %v1160, %v1320
  %v1322 = vpop.f32.mrf.mxu0
  %v1323 = vpop.f32.mrf.mxu0
  %v1324 = vadd.f32 %v1163, %v1323
  %v1325 = vpop.f32.mrf.mxu0
  %1326 = vmatprep.mubr.bf16.mxu0 0
  %1327 = vmatmul.mubr.bf16.gmra.mxu0 %v534
  %v1328 = vpop.f32.mrf.mxu0
  %v1329 = vadd.f32 %v1168, %v1328
  %v1330 = vpop.f32.mrf.mxu0
  %v1331 = vpop.f32.mrf.mxu0
  %v1332 = vadd.f32 %v1171, %v1331
  %v1333 = vpop.f32.mrf.mxu0
  %1334 = vmatprep.mubr.bf16.mxu0 0
  %1335 = vmatmul.mubr.bf16.gmra.mxu0 %v539
  %v1336 = vpop.f32.mrf.mxu0
  %v1337 = vadd.f32 %v1176, %v1336
  %v1338 = vpop.f32.mrf.mxu0
  %v1339 = vpop.f32.mrf.mxu0
  %v1340 = vadd.f32 %v1179, %v1339
  %v1341 = vpop.f32.mrf.mxu0
  %1342 = vdwg.mxu0
  %v1343 = vmax.f32 %v1217, 0.0
  %v1344 = vmax.f32 %v1220, 0.0
  %v1345 = vmax.f32 %v1225, 0.0
  %v1346 = vmax.f32 %v1228, 0.0
  %v1347 = vmax.f32 %v1233, 0.0
  %v1348 = vmax.f32 %v1236, 0.0
  %v1349 = vmax.f32 %v1241, 0.0
  %v1350 = vmax.f32 %v1244, 0.0
  %v1351 = vmax.f32 %v1249, 0.0
  %v1352 = vmax.f32 %v1252, 0.0
  %v1353 = vmax.f32 %v1257, 0.0
  %v1354 = vmax.f32 %v1260, 0.0
  %v1355 = vmax.f32 %v1265, 0.0
  %v1356 = vmax.f32 %v1268, 0.0
  %v1357 = vmax.f32 %v1273, 0.0
  %v1358 = vmax.f32 %v1276, 0.0
  %v1359 = vmax.f32 %v1281, 0.0
  %v1360 = vmax.f32 %v1284, 0.0
  %v1361 = vmax.f32 %v1289, 0.0
  %v1362 = vmax.f32 %v1292, 0.0
  %v1363 = vmax.f32 %v1297, 0.0
  %v1364 = vmax.f32 %v1300, 0.0
  %v1365 = vmax.f32 %v1305, 0.0
  %v1366 = vmax.f32 %v1308, 0.0
  %v1367 = vmax.f32 %v1313, 0.0
  %v1368 = vmax.f32 %v1316, 0.0
  %v1369 = vmax.f32 %v1321, 0.0
  %v1370 = vmax.f32 %v1324, 0.0
  %v1371 = vmax.f32 %v1329, 0.0
  %v1372 = vmax.f32 %v1332, 0.0
  %v1373 = vmax.f32 %v1337, 0.0
  %v1374 = vmax.f32 %v1340, 0.0
  %v1375 = vpack.c.bf16 %v1344, %v1343
  %v1376 = vpack.c.bf16 %v1346, %v1345
  %v1377 = vpack.c.bf16 %v1348, %v1347
  %v1378 = vpack.c.bf16 %v1350, %v1349
  %v1379 = vpack.c.bf16 %v1352, %v1351
  %v1380 = vpack.c.bf16 %v1354, %v1353
  %v1381 = vpack.c.bf16 %v1356, %v1355
  %v1382 = vpack.c.bf16 %v1358, %v1357
  %v1383 = vpack.c.bf16 %v1360, %v1359
  %v1384 = vpack.c.bf16 %v1362, %v1361
  %v1385 = vpack.c.bf16 %v1364, %v1363
  %v1386 = vpack.c.bf16 %v1366, %v1365
  %v1387 = vpack.c.bf16 %v1368, %v1367
  %v1388 = vpack.c.bf16 %v1370, %v1369
  %v1389 = vpack.c.bf16 %v1372, %v1371
  %v1390 = vpack.c.bf16 %v1374, %v1373
  %v1391 = vld [vmem:[%s3] sm:$0xf]
  %v1392 = vld [vmem:[%s3 + $0x4] sm:$0xf]
  %v1393 = vld [vmem:[%s3 + $0x8] sm:$0xf]
  %v1394 = vld [vmem:[%s3 + $0xc] sm:$0xf]
  %v1395 = vld [vmem:[%s3 + $0x10] sm:$0xf]
  %v1396 = vld [vmem:[%s3 + $0x14] sm:$0xf]
  %v1397 = vld [vmem:[%s3 + $0x18] sm:$0xf]
  %v1398 = vld [vmem:[%s3 + $0x1c] sm:$0xf]
  %v1399 = vld [vmem:[%s3 + $0x20] sm:$0xf]
  %v1400 = vld [vmem:[%s3 + $0x24] sm:$0xf]
  %v1401 = vld [vmem:[%s3 + $0x28] sm:$0xf]
  %v1402 = vld [vmem:[%s3 + $0x2c] sm:$0xf]
  %v1403 = vld [vmem:[%s3 + $0x30] sm:$0xf]
  %v1404 = vld [vmem:[%s3 + $0x34] sm:$0xf]
  %v1405 = vld [vmem:[%s3 + $0x38] sm:$0xf]
  %v1406 = vld [vmem:[%s3 + $0x3c] sm:$0xf]
  %v1407 = vld [vmem:[%s4] sm:$0x1]
  %v1409 = vlaneseq
  %v1410 = vshrl.u32 %v1409, 7
  %v1411 = vsub.s32 0, %v1410
  %v1412 = vrot.slane %v1407, %v1411
  %v1430 = vunpack.c.l.b16 %v1391
  %v1431 = vunpack.c.l.b16 %v1392
  %v1432 = vunpack.c.l.b16 %v1393
  %v1433 = vunpack.c.l.b16 %v1394
  %v1434 = vunpack.c.l.b16 %v1395
  %v1435 = vunpack.c.l.b16 %v1396
  %v1436 = vunpack.c.l.b16 %v1397
  %v1437 = vunpack.c.l.b16 %v1398
  %v1438 = vunpack.c.l.b16 %v1399
  %v1439 = vunpack.c.l.b16 %v1400
  %v1440 = vunpack.c.l.b16 %v1401
  %v1441 = vunpack.c.l.b16 %v1402
  %v1442 = vunpack.c.l.b16 %v1403
  %v1443 = vunpack.c.l.b16 %v1404
  %v1444 = vunpack.c.l.b16 %v1405
  %v1445 = vunpack.c.l.b16 %v1406
  %v1446 = vpack.c.b16 %v1431, %v1430
  %v1447 = vpack.c.b16 %v1433, %v1432
  %v1448 = vpack.c.b16 %v1435, %v1434
  %v1449 = vpack.c.b16 %v1437, %v1436
  %v1450 = vpack.c.b16 %v1439, %v1438
  %v1451 = vpack.c.b16 %v1441, %v1440
  %v1452 = vpack.c.b16 %v1443, %v1442
  %v1453 = vpack.c.b16 %v1445, %v1444
  %1462 = vmatprep.subr.bf16.mxu0 0
  %1463 = vmatpush1.bf16.msra.mxu0 %v1453
  %1464 = vmatprep.subr.bf16.mxu0 0
  %1465 = vmatpush1.bf16.msra.mxu0 %v1452
  %1466 = vmatprep.subr.bf16.mxu0 0
  %1467 = vmatpush1.bf16.msra.mxu0 %v1451
  %1468 = vmatprep.subr.bf16.mxu0 0
  %1469 = vmatpush1.bf16.msra.mxu0 %v1450
  %1470 = vmatprep.subr.bf16.mxu0 0
  %1471 = vmatpush1.bf16.msra.mxu0 %v1449
  %1472 = vmatprep.subr.bf16.mxu0 0
  %1473 = vmatpush1.bf16.msra.mxu0 %v1448
  %1474 = vmatprep.subr.bf16.mxu0 0
  %1475 = vmatpush1.bf16.msra.mxu0 %v1447
  %1476 = vmatprep.subr.bf16.mxu0 0
  %1477 = vmatpush1.bf16.msra.mxu0 %v1446
  %1478 = vmatprep.subr.bf16.mxu0 0
  %1479 = vmatpush2.bf16.msra.mxu0 0
  %1480 = vmatprep.subr.bf16.mxu0 0
  %1481 = vmatpush2.bf16.msra.mxu0 0
  %1482 = vmatprep.subr.bf16.mxu0 0
  %1483 = vmatpush2.bf16.msra.mxu0 0
  %1484 = vmatprep.subr.bf16.mxu0 0
  %1485 = vmatpush2.bf16.msra.mxu0 0
  %1486 = vmatprep.subr.bf16.mxu0 0
  %1487 = vmatpush2.bf16.msra.mxu0 0
  %1488 = vmatprep.subr.bf16.mxu0 0
  %1489 = vmatpush2.bf16.msra.mxu0 0
  %1490 = vmatprep.subr.bf16.mxu0 0
  %1491 = vmatpush2.bf16.msra.mxu0 0
  %1492 = vmatprep.subr.bf16.mxu0 0
  %1493 = vmatpush2.bf16.msra.mxu0 0
  %1494 = vmatprep.mubr.bf16.mxu0 0
  %1495 = vmatmul.mubr.bf16.gmra.mxu0 %v1375
  %v1496 = vpop.f32.mrf.mxu0
  %v1497 = vadd.f32 %v1412, %v1496
  %v1498 = vpop.f32.mrf.mxu0
  %v1499 = vpop.f32.mrf.mxu0
  %v1500 = vadd.f32 %v1412, %v1499
  %v1501 = vpop.f32.mrf.mxu0
  %1502 = vmatprep.mubr.bf16.mxu0 0
  %1503 = vmatmul.mubr.bf16.gmra.mxu0 %v1376
  %v1504 = vpop.f32.mrf.mxu0
  %v1505 = vadd.f32 %v1412, %v1504
  %v1506 = vpop.f32.mrf.mxu0
  %v1507 = vpop.f32.mrf.mxu0
  %v1508 = vadd.f32 %v1412, %v1507
  %v1509 = vpop.f32.mrf.mxu0
  %1510 = vmatprep.mubr.bf16.mxu0 0
  %1511 = vmatmul.mubr.bf16.gmra.mxu0 %v1377
  %v1512 = vpop.f32.mrf.mxu0
  %v1513 = vadd.f32 %v1412, %v1512
  %v1514 = vpop.f32.mrf.mxu0
  %v1515 = vpop.f32.mrf.mxu0
  %v1516 = vadd.f32 %v1412, %v1515
  %v1517 = vpop.f32.mrf.mxu0
  %1518 = vmatprep.mubr.bf16.mxu0 0
  %1519 = vmatmul.mubr.bf16.gmra.mxu0 %v1378
  %v1520 = vpop.f32.mrf.mxu0
  %v1521 = vadd.f32 %v1412, %v1520
  %v1522 = vpop.f32.mrf.mxu0
  %v1523 = vpop.f32.mrf.mxu0
  %v1524 = vadd.f32 %v1412, %v1523
  %v1525 = vpop.f32.mrf.mxu0
  %1526 = vmatprep.mubr.bf16.mxu0 0
  %1527 = vmatmul.mubr.bf16.gmra.mxu0 %v1379
  %v1528 = vpop.f32.mrf.mxu0
  %v1529 = vadd.f32 %v1412, %v1528
  %v1530 = vpop.f32.mrf.mxu0
  %v1531 = vpop.f32.mrf.mxu0
  %v1532 = vadd.f32 %v1412, %v1531
  %v1533 = vpop.f32.mrf.mxu0
  %1534 = vmatprep.mubr.bf16.mxu0 0
  %1535 = vmatmul.mubr.bf16.gmra.mxu0 %v1380
  %v1536 = vpop.f32.mrf.mxu0
  %v1537 = vadd.f32 %v1412, %v1536
  %v1538 = vpop.f32.mrf.mxu0
  %v1539 = vpop.f32.mrf.mxu0
  %v1540 = vadd.f32 %v1412, %v1539
  %v1541 = vpop.f32.mrf.mxu0
  %1542 = vmatprep.mubr.bf16.mxu0 0
  %1543 = vmatmul.mubr.bf16.gmra.mxu0 %v1381
  %v1544 = vpop.f32.mrf.mxu0
  %v1545 = vadd.f32 %v1412, %v1544
  %v1546 = vpop.f32.mrf.mxu0
  %v1547 = vpop.f32.mrf.mxu0
  %v1548 = vadd.f32 %v1412, %v1547
  %v1549 = vpop.f32.mrf.mxu0
  %1550 = vmatprep.mubr.bf16.mxu0 0
  %1551 = vmatmul.mubr.bf16.gmra.mxu0 %v1382
  %v1552 = vpop.f32.mrf.mxu0
  %v1553 = vadd.f32 %v1412, %v1552
  %v1554 = vpop.f32.mrf.mxu0
  %v1555 = vpop.f32.mrf.mxu0
  %v1556 = vadd.f32 %v1412, %v1555
  %v1557 = vpop.f32.mrf.mxu0
  %1558 = vmatprep.mubr.bf16.mxu0 0
  %1559 = vmatmul.mubr.bf16.gmra.mxu0 %v1383
  %v1560 = vpop.f32.mrf.mxu0
  %v1561 = vadd.f32 %v1412, %v1560
  %v1562 = vpop.f32.mrf.mxu0
  %v1563 = vpop.f32.mrf.mxu0
  %v1564 = vadd.f32 %v1412, %v1563
  %v1565 = vpop.f32.mrf.mxu0
  %1566 = vmatprep.mubr.bf16.mxu0 0
  %1567 = vmatmul.mubr.bf16.gmra.mxu0 %v1384
  %v1568 = vpop.f32.mrf.mxu0
  %v1569 = vadd.f32 %v1412, %v1568
  %v1570 = vpop.f32.mrf.mxu0
  %v1571 = vpop.f32.mrf.mxu0
  %v1572 = vadd.f32 %v1412, %v1571
  %v1573 = vpop.f32.mrf.mxu0
  %1574 = vmatprep.mubr.bf16.mxu0 0
  %1575 = vmatmul.mubr.bf16.gmra.mxu0 %v1385
  %v1576 = vpop.f32.mrf.mxu0
  %v1577 = vadd.f32 %v1412, %v1576
  %v1578 = vpop.f32.mrf.mxu0
  %v1579 = vpop.f32.mrf.mxu0
  %v1580 = vadd.f32 %v1412, %v1579
  %v1581 = vpop.f32.mrf.mxu0
  %1582 = vmatprep.mubr.bf16.mxu0 0
  %1583 = vmatmul.mubr.bf16.gmra.mxu0 %v1386
  %v1584 = vpop.f32.mrf.mxu0
  %v1585 = vadd.f32 %v1412, %v1584
  %v1586 = vpop.f32.mrf.mxu0
  %v1587 = vpop.f32.mrf.mxu0
  %v1588 = vadd.f32 %v1412, %v1587
  %v1589 = vpop.f32.mrf.mxu0
  %1590 = vmatprep.mubr.bf16.mxu0 0
  %1591 = vmatmul.mubr.bf16.gmra.mxu0 %v1387
  %v1592 = vpop.f32.mrf.mxu0
  %v1593 = vadd.f32 %v1412, %v1592
  %v1594 = vpop.f32.mrf.mxu0
  %v1595 = vpop.f32.mrf.mxu0
  %v1596 = vadd.f32 %v1412, %v1595
  %v1597 = vpop.f32.mrf.mxu0
  %1598 = vmatprep.mubr.bf16.mxu0 0
  %1599 = vmatmul.mubr.bf16.gmra.mxu0 %v1388
  %v1600 = vpop.f32.mrf.mxu0
  %v1601 = vadd.f32 %v1412, %v1600
  %v1602 = vpop.f32.mrf.mxu0
  %v1603 = vpop.f32.mrf.mxu0
  %v1604 = vadd.f32 %v1412, %v1603
  %v1605 = vpop.f32.mrf.mxu0
  %1606 = vmatprep.mubr.bf16.mxu0 0
  %1607 = vmatmul.mubr.bf16.gmra.mxu0 %v1389
  %v1608 = vpop.f32.mrf.mxu0
  %v1609 = vadd.f32 %v1412, %v1608
  %v1610 = vpop.f32.mrf.mxu0
  %v1611 = vpop.f32.mrf.mxu0
  %v1612 = vadd.f32 %v1412, %v1611
  %v1613 = vpop.f32.mrf.mxu0
  %1614 = vmatprep.mubr.bf16.mxu0 0
  %1615 = vmatmul.mubr.bf16.gmra.mxu0 %v1390
  %v1616 = vpop.f32.mrf.mxu0
  %v1617 = vadd.f32 %v1412, %v1616
  %v1618 = vpop.f32.mrf.mxu0
  %v1619 = vpop.f32.mrf.mxu0
  %v1620 = vadd.f32 %v1412, %v1619
  %v1621 = vpop.f32.mrf.mxu0
  %1622 = vdwg.mxu0
  %v1623 = vmax.f32 %v1497, 0.0
  %v1624 = vmax.f32 %v1500, 0.0
  %v1625 = vmax.f32 %v1505, 0.0
  %v1626 = vmax.f32 %v1508, 0.0
  %v1627 = vmax.f32 %v1513, 0.0
  %v1628 = vmax.f32 %v1516, 0.0
  %v1629 = vmax.f32 %v1521, 0.0
  %v1630 = vmax.f32 %v1524, 0.0
  %v1631 = vmax.f32 %v1529, 0.0
  %v1632 = vmax.f32 %v1532, 0.0
  %v1633 = vmax.f32 %v1537, 0.0
  %v1634 = vmax.f32 %v1540, 0.0
  %v1635 = vmax.f32 %v1545, 0.0
  %v1636 = vmax.f32 %v1548, 0.0
  %v1637 = vmax.f32 %v1553, 0.0
  %v1638 = vmax.f32 %v1556, 0.0
  %v1639 = vmax.f32 %v1561, 0.0
  %v1640 = vmax.f32 %v1564, 0.0
  %v1641 = vmax.f32 %v1569, 0.0
  %v1642 = vmax.f32 %v1572, 0.0
  %v1643 = vmax.f32 %v1577, 0.0
  %v1644 = vmax.f32 %v1580, 0.0
  %v1645 = vmax.f32 %v1585, 0.0
  %v1646 = vmax.f32 %v1588, 0.0
  %v1647 = vmax.f32 %v1593, 0.0
  %v1648 = vmax.f32 %v1596, 0.0
  %v1649 = vmax.f32 %v1601, 0.0
  %v1650 = vmax.f32 %v1604, 0.0
  %v1651 = vmax.f32 %v1609, 0.0
  %v1652 = vmax.f32 %v1612, 0.0
  %v1653 = vmax.f32 %v1617, 0.0
  %v1654 = vmax.f32 %v1620, 0.0
  %1655 = vst [vmem:[%s5] sm:$0xff] %v1623
  %1656 = vst [vmem:[%s5 + $0x8] sm:$0xff] %v1624
  %1657 = vst [vmem:[%s5 + $0x10] sm:$0xff] %v1625
  %1658 = vst [vmem:[%s5 + $0x18] sm:$0xff] %v1626
  %1659 = vst [vmem:[%s5 + $0x20] sm:$0xff] %v1627
  %1660 = vst [vmem:[%s5 + $0x28] sm:$0xff] %v1628
  %1661 = vst [vmem:[%s5 + $0x30] sm:$0xff] %v1629
  %1662 = vst [vmem:[%s5 + $0x38] sm:$0xff] %v1630
  %1663 = vst [vmem:[%s5 + $0x40] sm:$0xff] %v1631
  %1664 = vst [vmem:[%s5 + $0x48] sm:$0xff] %v1632
  %1665 = vst [vmem:[%s5 + $0x50] sm:$0xff] %v1633
  %1666 = vst [vmem:[%s5 + $0x58] sm:$0xff] %v1634
  %1667 = vst [vmem:[%s5 + $0x60] sm:$0xff] %v1635
  %1668 = vst [vmem:[%s5 + $0x68] sm:$0xff] %v1636
  %1669 = vst [vmem:[%s5 + $0x70] sm:$0xff] %v1637
  %1670 = vst [vmem:[%s5 + $0x78] sm:$0xff] %v1638
  %1671 = vst [vmem:[%s5 + $0x80] sm:$0xff] %v1639
  %1672 = vst [vmem:[%s5 + $0x88] sm:$0xff] %v1640
  %1673 = vst [vmem:[%s5 + $0x90] sm:$0xff] %v1641
  %1674 = vst [vmem:[%s5 + $0x98] sm:$0xff] %v1642
  %1675 = vst [vmem:[%s5 + $0xa0] sm:$0xff] %v1643
  %1676 = vst [vmem:[%s5 + $0xa8] sm:$0xff] %v1644
  %1677 = vst [vmem:[%s5 + $0xb0] sm:$0xff] %v1645
  %1678 = vst [vmem:[%s5 + $0xb8] sm:$0xff] %v1646
  %1679 = vst [vmem:[%s5 + $0xc0] sm:$0xff] %v1647
  %1680 = vst [vmem:[%s5 + $0xc8] sm:$0xff] %v1648
  %1681 = vst [vmem:[%s5 + $0xd0] sm:$0xff] %v1649
  %1682 = vst [vmem:[%s5 + $0xd8] sm:$0xff] %v1650
  %1683 = vst [vmem:[%s5 + $0xe0] sm:$0xff] %v1651
  %1684 = vst [vmem:[%s5 + $0xe8] sm:$0xff] %v1652
  %1685 = vst [vmem:[%s5 + $0xf0] sm:$0xff] %v1653
  %1686 = vst [vmem:[%s5 + $0xf8] sm:$0xff] %v1654
  // Predicated region
  $region22: #{dfganet_forward.4} parent=0 // pred_check
    _
  $region23: #{dfganet_forward.4} parent=0 // pred_check_branch
    %1688 = sbr.rel (0) target = $region25
  $region24: #{dfganet_forward.4} parent=0 // pred_region
    _
  $region25: #{dfganet_forward.4} parent=0 // pred_fallthru
    _
  // Predicated region
  $region26: #{dfganet_forward.4} parent=0 // pred_check
    _
  $region27: #{dfganet_forward.4} parent=0 // pred_check_branch
    %1690 = sbr.rel (0) target = $region29
  $region28: #{dfganet_forward.4} parent=0 // pred_region
    _
  $region29: #{dfganet_forward.4} parent=0 // pred_fallthru
    _

</llo_original>
